<compile_context>
chip_gen: v7x
topology: tpu7x:2x2x1
jax: 0.10.0
libtpu: 0.0.40
codegen_flags: <defaults>
</compile_context>

<pallas_src>
import functools
import math

import jax
import jax.numpy as jnp
from jax import lax
from jax.experimental import pallas as pl
from jax.experimental.pallas import tpu as pltpu


def _performer_kernel(q_ref, k_ref, v_ref, w_ref, o_ref, kv_acc, ksum_acc,
                      *, num_feats, kv_seq_len, mxu_dtype):
    # Block shapes (batch dim squeezed by the BlockSpecs):
    #   q_ref: (t, h, e)       -- resident across the s loop (index map ignores si)
    #   k_ref: (s_blk, h, e)   -- streamed per s tile
    #   v_ref: (s_blk, h, d)   -- streamed per s tile
    #   w_ref: (h, e, r_pad)   -- resident
    #   o_ref: (h, t, d)       -- written on the last s tile only
    #   kv_acc:   (h, r_pad, d) f32 scratch (accumulated over s tiles)
    #   ksum_acc: (h, 1, r_pad) f32 scratch (accumulated over s tiles)
    si = pl.program_id(1)
    n_s = pl.num_programs(1)
    s_blk = k_ref.shape[0]
    num_heads = w_ref.shape[0]
    r_pad = w_ref.shape[2]

    def cast(x):
        return x if mxu_dtype is None else x.astype(mxu_dtype)

    @pl.when(si == 0)
    def _init():
        kv_acc[...] = jnp.zeros_like(kv_acc)
        ksum_acc[...] = jnp.zeros_like(ksum_acc)

    # Mask zeroing (a) padded feature columns (exp(0 - 0.5*||k||^2) is NOT zero) and
    # (b) rows of a ragged final s tile.
    col_ok = lax.broadcasted_iota(jnp.int32, (s_blk, r_pad), 1) < num_feats
    row_ok = (si * s_blk
              + lax.broadcasted_iota(jnp.int32, (s_blk, r_pad), 0)) < kv_seq_len
    k_mask = jnp.logical_and(col_ok, row_ok)

    for head in range(num_heads):  # static unroll; head count is small
        k = k_ref[:, head, :]                                   # (s_blk, e)
        v = v_ref[:, head, :]                                   # (s_blk, d)
        w = w_ref[head]                                         # (e, r_pad)

        proj_k = jnp.dot(cast(k), cast(w), preferred_element_type=jnp.float32)
        k_norm = jnp.sum(k * k, axis=-1, keepdims=True)         # (s_blk, 1)
        # NOTE: the 1/sqrt(num_feats) factor is omitted -- it cancels exactly
        # between the numerator and D_tilde.
        k_feats = jnp.where(k_mask, jnp.exp(proj_k - 0.5 * k_norm), 0.0)

        # kv += K_feats^T @ V without an explicit transpose: contract leading dims.
        kv_acc[head] += lax.dot_general(
            cast(k_feats), cast(v),
            dimension_numbers=(((0,), (0,)), ((), ())),
            preferred_element_type=jnp.float32)                 # (r_pad, d)
        ksum_acc[head] += jnp.sum(k_feats, axis=0, keepdims=True)   # (1, r_pad)

    @pl.when(si == n_s - 1)
    def _finalize():
        for head in range(num_heads):
            q = q_ref[:, head, :]                               # (t, e)
            w = w_ref[head]
            proj_q = jnp.dot(cast(q), cast(w), preferred_element_type=jnp.float32)
            q_norm = jnp.sum(q * q, axis=-1, keepdims=True)
            # Padded feature columns of q_feats are harmless: they only multiply
            # the zeroed padded rows/cols of kv_acc / ksum_acc.
            q_feats = jnp.exp(proj_q - 0.5 * q_norm)            # (t, r_pad)

            d_tilde = jnp.sum(q_feats * ksum_acc[head], axis=-1, keepdims=True)
            out = jnp.dot(cast(q_feats), cast(kv_acc[head]),
                          preferred_element_type=jnp.float32)   # (t, d)
            # Divide -> EUP reciprocal on the tiny (t, 1) normalizer + broadcast mul.
            o_ref[head] = (out * pl.reciprocal(d_tilde, approx=True)).astype(o_ref.dtype)


def performer_attention(query, key, value, weights, *, s_block_size=None,
                        mxu_dtype=None):
    """Performer attention.

    query: (b, t, h, e), key: (b, s, h, e), value: (b, s, h, d),
    weights: (b, h, e, num_feats).  Returns (b, h, t, d) -- the same layout the
    PyTorch module returns (it never rearranges back to 'b t h d').
    """
    b, t, h, e = query.shape
    s = key.shape[1]
    d = value.shape[3]
    num_feats = weights.shape[3]
    assert key.shape == (b, s, h, e)
    assert value.shape == (b, s, h, d)
    assert weights.shape == (b, h, e, num_feats)

    # Lane-dense feature dimension: pad num_feats up to a multiple of 128 with zero
    # weight columns (masked after the exp inside the kernel).
    r_pad = ((num_feats + 127) // 128) * 128
    if r_pad != num_feats:
        weights = jnp.pad(weights, ((0, 0), (0, 0), (0, 0), (0, r_pad - num_feats)))

    # Sequence (s) tiling: kv / k_sum are accumulated across s tiles in VMEM scratch.
    if s_block_size is None:
        s_block_size = s if s <= 512 else 512
    s_blk = min(s_block_size, s)
    n_s = pl.cdiv(s, s_blk)

    kernel = functools.partial(
        _performer_kernel, num_feats=num_feats, kv_seq_len=s, mxu_dtype=mxu_dtype)

    itemsize = jnp.dtype(query.dtype).itemsize
    block_bytes = (
        2 * t * h * e * itemsize          # q block (double-buffered)
        + 2 * s_blk * h * e * itemsize    # k block
        + 2 * s_blk * h * d * itemsize    # v block
        + 2 * h * e * r_pad * itemsize    # weights block
        + 2 * h * t * d * itemsize        # output block
        + h * r_pad * d * 4               # kv scratch (f32)
        + h * 8 * r_pad * 4)              # ksum scratch (f32, sublane-padded)
    vmem_limit = int(min(64 << 20, max(16 << 20, 1.5 * block_bytes + (2 << 20))))

    return pl.pallas_call(
        kernel,
        out_shape=jax.ShapeDtypeStruct((b, h, t, d), query.dtype),
        grid_spec=pltpu.PrefetchScalarGridSpec(
            num_scalar_prefetch=0,
            grid=(b, n_s),
            in_specs=[
                # Original layouts indexed directly -- no wrapper transposes.
                pl.BlockSpec((None, t, h, e), lambda i, si: (i, 0, 0, 0)),
                pl.BlockSpec((None, s_blk, h, e), lambda i, si: (i, si, 0, 0)),
                pl.BlockSpec((None, s_blk, h, d), lambda i, si: (i, si, 0, 0)),
                pl.BlockSpec((None, h, e, r_pad), lambda i, si: (i, 0, 0, 0)),
            ],
            out_specs=pl.BlockSpec((None, h, t, d), lambda i, si: (i, 0, 0, 0)),
            scratch_shapes=[
                pltpu.VMEM((h, r_pad, d), jnp.float32),   # kv accumulator
                pltpu.VMEM((h, 1, r_pad), jnp.float32),   # k_sum accumulator
            ],
        ),
        compiler_params=pltpu.CompilerParams(
            dimension_semantics=("parallel", "arbitrary"),
            vmem_limit_bytes=vmem_limit,
        ),
    )(query, key, value, weights)


def _reference(query, key, value, weights, num_feats):
    """Pure-JAX reference mirroring the PyTorch forward exactly."""
    q = jnp.transpose(query, (0, 2, 1, 3))
    k = jnp.transpose(key, (0, 2, 1, 3))
    v = jnp.transpose(value, (0, 2, 1, 3))

    def calc_feats(x):
        proj = jnp.einsum("bhnd,bhdr->bhnr", x, weights)
        norm = jnp.sum(x ** 2, axis=-1, keepdims=True)
        return jnp.exp(proj - 0.5 * norm) / math.sqrt(num_feats)

    k_feats = calc_feats(k)
    q_feats = calc_feats(q)
    d_tilde = jnp.einsum("bhnd,bhd->bhn", q_feats, jnp.sum(k_feats, axis=2))
    kv = jnp.einsum("bhnm,bhnd->bhmd", k_feats, v)
    out = jnp.einsum("bhnm,bhmd->bhnd", q_feats, kv)
    return out * (1.0 / d_tilde)[..., None]


if __name__ == "__main__":
    # Small shapes consistent with the module's forward.
    b, t, s, h, e, d = 2, 8, 24, 4, 32, 32
    num_feats = 10

    key0 = jax.random.PRNGKey(0)
    kq, kk, kv_, kw = jax.random.split(key0, 4)
    # scale inputs down a bit so exp() stays well-conditioned
    query = 0.2 * jax.random.normal(kq, (b, t, h, e), dtype=jnp.float32)
    key_ = 0.2 * jax.random.normal(kk, (b, s, h, e), dtype=jnp.float32)
    value = jax.random.normal(kv_, (b, s, h, d), dtype=jnp.float32)
    # deterministic stand-in for the module's torch.randn random-feature weights
    weights = jax.random.normal(kw, (b, h, e, num_feats), dtype=jnp.float32)

    # s_block_size=8 -> 3 sequence tiles, exercising the scratch-accumulation path.
    out = performer_attention(query, key_, value, weights, s_block_size=8)
    out = jax.block_until_ready(out)

    ref = _reference(query, key_, value, weights, num_feats)
    assert out.shape == (b, h, t, d)
    # Tolerance covers the approximate EUP reciprocal used for 1/D_tilde.
    assert jnp.allclose(out, ref, rtol=5e-3, atol=5e-3), "mismatch vs reference"

    print("KERNEL_OK")
</pallas_src>

<mosaic_0001>
module attributes {stable_mosaic.version = 11 : i64} {
  func.func @_performer_kernel(%arg0: i32, %arg1: i32, %arg2: memref<1x8x4x32xf32, #tpu.memory_space<vmem>>, %arg3: memref<1x8x4x32xf32, #tpu.memory_space<vmem>>, %arg4: memref<1x8x4x32xf32, #tpu.memory_space<vmem>>, %arg5: memref<1x4x32x128xf32, #tpu.memory_space<vmem>>, %arg6: memref<1x4x8x32xf32, #tpu.memory_space<vmem>>, %arg7: memref<4x128x32xf32, #tpu.memory_space<vmem>>, %arg8: memref<4x1x128xf32, #tpu.memory_space<vmem>>) attributes {dimension_semantics = [#tpu.dimension_semantics<parallel>, #tpu.dimension_semantics<arbitrary>], iteration_bounds = array<i64: 2, 3>, scalar_prefetch = 0 : i64, scratch_operands = 2 : i64, tpu.core_type = #tpu.core_type<tc>, window_params = [{transform_indices = @transform_0, window_bounds = array<i64: 1, 8, 4, 32>}, {transform_indices = @transform_1, window_bounds = array<i64: 1, 8, 4, 32>}, {transform_indices = @transform_2, window_bounds = array<i64: 1, 8, 4, 32>}, {transform_indices = @transform_3, window_bounds = array<i64: 1, 4, 32, 128>}, {transform_indices = @transform_4, window_bounds = array<i64: 1, 4, 8, 32>}]} {
    %c0_i32 = arith.constant 0 : i32
    %0 = arith.cmpi eq, %arg1, %c0_i32 : i32
    %1 = arith.extui %0 : i1 to i32
    %c0_i32_0 = arith.constant 0 : i32
    %2 = arith.cmpi ne, %1, %c0_i32_0 : i32
    scf.if %2 {
      %cst_117 = arith.constant 0.000000e+00 : f32
      %144 = vector.broadcast %cst_117 : f32 to vector<4x128x32xf32>
      %c0_118 = arith.constant 0 : index
      %c0_119 = arith.constant 0 : index
      %c0_120 = arith.constant 0 : index
      %145 = vector.load %arg7[%c0_118, %c0_119, %c0_120] : memref<4x128x32xf32, #tpu.memory_space<vmem>>, vector<4x128x32xf32>
      tpu.vector_store %arg7[%c0_118, %c0_119, %c0_120], %144 {strides = array<i32>} : memref<4x128x32xf32, #tpu.memory_space<vmem>>, vector<4x128x32xf32>,
      %cst_121 = arith.constant 0.000000e+00 : f32
      %146 = vector.broadcast %cst_121 : f32 to vector<4x1x128xf32>
      %c0_122 = arith.constant 0 : index
      %c0_123 = arith.constant 0 : index
      %c0_124 = arith.constant 0 : index
      %147 = vector.load %arg8[%c0_122, %c0_123, %c0_124] : memref<4x1x128xf32, #tpu.memory_space<vmem>>, vector<4x1x128xf32>
      tpu.vector_store %arg8[%c0_122, %c0_123, %c0_124], %146 {strides = array<i32>} : memref<4x1x128xf32, #tpu.memory_space<vmem>>, vector<4x1x128xf32>,
    } else {
    }
    %3 = tpu.iota {dimensions = array<i32: 1>} : vector<8x128xi32>
    %c10_i32 = arith.constant 10 : i32
    %4 = vector.broadcast %c10_i32 : i32 to vector<8x128xi32>
    %5 = arith.cmpi slt, %3, %4 : vector<8x128xi32>
    %c8_i32 = arith.constant 8 : i32
    %6 = arith.muli %arg1, %c8_i32 : i32
    %7 = tpu.iota {dimensions = array<i32: 0>} : vector<8x128xi32>
    %8 = vector.broadcast %6 : i32 to vector<8x128xi32>
    %9 = arith.addi %8, %7 : vector<8x128xi32>
    %c24_i32 = arith.constant 24 : i32
    %10 = vector.broadcast %c24_i32 : i32 to vector<8x128xi32>
    %11 = arith.cmpi slt, %9, %10 : vector<8x128xi32>
    %12 = arith.andi %5, %11 : vector<8x128xi1>
    %c0 = arith.constant 0 : index
    %c0_1 = arith.constant 0 : index
    %c0_2 = arith.constant 0 : index
    %c0_3 = arith.constant 0 : index
    %13 = vector.load %arg3[%c0, %c0_1, %c0_2, %c0_3] : memref<1x8x4x32xf32, #tpu.memory_space<vmem>>, vector<1x8x1x32xf32>
    %14 = vector.shape_cast %13 : vector<1x8x1x32xf32> to vector<8x32xf32>
    %c0_4 = arith.constant 0 : index
    %c0_5 = arith.constant 0 : index
    %c0_6 = arith.constant 0 : index
    %c0_7 = arith.constant 0 : index
    %15 = vector.load %arg4[%c0_4, %c0_5, %c0_6, %c0_7] : memref<1x8x4x32xf32, #tpu.memory_space<vmem>>, vector<1x8x1x32xf32>
    %16 = vector.shape_cast %15 : vector<1x8x1x32xf32> to vector<8x32xf32>
    %c0_8 = arith.constant 0 : index
    %c0_9 = arith.constant 0 : index
    %c0_10 = arith.constant 0 : index
    %c0_11 = arith.constant 0 : index
    %17 = vector.load %arg5[%c0_8, %c0_9, %c0_10, %c0_11] : memref<1x4x32x128xf32, #tpu.memory_space<vmem>>, vector<1x1x32x128xf32>
    %18 = vector.shape_cast %17 : vector<1x1x32x128xf32> to vector<32x128xf32>
    %cst = arith.constant dense<0.000000e+00> : vector<8x128xf32>
    %19 = tpu.matmul %14, %18, %cst {dimension_numbers = #tpu.dot_dimension_numbers<[1], [0], [0], [1], [0, 0, 1, 1], [], []>} : vector<8x32xf32>, vector<32x128xf32>, vector<8x128xf32> -> vector<8x128xf32>
    %20 = arith.mulf %14, %14 : vector<8x32xf32>
    %cst_12 = arith.constant dense<0.000000e+00> : vector<8xf32>
    %21 = vector.multi_reduction <add>, %20, %cst_12 [1] : vector<8x32xf32> to vector<8xf32>
    %22 = vector.shape_cast %21 : vector<8xf32> to vector<8x1xf32>
    %cst_13 = arith.constant 5.000000e-01 : f32
    %23 = vector.broadcast %cst_13 : f32 to vector<8x1xf32>
    %24 = arith.mulf %23, %22 : vector<8x1xf32>
    %25 = vector.broadcast %24 : vector<8x1xf32> to vector<8x128xf32>
    %26 = arith.subf %19, %25 : vector<8x128xf32>
    %27 = math.exp %26 : vector<8x128xf32>
    %cst_14 = arith.constant 0.000000e+00 : f32
    %28 = vector.broadcast %cst_14 : f32 to vector<8x128xf32>
    %29 = arith.select %12, %27, %28 : vector<8x128xi1>, vector<8x128xf32>
    %c0_15 = arith.constant 0 : index
    %c0_16 = arith.constant 0 : index
    %c0_17 = arith.constant 0 : index
    %30 = vector.load %arg7[%c0_15, %c0_16, %c0_17] : memref<4x128x32xf32, #tpu.memory_space<vmem>>, vector<1x128x32xf32>
    %31 = vector.shape_cast %30 : vector<1x128x32xf32> to vector<128x32xf32>
    %cst_18 = arith.constant dense<0.000000e+00> : vector<128x32xf32>
    %32 = tpu.matmul %29, %16, %cst_18 {dimension_numbers = #tpu.dot_dimension_numbers<[0], [0], [1], [1], [0, 1, 1, 1], [], []>} : vector<8x128xf32>, vector<8x32xf32>, vector<128x32xf32> -> vector<128x32xf32>
    %33 = arith.addf %31, %32 : vector<128x32xf32>
    %c0_19 = arith.constant 0 : index
    %c0_20 = arith.constant 0 : index
    %c0_21 = arith.constant 0 : index
    %34 = vector.load %arg7[%c0_19, %c0_20, %c0_21] : memref<4x128x32xf32, #tpu.memory_space<vmem>>, vector<1x128x32xf32>
    %35 = vector.shape_cast %34 : vector<1x128x32xf32> to vector<128x32xf32>
    %36 = vector.shape_cast %33 : vector<128x32xf32> to vector<1x128x32xf32>
    tpu.vector_store %arg7[%c0_19, %c0_20, %c0_21], %36 {strides = array<i32>} : memref<4x128x32xf32, #tpu.memory_space<vmem>>, vector<1x128x32xf32>,
    %c0_22 = arith.constant 0 : index
    %c0_23 = arith.constant 0 : index
    %c0_24 = arith.constant 0 : index
    %37 = vector.load %arg8[%c0_22, %c0_23, %c0_24] : memref<4x1x128xf32, #tpu.memory_space<vmem>>, vector<1x1x128xf32>
    %38 = vector.shape_cast %37 : vector<1x1x128xf32> to vector<1x128xf32>
    %cst_25 = arith.constant dense<0.000000e+00> : vector<128xf32>
    %39 = vector.multi_reduction <add>, %29, %cst_25 [0] : vector<8x128xf32> to vector<128xf32>
    %40 = vector.shape_cast %39 : vector<128xf32> to vector<1x128xf32>
    %41 = arith.addf %38, %40 : vector<1x128xf32>
    %c0_26 = arith.constant 0 : index
    %c0_27 = arith.constant 0 : index
    %c0_28 = arith.constant 0 : index
    %42 = vector.load %arg8[%c0_26, %c0_27, %c0_28] : memref<4x1x128xf32, #tpu.memory_space<vmem>>, vector<1x1x128xf32>
    %43 = vector.shape_cast %42 : vector<1x1x128xf32> to vector<1x128xf32>
    %44 = vector.shape_cast %41 : vector<1x128xf32> to vector<1x1x128xf32>
    tpu.vector_store %arg8[%c0_26, %c0_27, %c0_28], %44 {strides = array<i32>} : memref<4x1x128xf32, #tpu.memory_space<vmem>>, vector<1x1x128xf32>,
    %c0_29 = arith.constant 0 : index
    %c0_30 = arith.constant 0 : index
    %c1 = arith.constant 1 : index
    %c0_31 = arith.constant 0 : index
    %45 = vector.load %arg3[%c0_29, %c0_30, %c1, %c0_31] : memref<1x8x4x32xf32, #tpu.memory_space<vmem>>, vector<1x8x1x32xf32>
    %46 = vector.shape_cast %45 : vector<1x8x1x32xf32> to vector<8x32xf32>
    %c0_32 = arith.constant 0 : index
    %c0_33 = arith.constant 0 : index
    %c1_34 = arith.constant 1 : index
    %c0_35 = arith.constant 0 : index
    %47 = vector.load %arg4[%c0_32, %c0_33, %c1_34, %c0_35] : memref<1x8x4x32xf32, #tpu.memory_space<vmem>>, vector<1x8x1x32xf32>
    %48 = vector.shape_cast %47 : vector<1x8x1x32xf32> to vector<8x32xf32>
    %c0_36 = arith.constant 0 : index
    %c1_37 = arith.constant 1 : index
    %c0_38 = arith.constant 0 : index
    %c0_39 = arith.constant 0 : index
    %49 = vector.load %arg5[%c0_36, %c1_37, %c0_38, %c0_39] : memref<1x4x32x128xf32, #tpu.memory_space<vmem>>, vector<1x1x32x128xf32>
    %50 = vector.shape_cast %49 : vector<1x1x32x128xf32> to vector<32x128xf32>
    %cst_40 = arith.constant dense<0.000000e+00> : vector<8x128xf32>
    %51 = tpu.matmul %46, %50, %cst_40 {dimension_numbers = #tpu.dot_dimension_numbers<[1], [0], [0], [1], [0, 0, 1, 1], [], []>} : vector<8x32xf32>, vector<32x128xf32>, vector<8x128xf32> -> vector<8x128xf32>
    %52 = arith.mulf %46, %46 : vector<8x32xf32>
    %cst_41 = arith.constant dense<0.000000e+00> : vector<8xf32>
    %53 = vector.multi_reduction <add>, %52, %cst_41 [1] : vector<8x32xf32> to vector<8xf32>
    %54 = vector.shape_cast %53 : vector<8xf32> to vector<8x1xf32>
    %cst_42 = arith.constant 5.000000e-01 : f32
    %55 = vector.broadcast %cst_42 : f32 to vector<8x1xf32>
    %56 = arith.mulf %55, %54 : vector<8x1xf32>
    %57 = vector.broadcast %56 : vector<8x1xf32> to vector<8x128xf32>
    %58 = arith.subf %51, %57 : vector<8x128xf32>
    %59 = math.exp %58 : vector<8x128xf32>
    %cst_43 = arith.constant 0.000000e+00 : f32
    %60 = vector.broadcast %cst_43 : f32 to vector<8x128xf32>
    %61 = arith.select %12, %59, %60 : vector<8x128xi1>, vector<8x128xf32>
    %c1_44 = arith.constant 1 : index
    %c0_45 = arith.constant 0 : index
    %c0_46 = arith.constant 0 : index
    %62 = vector.load %arg7[%c1_44, %c0_45, %c0_46] : memref<4x128x32xf32, #tpu.memory_space<vmem>>, vector<1x128x32xf32>
    %63 = vector.shape_cast %62 : vector<1x128x32xf32> to vector<128x32xf32>
    %cst_47 = arith.constant dense<0.000000e+00> : vector<128x32xf32>
    %64 = tpu.matmul %61, %48, %cst_47 {dimension_numbers = #tpu.dot_dimension_numbers<[0], [0], [1], [1], [0, 1, 1, 1], [], []>} : vector<8x128xf32>, vector<8x32xf32>, vector<128x32xf32> -> vector<128x32xf32>
    %65 = arith.addf %63, %64 : vector<128x32xf32>
    %c1_48 = arith.constant 1 : index
    %c0_49 = arith.constant 0 : index
    %c0_50 = arith.constant 0 : index
    %66 = vector.load %arg7[%c1_48, %c0_49, %c0_50] : memref<4x128x32xf32, #tpu.memory_space<vmem>>, vector<1x128x32xf32>
    %67 = vector.shape_cast %66 : vector<1x128x32xf32> to vector<128x32xf32>
    %68 = vector.shape_cast %65 : vector<128x32xf32> to vector<1x128x32xf32>
    tpu.vector_store %arg7[%c1_48, %c0_49, %c0_50], %68 {strides = array<i32>} : memref<4x128x32xf32, #tpu.memory_space<vmem>>, vector<1x128x32xf32>,
    %c1_51 = arith.constant 1 : index
    %c0_52 = arith.constant 0 : index
    %c0_53 = arith.constant 0 : index
    %69 = vector.load %arg8[%c1_51, %c0_52, %c0_53] : memref<4x1x128xf32, #tpu.memory_space<vmem>>, vector<1x1x128xf32>
    %70 = vector.shape_cast %69 : vector<1x1x128xf32> to vector<1x128xf32>
    %cst_54 = arith.constant dense<0.000000e+00> : vector<128xf32>
    %71 = vector.multi_reduction <add>, %61, %cst_54 [0] : vector<8x128xf32> to vector<128xf32>
    %72 = vector.shape_cast %71 : vector<128xf32> to vector<1x128xf32>
    %73 = arith.addf %70, %72 : vector<1x128xf32>
    %c1_55 = arith.constant 1 : index
    %c0_56 = arith.constant 0 : index
    %c0_57 = arith.constant 0 : index
    %74 = vector.load %arg8[%c1_55, %c0_56, %c0_57] : memref<4x1x128xf32, #tpu.memory_space<vmem>>, vector<1x1x128xf32>
    %75 = vector.shape_cast %74 : vector<1x1x128xf32> to vector<1x128xf32>
    %76 = vector.shape_cast %73 : vector<1x128xf32> to vector<1x1x128xf32>
    tpu.vector_store %arg8[%c1_55, %c0_56, %c0_57], %76 {strides = array<i32>} : memref<4x1x128xf32, #tpu.memory_space<vmem>>, vector<1x1x128xf32>,
    %c0_58 = arith.constant 0 : index
    %c0_59 = arith.constant 0 : index
    %c2 = arith.constant 2 : index
    %c0_60 = arith.constant 0 : index
    %77 = vector.load %arg3[%c0_58, %c0_59, %c2, %c0_60] : memref<1x8x4x32xf32, #tpu.memory_space<vmem>>, vector<1x8x1x32xf32>
    %78 = vector.shape_cast %77 : vector<1x8x1x32xf32> to vector<8x32xf32>
    %c0_61 = arith.constant 0 : index
    %c0_62 = arith.constant 0 : index
    %c2_63 = arith.constant 2 : index
    %c0_64 = arith.constant 0 : index
    %79 = vector.load %arg4[%c0_61, %c0_62, %c2_63, %c0_64] : memref<1x8x4x32xf32, #tpu.memory_space<vmem>>, vector<1x8x1x32xf32>
    %80 = vector.shape_cast %79 : vector<1x8x1x32xf32> to vector<8x32xf32>
    %c0_65 = arith.constant 0 : index
    %c2_66 = arith.constant 2 : index
    %c0_67 = arith.constant 0 : index
    %c0_68 = arith.constant 0 : index
    %81 = vector.load %arg5[%c0_65, %c2_66, %c0_67, %c0_68] : memref<1x4x32x128xf32, #tpu.memory_space<vmem>>, vector<1x1x32x128xf32>
    %82 = vector.shape_cast %81 : vector<1x1x32x128xf32> to vector<32x128xf32>
    %cst_69 = arith.constant dense<0.000000e+00> : vector<8x128xf32>
    %83 = tpu.matmul %78, %82, %cst_69 {dimension_numbers = #tpu.dot_dimension_numbers<[1], [0], [0], [1], [0, 0, 1, 1], [], []>} : vector<8x32xf32>, vector<32x128xf32>, vector<8x128xf32> -> vector<8x128xf32>
    %84 = arith.mulf %78, %78 : vector<8x32xf32>
    %cst_70 = arith.constant dense<0.000000e+00> : vector<8xf32>
    %85 = vector.multi_reduction <add>, %84, %cst_70 [1] : vector<8x32xf32> to vector<8xf32>
    %86 = vector.shape_cast %85 : vector<8xf32> to vector<8x1xf32>
    %cst_71 = arith.constant 5.000000e-01 : f32
    %87 = vector.broadcast %cst_71 : f32 to vector<8x1xf32>
    %88 = arith.mulf %87, %86 : vector<8x1xf32>
    %89 = vector.broadcast %88 : vector<8x1xf32> to vector<8x128xf32>
    %90 = arith.subf %83, %89 : vector<8x128xf32>
    %91 = math.exp %90 : vector<8x128xf32>
    %cst_72 = arith.constant 0.000000e+00 : f32
    %92 = vector.broadcast %cst_72 : f32 to vector<8x128xf32>
    %93 = arith.select %12, %91, %92 : vector<8x128xi1>, vector<8x128xf32>
    %c2_73 = arith.constant 2 : index
    %c0_74 = arith.constant 0 : index
    %c0_75 = arith.constant 0 : index
    %94 = vector.load %arg7[%c2_73, %c0_74, %c0_75] : memref<4x128x32xf32, #tpu.memory_space<vmem>>, vector<1x128x32xf32>
    %95 = vector.shape_cast %94 : vector<1x128x32xf32> to vector<128x32xf32>
    %cst_76 = arith.constant dense<0.000000e+00> : vector<128x32xf32>
    %96 = tpu.matmul %93, %80, %cst_76 {dimension_numbers = #tpu.dot_dimension_numbers<[0], [0], [1], [1], [0, 1, 1, 1], [], []>} : vector<8x128xf32>, vector<8x32xf32>, vector<128x32xf32> -> vector<128x32xf32>
    %97 = arith.addf %95, %96 : vector<128x32xf32>
    %c2_77 = arith.constant 2 : index
    %c0_78 = arith.constant 0 : index
    %c0_79 = arith.constant 0 : index
    %98 = vector.load %arg7[%c2_77, %c0_78, %c0_79] : memref<4x128x32xf32, #tpu.memory_space<vmem>>, vector<1x128x32xf32>
    %99 = vector.shape_cast %98 : vector<1x128x32xf32> to vector<128x32xf32>
    %100 = vector.shape_cast %97 : vector<128x32xf32> to vector<1x128x32xf32>
    tpu.vector_store %arg7[%c2_77, %c0_78, %c0_79], %100 {strides = array<i32>} : memref<4x128x32xf32, #tpu.memory_space<vmem>>, vector<1x128x32xf32>,
    %c2_80 = arith.constant 2 : index
    %c0_81 = arith.constant 0 : index
    %c0_82 = arith.constant 0 : index
    %101 = vector.load %arg8[%c2_80, %c0_81, %c0_82] : memref<4x1x128xf32, #tpu.memory_space<vmem>>, vector<1x1x128xf32>
    %102 = vector.shape_cast %101 : vector<1x1x128xf32> to vector<1x128xf32>
    %cst_83 = arith.constant dense<0.000000e+00> : vector<128xf32>
    %103 = vector.multi_reduction <add>, %93, %cst_83 [0] : vector<8x128xf32> to vector<128xf32>
    %104 = vector.shape_cast %103 : vector<128xf32> to vector<1x128xf32>
    %105 = arith.addf %102, %104 : vector<1x128xf32>
    %c2_84 = arith.constant 2 : index
    %c0_85 = arith.constant 0 : index
    %c0_86 = arith.constant 0 : index
    %106 = vector.load %arg8[%c2_84, %c0_85, %c0_86] : memref<4x1x128xf32, #tpu.memory_space<vmem>>, vector<1x1x128xf32>
    %107 = vector.shape_cast %106 : vector<1x1x128xf32> to vector<1x128xf32>
    %108 = vector.shape_cast %105 : vector<1x128xf32> to vector<1x1x128xf32>
    tpu.vector_store %arg8[%c2_84, %c0_85, %c0_86], %108 {strides = array<i32>} : memref<4x1x128xf32, #tpu.memory_space<vmem>>, vector<1x1x128xf32>,
    %c0_87 = arith.constant 0 : index
    %c0_88 = arith.constant 0 : index
    %c3 = arith.constant 3 : index
    %c0_89 = arith.constant 0 : index
    %109 = vector.load %arg3[%c0_87, %c0_88, %c3, %c0_89] : memref<1x8x4x32xf32, #tpu.memory_space<vmem>>, vector<1x8x1x32xf32>
    %110 = vector.shape_cast %109 : vector<1x8x1x32xf32> to vector<8x32xf32>
    %c0_90 = arith.constant 0 : index
    %c0_91 = arith.constant 0 : index
    %c3_92 = arith.constant 3 : index
    %c0_93 = arith.constant 0 : index
    %111 = vector.load %arg4[%c0_90, %c0_91, %c3_92, %c0_93] : memref<1x8x4x32xf32, #tpu.memory_space<vmem>>, vector<1x8x1x32xf32>
    %112 = vector.shape_cast %111 : vector<1x8x1x32xf32> to vector<8x32xf32>
    %c0_94 = arith.constant 0 : index
    %c3_95 = arith.constant 3 : index
    %c0_96 = arith.constant 0 : index
    %c0_97 = arith.constant 0 : index
    %113 = vector.load %arg5[%c0_94, %c3_95, %c0_96, %c0_97] : memref<1x4x32x128xf32, #tpu.memory_space<vmem>>, vector<1x1x32x128xf32>
    %114 = vector.shape_cast %113 : vector<1x1x32x128xf32> to vector<32x128xf32>
    %cst_98 = arith.constant dense<0.000000e+00> : vector<8x128xf32>
    %115 = tpu.matmul %110, %114, %cst_98 {dimension_numbers = #tpu.dot_dimension_numbers<[1], [0], [0], [1], [0, 0, 1, 1], [], []>} : vector<8x32xf32>, vector<32x128xf32>, vector<8x128xf32> -> vector<8x128xf32>
    %116 = arith.mulf %110, %110 : vector<8x32xf32>
    %cst_99 = arith.constant dense<0.000000e+00> : vector<8xf32>
    %117 = vector.multi_reduction <add>, %116, %cst_99 [1] : vector<8x32xf32> to vector<8xf32>
    %118 = vector.shape_cast %117 : vector<8xf32> to vector<8x1xf32>
    %cst_100 = arith.constant 5.000000e-01 : f32
    %119 = vector.broadcast %cst_100 : f32 to vector<8x1xf32>
    %120 = arith.mulf %119, %118 : vector<8x1xf32>
    %121 = vector.broadcast %120 : vector<8x1xf32> to vector<8x128xf32>
    %122 = arith.subf %115, %121 : vector<8x128xf32>
    %123 = math.exp %122 : vector<8x128xf32>
    %cst_101 = arith.constant 0.000000e+00 : f32
    %124 = vector.broadcast %cst_101 : f32 to vector<8x128xf32>
    %125 = arith.select %12, %123, %124 : vector<8x128xi1>, vector<8x128xf32>
    %c3_102 = arith.constant 3 : index
    %c0_103 = arith.constant 0 : index
    %c0_104 = arith.constant 0 : index
    %126 = vector.load %arg7[%c3_102, %c0_103, %c0_104] : memref<4x128x32xf32, #tpu.memory_space<vmem>>, vector<1x128x32xf32>
    %127 = vector.shape_cast %126 : vector<1x128x32xf32> to vector<128x32xf32>
    %cst_105 = arith.constant dense<0.000000e+00> : vector<128x32xf32>
    %128 = tpu.matmul %125, %112, %cst_105 {dimension_numbers = #tpu.dot_dimension_numbers<[0], [0], [1], [1], [0, 1, 1, 1], [], []>} : vector<8x128xf32>, vector<8x32xf32>, vector<128x32xf32> -> vector<128x32xf32>
    %129 = arith.addf %127, %128 : vector<128x32xf32>
    %c3_106 = arith.constant 3 : index
    %c0_107 = arith.constant 0 : index
    %c0_108 = arith.constant 0 : index
    %130 = vector.load %arg7[%c3_106, %c0_107, %c0_108] : memref<4x128x32xf32, #tpu.memory_space<vmem>>, vector<1x128x32xf32>
    %131 = vector.shape_cast %130 : vector<1x128x32xf32> to vector<128x32xf32>
    %132 = vector.shape_cast %129 : vector<128x32xf32> to vector<1x128x32xf32>
    tpu.vector_store %arg7[%c3_106, %c0_107, %c0_108], %132 {strides = array<i32>} : memref<4x128x32xf32, #tpu.memory_space<vmem>>, vector<1x128x32xf32>,
    %c3_109 = arith.constant 3 : index
    %c0_110 = arith.constant 0 : index
    %c0_111 = arith.constant 0 : index
    %133 = vector.load %arg8[%c3_109, %c0_110, %c0_111] : memref<4x1x128xf32, #tpu.memory_space<vmem>>, vector<1x1x128xf32>
    %134 = vector.shape_cast %133 : vector<1x1x128xf32> to vector<1x128xf32>
    %cst_112 = arith.constant dense<0.000000e+00> : vector<128xf32>
    %135 = vector.multi_reduction <add>, %125, %cst_112 [0] : vector<8x128xf32> to vector<128xf32>
    %136 = vector.shape_cast %135 : vector<128xf32> to vector<1x128xf32>
    %137 = arith.addf %134, %136 : vector<1x128xf32>
    %c3_113 = arith.constant 3 : index
    %c0_114 = arith.constant 0 : index
    %c0_115 = arith.constant 0 : index
    %138 = vector.load %arg8[%c3_113, %c0_114, %c0_115] : memref<4x1x128xf32, #tpu.memory_space<vmem>>, vector<1x1x128xf32>
    %139 = vector.shape_cast %138 : vector<1x1x128xf32> to vector<1x128xf32>
    %140 = vector.shape_cast %137 : vector<1x128xf32> to vector<1x1x128xf32>
    tpu.vector_store %arg8[%c3_113, %c0_114, %c0_115], %140 {strides = array<i32>} : memref<4x1x128xf32, #tpu.memory_space<vmem>>, vector<1x1x128xf32>,
    %c2_i32 = arith.constant 2 : i32
    %141 = arith.cmpi eq, %arg1, %c2_i32 : i32
    %142 = arith.extui %141 : i1 to i32
    %c0_i32_116 = arith.constant 0 : i32
    %143 = arith.cmpi ne, %142, %c0_i32_116 : i32
    scf.if %143 {
      %c0_117 = arith.constant 0 : index
      %c0_118 = arith.constant 0 : index
      %c0_119 = arith.constant 0 : index
      %c0_120 = arith.constant 0 : index
      %144 = vector.load %arg2[%c0_117, %c0_118, %c0_119, %c0_120] : memref<1x8x4x32xf32, #tpu.memory_space<vmem>>, vector<1x8x1x32xf32>
      %145 = vector.shape_cast %144 : vector<1x8x1x32xf32> to vector<8x32xf32>
      %c0_121 = arith.constant 0 : index
      %c0_122 = arith.constant 0 : index
      %c0_123 = arith.constant 0 : index
      %c0_124 = arith.constant 0 : index
      %146 = vector.load %arg5[%c0_121, %c0_122, %c0_123, %c0_124] : memref<1x4x32x128xf32, #tpu.memory_space<vmem>>, vector<1x1x32x128xf32>
      %147 = vector.shape_cast %146 : vector<1x1x32x128xf32> to vector<32x128xf32>
      %cst_125 = arith.constant dense<0.000000e+00> : vector<8x128xf32>
      %148 = tpu.matmul %145, %147, %cst_125 {dimension_numbers = #tpu.dot_dimension_numbers<[1], [0], [0], [1], [0, 0, 1, 1], [], []>} : vector<8x32xf32>, vector<32x128xf32>, vector<8x128xf32> -> vector<8x128xf32>
      %149 = arith.mulf %145, %145 : vector<8x32xf32>
      %cst_126 = arith.constant dense<0.000000e+00> : vector<8xf32>
      %150 = vector.multi_reduction <add>, %149, %cst_126 [1] : vector<8x32xf32> to vector<8xf32>
      %151 = vector.shape_cast %150 : vector<8xf32> to vector<8x1xf32>
      %cst_127 = arith.constant 5.000000e-01 : f32
      %152 = vector.broadcast %cst_127 : f32 to vector<8x1xf32>
      %153 = arith.mulf %152, %151 : vector<8x1xf32>
      %154 = vector.broadcast %153 : vector<8x1xf32> to vector<8x128xf32>
      %155 = arith.subf %148, %154 : vector<8x128xf32>
      %156 = math.exp %155 : vector<8x128xf32>
      %c0_128 = arith.constant 0 : index
      %c0_129 = arith.constant 0 : index
      %c0_130 = arith.constant 0 : index
      %157 = vector.load %arg8[%c0_128, %c0_129, %c0_130] : memref<4x1x128xf32, #tpu.memory_space<vmem>>, vector<1x1x128xf32>
      %158 = vector.shape_cast %157 : vector<1x1x128xf32> to vector<1x128xf32>
      %159 = vector.broadcast %158 : vector<1x128xf32> to vector<8x128xf32>
      %160 = arith.mulf %156, %159 : vector<8x128xf32>
      %cst_131 = arith.constant dense<0.000000e+00> : vector<8xf32>
      %161 = vector.multi_reduction <add>, %160, %cst_131 [1] : vector<8x128xf32> to vector<8xf32>
      %162 = vector.shape_cast %161 : vector<8xf32> to vector<8x1xf32>
      %c0_132 = arith.constant 0 : index
      %c0_133 = arith.constant 0 : index
      %c0_134 = arith.constant 0 : index
      %163 = vector.load %arg7[%c0_132, %c0_133, %c0_134] : memref<4x128x32xf32, #tpu.memory_space<vmem>>, vector<1x128x32xf32>
      %164 = vector.shape_cast %163 : vector<1x128x32xf32> to vector<128x32xf32>
      %cst_135 = arith.constant dense<0.000000e+00> : vector<8x32xf32>
      %165 = tpu.matmul %156, %164, %cst_135 {dimension_numbers = #tpu.dot_dimension_numbers<[1], [0], [0], [1], [0, 0, 1, 1], [], []>} : vector<8x128xf32>, vector<128x32xf32>, vector<8x32xf32> -> vector<8x32xf32>
      %166 = tpu.reciprocal %162 {approx = true} : vector<8x1xf32> -> vector<8x1xf32>
      %167 = vector.broadcast %166 : vector<8x1xf32> to vector<8x32xf32>
      %168 = arith.mulf %165, %167 : vector<8x32xf32>
      %c0_136 = arith.constant 0 : index
      %c0_137 = arith.constant 0 : index
      %c0_138 = arith.constant 0 : index
      %c0_139 = arith.constant 0 : index
      %169 = vector.load %arg6[%c0_136, %c0_137, %c0_138, %c0_139] : memref<1x4x8x32xf32, #tpu.memory_space<vmem>>, vector<1x1x8x32xf32>
      %170 = vector.shape_cast %169 : vector<1x1x8x32xf32> to vector<8x32xf32>
      %171 = vector.shape_cast %168 : vector<8x32xf32> to vector<1x1x8x32xf32>
      tpu.vector_store %arg6[%c0_136, %c0_137, %c0_138, %c0_139], %171 {strides = array<i32>} : memref<1x4x8x32xf32, #tpu.memory_space<vmem>>, vector<1x1x8x32xf32>,
      %c0_140 = arith.constant 0 : index
      %c0_141 = arith.constant 0 : index
      %c1_142 = arith.constant 1 : index
      %c0_143 = arith.constant 0 : index
      %172 = vector.load %arg2[%c0_140, %c0_141, %c1_142, %c0_143] : memref<1x8x4x32xf32, #tpu.memory_space<vmem>>, vector<1x8x1x32xf32>
      %173 = vector.shape_cast %172 : vector<1x8x1x32xf32> to vector<8x32xf32>
      %c0_144 = arith.constant 0 : index
      %c1_145 = arith.constant 1 : index
      %c0_146 = arith.constant 0 : index
      %c0_147 = arith.constant 0 : index
      %174 = vector.load %arg5[%c0_144, %c1_145, %c0_146, %c0_147] : memref<1x4x32x128xf32, #tpu.memory_space<vmem>>, vector<1x1x32x128xf32>
      %175 = vector.shape_cast %174 : vector<1x1x32x128xf32> to vector<32x128xf32>
      %cst_148 = arith.constant dense<0.000000e+00> : vector<8x128xf32>
      %176 = tpu.matmul %173, %175, %cst_148 {dimension_numbers = #tpu.dot_dimension_numbers<[1], [0], [0], [1], [0, 0, 1, 1], [], []>} : vector<8x32xf32>, vector<32x128xf32>, vector<8x128xf32> -> vector<8x128xf32>
      %177 = arith.mulf %173, %173 : vector<8x32xf32>
      %cst_149 = arith.constant dense<0.000000e+00> : vector<8xf32>
      %178 = vector.multi_reduction <add>, %177, %cst_149 [1] : vector<8x32xf32> to vector<8xf32>
      %179 = vector.shape_cast %178 : vector<8xf32> to vector<8x1xf32>
      %cst_150 = arith.constant 5.000000e-01 : f32
      %180 = vector.broadcast %cst_150 : f32 to vector<8x1xf32>
      %181 = arith.mulf %180, %179 : vector<8x1xf32>
      %182 = vector.broadcast %181 : vector<8x1xf32> to vector<8x128xf32>
      %183 = arith.subf %176, %182 : vector<8x128xf32>
      %184 = math.exp %183 : vector<8x128xf32>
      %c1_151 = arith.constant 1 : index
      %c0_152 = arith.constant 0 : index
      %c0_153 = arith.constant 0 : index
      %185 = vector.load %arg8[%c1_151, %c0_152, %c0_153] : memref<4x1x128xf32, #tpu.memory_space<vmem>>, vector<1x1x128xf32>
      %186 = vector.shape_cast %185 : vector<1x1x128xf32> to vector<1x128xf32>
      %187 = vector.broadcast %186 : vector<1x128xf32> to vector<8x128xf32>
      %188 = arith.mulf %184, %187 : vector<8x128xf32>
      %cst_154 = arith.constant dense<0.000000e+00> : vector<8xf32>
      %189 = vector.multi_reduction <add>, %188, %cst_154 [1] : vector<8x128xf32> to vector<8xf32>
      %190 = vector.shape_cast %189 : vector<8xf32> to vector<8x1xf32>
      %c1_155 = arith.constant 1 : index
      %c0_156 = arith.constant 0 : index
      %c0_157 = arith.constant 0 : index
      %191 = vector.load %arg7[%c1_155, %c0_156, %c0_157] : memref<4x128x32xf32, #tpu.memory_space<vmem>>, vector<1x128x32xf32>
      %192 = vector.shape_cast %191 : vector<1x128x32xf32> to vector<128x32xf32>
      %cst_158 = arith.constant dense<0.000000e+00> : vector<8x32xf32>
      %193 = tpu.matmul %184, %192, %cst_158 {dimension_numbers = #tpu.dot_dimension_numbers<[1], [0], [0], [1], [0, 0, 1, 1], [], []>} : vector<8x128xf32>, vector<128x32xf32>, vector<8x32xf32> -> vector<8x32xf32>
      %194 = tpu.reciprocal %190 {approx = true} : vector<8x1xf32> -> vector<8x1xf32>
      %195 = vector.broadcast %194 : vector<8x1xf32> to vector<8x32xf32>
      %196 = arith.mulf %193, %195 : vector<8x32xf32>
      %c0_159 = arith.constant 0 : index
      %c1_160 = arith.constant 1 : index
      %c0_161 = arith.constant 0 : index
      %c0_162 = arith.constant 0 : index
      %197 = vector.load %arg6[%c0_159, %c1_160, %c0_161, %c0_162] : memref<1x4x8x32xf32, #tpu.memory_space<vmem>>, vector<1x1x8x32xf32>
      %198 = vector.shape_cast %197 : vector<1x1x8x32xf32> to vector<8x32xf32>
      %199 = vector.shape_cast %196 : vector<8x32xf32> to vector<1x1x8x32xf32>
      tpu.vector_store %arg6[%c0_159, %c1_160, %c0_161, %c0_162], %199 {strides = array<i32>} : memref<1x4x8x32xf32, #tpu.memory_space<vmem>>, vector<1x1x8x32xf32>,
      %c0_163 = arith.constant 0 : index
      %c0_164 = arith.constant 0 : index
      %c2_165 = arith.constant 2 : index
      %c0_166 = arith.constant 0 : index
      %200 = vector.load %arg2[%c0_163, %c0_164, %c2_165, %c0_166] : memref<1x8x4x32xf32, #tpu.memory_space<vmem>>, vector<1x8x1x32xf32>
      %201 = vector.shape_cast %200 : vector<1x8x1x32xf32> to vector<8x32xf32>
      %c0_167 = arith.constant 0 : index
      %c2_168 = arith.constant 2 : index
      %c0_169 = arith.constant 0 : index
      %c0_170 = arith.constant 0 : index
      %202 = vector.load %arg5[%c0_167, %c2_168, %c0_169, %c0_170] : memref<1x4x32x128xf32, #tpu.memory_space<vmem>>, vector<1x1x32x128xf32>
      %203 = vector.shape_cast %202 : vector<1x1x32x128xf32> to vector<32x128xf32>
      %cst_171 = arith.constant dense<0.000000e+00> : vector<8x128xf32>
      %204 = tpu.matmul %201, %203, %cst_171 {dimension_numbers = #tpu.dot_dimension_numbers<[1], [0], [0], [1], [0, 0, 1, 1], [], []>} : vector<8x32xf32>, vector<32x128xf32>, vector<8x128xf32> -> vector<8x128xf32>
      %205 = arith.mulf %201, %201 : vector<8x32xf32>
      %cst_172 = arith.constant dense<0.000000e+00> : vector<8xf32>
      %206 = vector.multi_reduction <add>, %205, %cst_172 [1] : vector<8x32xf32> to vector<8xf32>
      %207 = vector.shape_cast %206 : vector<8xf32> to vector<8x1xf32>
      %cst_173 = arith.constant 5.000000e-01 : f32
      %208 = vector.broadcast %cst_173 : f32 to vector<8x1xf32>
      %209 = arith.mulf %208, %207 : vector<8x1xf32>
      %210 = vector.broadcast %209 : vector<8x1xf32> to vector<8x128xf32>
      %211 = arith.subf %204, %210 : vector<8x128xf32>
      %212 = math.exp %211 : vector<8x128xf32>
      %c2_174 = arith.constant 2 : index
      %c0_175 = arith.constant 0 : index
      %c0_176 = arith.constant 0 : index
      %213 = vector.load %arg8[%c2_174, %c0_175, %c0_176] : memref<4x1x128xf32, #tpu.memory_space<vmem>>, vector<1x1x128xf32>
      %214 = vector.shape_cast %213 : vector<1x1x128xf32> to vector<1x128xf32>
      %215 = vector.broadcast %214 : vector<1x128xf32> to vector<8x128xf32>
      %216 = arith.mulf %212, %215 : vector<8x128xf32>
      %cst_177 = arith.constant dense<0.000000e+00> : vector<8xf32>
      %217 = vector.multi_reduction <add>, %216, %cst_177 [1] : vector<8x128xf32> to vector<8xf32>
      %218 = vector.shape_cast %217 : vector<8xf32> to vector<8x1xf32>
      %c2_178 = arith.constant 2 : index
      %c0_179 = arith.constant 0 : index
      %c0_180 = arith.constant 0 : index
      %219 = vector.load %arg7[%c2_178, %c0_179, %c0_180] : memref<4x128x32xf32, #tpu.memory_space<vmem>>, vector<1x128x32xf32>
      %220 = vector.shape_cast %219 : vector<1x128x32xf32> to vector<128x32xf32>
      %cst_181 = arith.constant dense<0.000000e+00> : vector<8x32xf32>
      %221 = tpu.matmul %212, %220, %cst_181 {dimension_numbers = #tpu.dot_dimension_numbers<[1], [0], [0], [1], [0, 0, 1, 1], [], []>} : vector<8x128xf32>, vector<128x32xf32>, vector<8x32xf32> -> vector<8x32xf32>
      %222 = tpu.reciprocal %218 {approx = true} : vector<8x1xf32> -> vector<8x1xf32>
      %223 = vector.broadcast %222 : vector<8x1xf32> to vector<8x32xf32>
      %224 = arith.mulf %221, %223 : vector<8x32xf32>
      %c0_182 = arith.constant 0 : index
      %c2_183 = arith.constant 2 : index
      %c0_184 = arith.constant 0 : index
      %c0_185 = arith.constant 0 : index
      %225 = vector.load %arg6[%c0_182, %c2_183, %c0_184, %c0_185] : memref<1x4x8x32xf32, #tpu.memory_space<vmem>>, vector<1x1x8x32xf32>
      %226 = vector.shape_cast %225 : vector<1x1x8x32xf32> to vector<8x32xf32>
      %227 = vector.shape_cast %224 : vector<8x32xf32> to vector<1x1x8x32xf32>
      tpu.vector_store %arg6[%c0_182, %c2_183, %c0_184, %c0_185], %227 {strides = array<i32>} : memref<1x4x8x32xf32, #tpu.memory_space<vmem>>, vector<1x1x8x32xf32>,
      %c0_186 = arith.constant 0 : index
      %c0_187 = arith.constant 0 : index
      %c3_188 = arith.constant 3 : index
      %c0_189 = arith.constant 0 : index
      %228 = vector.load %arg2[%c0_186, %c0_187, %c3_188, %c0_189] : memref<1x8x4x32xf32, #tpu.memory_space<vmem>>, vector<1x8x1x32xf32>
      %229 = vector.shape_cast %228 : vector<1x8x1x32xf32> to vector<8x32xf32>
      %c0_190 = arith.constant 0 : index
      %c3_191 = arith.constant 3 : index
      %c0_192 = arith.constant 0 : index
      %c0_193 = arith.constant 0 : index
      %230 = vector.load %arg5[%c0_190, %c3_191, %c0_192, %c0_193] : memref<1x4x32x128xf32, #tpu.memory_space<vmem>>, vector<1x1x32x128xf32>
      %231 = vector.shape_cast %230 : vector<1x1x32x128xf32> to vector<32x128xf32>
      %cst_194 = arith.constant dense<0.000000e+00> : vector<8x128xf32>
      %232 = tpu.matmul %229, %231, %cst_194 {dimension_numbers = #tpu.dot_dimension_numbers<[1], [0], [0], [1], [0, 0, 1, 1], [], []>} : vector<8x32xf32>, vector<32x128xf32>, vector<8x128xf32> -> vector<8x128xf32>
      %233 = arith.mulf %229, %229 : vector<8x32xf32>
      %cst_195 = arith.constant dense<0.000000e+00> : vector<8xf32>
      %234 = vector.multi_reduction <add>, %233, %cst_195 [1] : vector<8x32xf32> to vector<8xf32>
      %235 = vector.shape_cast %234 : vector<8xf32> to vector<8x1xf32>
      %cst_196 = arith.constant 5.000000e-01 : f32
      %236 = vector.broadcast %cst_196 : f32 to vector<8x1xf32>
      %237 = arith.mulf %236, %235 : vector<8x1xf32>
      %238 = vector.broadcast %237 : vector<8x1xf32> to vector<8x128xf32>
      %239 = arith.subf %232, %238 : vector<8x128xf32>
      %240 = math.exp %239 : vector<8x128xf32>
      %c3_197 = arith.constant 3 : index
      %c0_198 = arith.constant 0 : index
      %c0_199 = arith.constant 0 : index
      %241 = vector.load %arg8[%c3_197, %c0_198, %c0_199] : memref<4x1x128xf32, #tpu.memory_space<vmem>>, vector<1x1x128xf32>
      %242 = vector.shape_cast %241 : vector<1x1x128xf32> to vector<1x128xf32>
      %243 = vector.broadcast %242 : vector<1x128xf32> to vector<8x128xf32>
      %244 = arith.mulf %240, %243 : vector<8x128xf32>
      %cst_200 = arith.constant dense<0.000000e+00> : vector<8xf32>
      %245 = vector.multi_reduction <add>, %244, %cst_200 [1] : vector<8x128xf32> to vector<8xf32>
      %246 = vector.shape_cast %245 : vector<8xf32> to vector<8x1xf32>
      %c3_201 = arith.constant 3 : index
      %c0_202 = arith.constant 0 : index
      %c0_203 = arith.constant 0 : index
      %247 = vector.load %arg7[%c3_201, %c0_202, %c0_203] : memref<4x128x32xf32, #tpu.memory_space<vmem>>, vector<1x128x32xf32>
      %248 = vector.shape_cast %247 : vector<1x128x32xf32> to vector<128x32xf32>
      %cst_204 = arith.constant dense<0.000000e+00> : vector<8x32xf32>
      %249 = tpu.matmul %240, %248, %cst_204 {dimension_numbers = #tpu.dot_dimension_numbers<[1], [0], [0], [1], [0, 0, 1, 1], [], []>} : vector<8x128xf32>, vector<128x32xf32>, vector<8x32xf32> -> vector<8x32xf32>
      %250 = tpu.reciprocal %246 {approx = true} : vector<8x1xf32> -> vector<8x1xf32>
      %251 = vector.broadcast %250 : vector<8x1xf32> to vector<8x32xf32>
      %252 = arith.mulf %249, %251 : vector<8x32xf32>
      %c0_205 = arith.constant 0 : index
      %c3_206 = arith.constant 3 : index
      %c0_207 = arith.constant 0 : index
      %c0_208 = arith.constant 0 : index
      %253 = vector.load %arg6[%c0_205, %c3_206, %c0_207, %c0_208] : memref<1x4x8x32xf32, #tpu.memory_space<vmem>>, vector<1x1x8x32xf32>
      %254 = vector.shape_cast %253 : vector<1x1x8x32xf32> to vector<8x32xf32>
      %255 = vector.shape_cast %252 : vector<8x32xf32> to vector<1x1x8x32xf32>
      tpu.vector_store %arg6[%c0_205, %c3_206, %c0_207, %c0_208], %255 {strides = array<i32>} : memref<1x4x8x32xf32, #tpu.memory_space<vmem>>, vector<1x1x8x32xf32>,
    } else {
    }
    return
  }
  func.func @transform_0(%arg0: i32, %arg1: i32) -> (i32, i32, i32, i32) {
    %c0_i32 = arith.constant 0 : i32
    %c0_i32_0 = arith.constant 0 : i32
    %c0_i32_1 = arith.constant 0 : i32
    %c0_i32_2 = arith.constant 0 : i32
    return %arg0, %c0_i32, %c0_i32_0, %c0_i32_1 : i32, i32, i32, i32
  }
  func.func @transform_1(%arg0: i32, %arg1: i32) -> (i32, i32, i32, i32) {
    %c0_i32 = arith.constant 0 : i32
    %c0_i32_0 = arith.constant 0 : i32
    %c0_i32_1 = arith.constant 0 : i32
    return %arg0, %arg1, %c0_i32, %c0_i32_0 : i32, i32, i32, i32
  }
  func.func @transform_2(%arg0: i32, %arg1: i32) -> (i32, i32, i32, i32) {
    %c0_i32 = arith.constant 0 : i32
    %c0_i32_0 = arith.constant 0 : i32
    %c0_i32_1 = arith.constant 0 : i32
    return %arg0, %arg1, %c0_i32, %c0_i32_0 : i32, i32, i32, i32
  }
  func.func @transform_3(%arg0: i32, %arg1: i32) -> (i32, i32, i32, i32) {
    %c0_i32 = arith.constant 0 : i32
    %c0_i32_0 = arith.constant 0 : i32
    %c0_i32_1 = arith.constant 0 : i32
    %c0_i32_2 = arith.constant 0 : i32
    return %arg0, %c0_i32, %c0_i32_0, %c0_i32_1 : i32, i32, i32, i32
  }
  func.func @transform_4(%arg0: i32, %arg1: i32) -> (i32, i32, i32, i32) {
    %c0_i32 = arith.constant 0 : i32
    %c0_i32_0 = arith.constant 0 : i32
    %c0_i32_1 = arith.constant 0 : i32
    %c0_i32_2 = arith.constant 0 : i32
    return %arg0, %c0_i32, %c0_i32_0, %c0_i32_1 : i32, i32, i32, i32
  }
}

</mosaic_0001>

<llo_original>
// kernel: tpu_custom_call.1
$region0: #{tpu_custom_call.1}
  #allocation0 [shape = 'u32[]', space=smem, size = 0x4, offset = 0x4, fixed_abs, tag = 'smem constant byte address 0x4 - core index']
  #allocation1 [shape = 'u32[144,128]{1,0:T(1,128)}', space=vmem, size = 0x12000, scoped, tag = 'internal scratch']
  #allocation2 [shape = 'f32[4,128,32]{2,1,0:T(8,128)}', space=vmem, size = 0x40000, scoped, tag = 'scratch operand']
  #allocation3 [shape = 'f32[4,1,128]{2,1,0:T(1,128)}', space=vmem, size = 0x800, scoped, tag = 'scratch operand']
  %s0 = inlined_call_operand.hbm [shape: f32[2,8,4,32], index: 0, kind: input, shape index: {}]
  %s1 = inlined_call_operand.hbm [shape: f32[2,24,4,32], index: 1, kind: input, shape index: {}]
  %s2 = inlined_call_operand.hbm [shape: f32[2,24,4,32], index: 2, kind: input, shape index: {}]
  %s3 = inlined_call_operand.hbm [shape: f32[2,4,32,128], index: 3, kind: input, shape index: {}]
  %s4 = inlined_call_operand.hbm [shape: f32[2,4,8,32], index: 4, kind: output, shape index: {}]
  %s5 = sld [smem:[#allocation0]]
  $region73: #{tpu_custom_call.1} parent=0
    _
  %s7 = ssub.s32 1, %s5
  %s8 = scalar_select 0, %s7, %s5
  $region1: #{tpu_custom_call.1} parent=0
    #allocation4 [shape = 'u8[32768]{0}', space=vmem, size = 0x8000, scoped, tag = 'input window, operand 0']
    #allocation5 [shape = 's32[2]{0}', space=sflag, size = 0x8, scoped, tag = 'scoped memory for tpu_custom_call.1']
    #allocation6 [shape = 's32[2]{0}', space=sflag, size = 0x8, scoped, tag = 'scoped memory for tpu_custom_call.1']
    #allocation7 [shape = 'u8[32768]{0}', space=vmem, size = 0x8000, scoped, tag = 'input window, operand 1']
    #allocation8 [shape = 's32[2]{0}', space=sflag, size = 0x8, scoped, tag = 'scoped memory for tpu_custom_call.1']
    #allocation9 [shape = 'u8[32768]{0}', space=vmem, size = 0x8000, scoped, tag = 'input window, operand 2']
    #allocation10 [shape = 'u8[131072]{0}', space=vmem, size = 0x20000, scoped, tag = 'input window, operand 3']
    #allocation11 [shape = 's32[2]{0}', space=sflag, size = 0x8, scoped, tag = 'scoped memory for tpu_custom_call.1']
    #allocation12 [shape = 'u8[32768]{0}', space=vmem, size = 0x8000, scoped, tag = 'output window, operand 0']
    %9 = vsyncpa [#allocation5], 0
    %s10 = scalar_lea.sflag [#allocation5], 1
    %11 = vsyncpa %s10, 0
    %12 = vsyncpa [#allocation8], 0
    %s13 = scalar_lea.sflag [#allocation8], 1
    %14 = vsyncpa %s13, 0
    %15 = vsyncpa [#allocation11], 0
    %s16 = scalar_lea.sflag [#allocation11], 1
    %17 = vsyncpa %s16, 0
    %18 = vsyncpa [#allocation6], 0
    %s19 = scalar_lea.sflag [#allocation6], 1
    %20 = vsyncpa %s19, 0
    loop: start=0, step=1, limit=8
    $region2: #{tpu_custom_call.1} parent=1 // loop_pre_header
      _
    $region3: #{tpu_custom_call.1} parent=1 // loop_header
      %s22 = sphi 0, %s26
      %p23 = scmp.ge.s32.totalorder %s22, 8
      %s29 = sphi 0, %s41
      %s30 = sphi 0, %s37
      %s31 = sphi 0, %s29
      %s32 = sphi 0, %s30
      %s33 = sphi 0, %s31
      %s34 = sphi 0, %s32
      %s44 = sphi 0, %s46
      %s47 = sphi 0, %s44
      %s48 = sphi 0, %s47
      %s64 = sphi 0, %s48
      %s72 = sphi 0, %s74
      %s75 = sphi 0, %s72
      %s76 = sphi 0, %s75
      %s92 = sphi 0, %s76
      %s100 = sphi 0, %s102
      %s103 = sphi 0, %s100
      %s104 = sphi 0, %s103
      %s120 = sphi 0, %s104
      %s126 = sphi 0, %s128
      %s129 = sphi 0, %s126
      %s130 = sphi 0, %s129
      %s146 = sphi 0, %s130
      %s152 = sphi 0, %s154
      %s155 = sphi 0, %s152
      %s156 = sphi 0, %s155
      %s172 = sphi 0, %s156
    $region4: #{tpu_custom_call.1} parent=1 // loop_header_branch
      %25 = sbr.rel (%p23) target = $region8
    $region5: #{tpu_custom_call.1} parent=1 // loop_body
      %s27 = ssub.s32 %s22, 1
      %s28 = ssub.s32 %s22, 2
      %s35 = sadd.s32 1, %s30
      %p36 = scmp.ge.s32.totalorder %s35, 3
      %s37 = scalar_select %p36, 0, %s35
      %s38 = sadd.s32 1, %s29
      %s39 = scalar_select %p36, %s38, %s29
      %p40 = scmp.ge.s32.totalorder %s39, 2
      %s41 = scalar_select %p40, 0, %s39
      %s42 = ssub.s32 %s29, %s41
      %p43 = scmp.eq.s32.totalorder %s42, 0
      %s45 = sadd.s32 %s44, 1
      %s46 = scalar_select %p43, %s44, %s45
      %p49 = pneg %p43
      %p50 = scmp.eq.s32.totalorder %s22, 5
      %p51 = por %p49, %p50
      %p52 = scmp.ne.s32.totalorder %s44, %s47
      %p53 = scmp.eq.s32.totalorder %s22, 0
      %p54 = por %p52, %p53
      %p55 = scmp.ne.s32.totalorder %s44, %s47
      %p56 = scmp.eq.s32.totalorder %s27, 5
      %p57 = por %p55, %p56
      %p58 = scmp.ne.s32.totalorder %s47, %s48
      %p59 = scmp.eq.s32.totalorder %s27, 0
      %p60 = por %p58, %p59
      %p61 = scmp.ne.s32.totalorder %s47, %s48
      %p62 = scmp.eq.s32.totalorder %s28, 5
      %p63 = por %p61, %p62
      %p65 = scmp.ne.s32.totalorder %s48, %s64
      %p66 = scmp.eq.s32.totalorder %s28, 0
      %p67 = por %p65, %p66
      %s68 = ssub.s32 %s29, %s41
      %s69 = ssub.s32 %s30, %s37
      %s70 = sor.u32 %s68, %s69
      %p71 = scmp.eq.s32.totalorder %s70, 0
      %s73 = sadd.s32 %s72, 1
      %s74 = scalar_select %p71, %s72, %s73
      %p77 = pneg %p71
      %p78 = scmp.eq.s32.totalorder %s22, 5
      %p79 = por %p77, %p78
      %p80 = scmp.ne.s32.totalorder %s72, %s75
      %p81 = scmp.eq.s32.totalorder %s22, 0
      %p82 = por %p80, %p81
      %p83 = scmp.ne.s32.totalorder %s72, %s75
      %p84 = scmp.eq.s32.totalorder %s27, 5
      %p85 = por %p83, %p84
      %p86 = scmp.ne.s32.totalorder %s75, %s76
      %p87 = scmp.eq.s32.totalorder %s27, 0
      %p88 = por %p86, %p87
      %p89 = scmp.ne.s32.totalorder %s75, %s76
      %p90 = scmp.eq.s32.totalorder %s28, 5
      %p91 = por %p89, %p90
      %p93 = scmp.ne.s32.totalorder %s76, %s92
      %p94 = scmp.eq.s32.totalorder %s28, 0
      %p95 = por %p93, %p94
      %s96 = ssub.s32 %s29, %s41
      %s97 = ssub.s32 %s30, %s37
      %s98 = sor.u32 %s96, %s97
      %p99 = scmp.eq.s32.totalorder %s98, 0
      %s101 = sadd.s32 %s100, 1
      %s102 = scalar_select %p99, %s100, %s101
      %p105 = pneg %p99
      %p106 = scmp.eq.s32.totalorder %s22, 5
      %p107 = por %p105, %p106
      %p108 = scmp.ne.s32.totalorder %s100, %s103
      %p109 = scmp.eq.s32.totalorder %s22, 0
      %p110 = por %p108, %p109
      %p111 = scmp.ne.s32.totalorder %s100, %s103
      %p112 = scmp.eq.s32.totalorder %s27, 5
      %p113 = por %p111, %p112
      %p114 = scmp.ne.s32.totalorder %s103, %s104
      %p115 = scmp.eq.s32.totalorder %s27, 0
      %p116 = por %p114, %p115
      %p117 = scmp.ne.s32.totalorder %s103, %s104
      %p118 = scmp.eq.s32.totalorder %s28, 5
      %p119 = por %p117, %p118
      %p121 = scmp.ne.s32.totalorder %s104, %s120
      %p122 = scmp.eq.s32.totalorder %s28, 0
      %p123 = por %p121, %p122
      %s124 = ssub.s32 %s29, %s41
      %p125 = scmp.eq.s32.totalorder %s124, 0
      %s127 = sadd.s32 %s126, 1
      %s128 = scalar_select %p125, %s126, %s127
      %p131 = pneg %p125
      %p132 = scmp.eq.s32.totalorder %s22, 5
      %p133 = por %p131, %p132
      %p134 = scmp.ne.s32.totalorder %s126, %s129
      %p135 = scmp.eq.s32.totalorder %s22, 0
      %p136 = por %p134, %p135
      %p137 = scmp.ne.s32.totalorder %s126, %s129
      %p138 = scmp.eq.s32.totalorder %s27, 5
      %p139 = por %p137, %p138
      %p140 = scmp.ne.s32.totalorder %s129, %s130
      %p141 = scmp.eq.s32.totalorder %s27, 0
      %p142 = por %p140, %p141
      %p143 = scmp.ne.s32.totalorder %s129, %s130
      %p144 = scmp.eq.s32.totalorder %s28, 5
      %p145 = por %p143, %p144
      %p147 = scmp.ne.s32.totalorder %s130, %s146
      %p148 = scmp.eq.s32.totalorder %s28, 0
      %p149 = por %p147, %p148
      %s150 = ssub.s32 %s29, %s41
      %p151 = scmp.eq.s32.totalorder %s150, 0
      %s153 = sadd.s32 %s152, 1
      %s154 = scalar_select %p151, %s152, %s153
      %p157 = pneg %p151
      %p158 = scmp.eq.s32.totalorder %s22, 5
      %p159 = por %p157, %p158
      %p160 = scmp.ne.s32.totalorder %s152, %s155
      %p161 = scmp.eq.s32.totalorder %s22, 0
      %p162 = por %p160, %p161
      %p163 = scmp.ne.s32.totalorder %s152, %s155
      %p164 = scmp.eq.s32.totalorder %s27, 5
      %p165 = por %p163, %p164
      %p166 = scmp.ne.s32.totalorder %s155, %s156
      %p167 = scmp.eq.s32.totalorder %s27, 0
      %p168 = por %p166, %p167
      %p169 = scmp.ne.s32.totalorder %s155, %s156
      %p170 = scmp.eq.s32.totalorder %s28, 5
      %p171 = por %p169, %p170
      %p173 = scmp.ne.s32.totalorder %s156, %s172
      %p174 = scmp.eq.s32.totalorder %s28, 0
      %p175 = por %p173, %p174
      %p176 = scmp.le.s32.totalorder 1, %s22
      %p177 = scmp.lt.s32.totalorder %s22, 7
      %p178 = pnand %p176, %p177
      %p179 = pneg %p178
      // Predicated region
      $region9: #{tpu_custom_call.1} parent=5 // pred_check
        _
      $region10: #{tpu_custom_call.1} parent=5 // pred_check_branch
        %181 = sbr.rel (%p178) target = $region12
      $region11: #{tpu_custom_call.1} parent=5 // pred_region
        %s182 = ssub.s32 %s22, 1
      $region12: #{tpu_custom_call.1} parent=5 // pred_fallthru
        _
      %p183 = scmp.lt.s32.totalorder %s22, 6
      // Predicated region
      $region13: #{tpu_custom_call.1} parent=5 // pred_check
        %p184 = pneg %p183
      $region14: #{tpu_custom_call.1} parent=5 // pred_check_branch
        %186 = sbr.rel (%p184) target = $region16
      $region15: #{tpu_custom_call.1} parent=5 // pred_region
        // Predicated region
        $region17: #{tpu_custom_call.1} parent=15 // pred_check
          %p187 = pneg %p54
        $region18: #{tpu_custom_call.1} parent=15 // pred_check_branch
          %189 = sbr.rel (%p187) target = $region20
        $region19: #{tpu_custom_call.1} parent=15 // pred_region
          %s190 = sand.u32 %s44, 1
          %s191 = scalar_lea.sflag [#allocation5], %s190
          %s192 = sand.u32 %s44, 1
          %s193 = smul.addr %s192, 32
          %s194 = scalar_lea.vmem [#allocation4], %s193
          %s196 = ssub.s32 512, 512
          %197 = vsyncadd %s191, %s196
          %s198 = smul.addr %s29, 8
          %s199 = smul.addr %s198, 64
          %s200 = scalar_lea.hbm %s0, %s199
          %s201 = sshll.u32 %s194, 4
          %s202 = int_to_ptr.vmem [resolvable:$true] %s201
          %207 = dma.hbm_to_vmem [thread:$0]  %s200, 512, %s202, %s191, 64, 64, 4
        $region20: #{tpu_custom_call.1} parent=15 // pred_fallthru
          _
        // Predicated region
        $region21: #{tpu_custom_call.1} parent=15 // pred_check
          %p208 = pneg %p82
        $region22: #{tpu_custom_call.1} parent=15 // pred_check_branch
          %210 = sbr.rel (%p208) target = $region24
        $region23: #{tpu_custom_call.1} parent=15 // pred_region
          %s211 = sand.u32 %s22, 1
          %s212 = scalar_lea.sflag [#allocation8], %s211
          %s213 = sand.u32 %s72, 1
          %s214 = smul.addr %s213, 32
          %s215 = scalar_lea.vmem [#allocation7], %s214
          %s216 = smul.u32 8, %s30
          %s218 = ssub.s32 512, 512
          %219 = vsyncadd %s212, %s218
          %s220 = smul.addr %s29, 24
          %s221 = sadd.s32 %s216, %s220
          %s222 = smul.addr %s221, 64
          %s223 = scalar_lea.hbm %s1, %s222
          %s224 = sshll.u32 %s215, 4
          %s225 = int_to_ptr.vmem [resolvable:$true] %s224
          %230 = dma.hbm_to_vmem [thread:$0]  %s223, 512, %s225, %s212, 64, 64, 4
        $region24: #{tpu_custom_call.1} parent=15 // pred_fallthru
          _
        // Predicated region
        $region25: #{tpu_custom_call.1} parent=15 // pred_check
          %p231 = pneg %p110
        $region26: #{tpu_custom_call.1} parent=15 // pred_check_branch
          %233 = sbr.rel (%p231) target = $region28
        $region27: #{tpu_custom_call.1} parent=15 // pred_region
          %s234 = sand.u32 %s22, 1
          %s235 = scalar_lea.sflag [#allocation8], %s234
          %s236 = sand.u32 %s100, 1
          %s237 = smul.addr %s236, 32
          %s238 = scalar_lea.vmem [#allocation9], %s237
          %s239 = smul.u32 8, %s30
          %s241 = ssub.s32 512, 512
          %242 = vsyncadd %s235, %s241
          %s243 = smul.addr %s29, 24
          %s244 = sadd.s32 %s239, %s243
          %s245 = smul.addr %s244, 64
          %s246 = scalar_lea.hbm %s2, %s245
          %s247 = sshll.u32 %s238, 4
          %s248 = int_to_ptr.vmem [resolvable:$true] %s247
          %253 = dma.hbm_to_vmem [thread:$0]  %s246, 512, %s248, %s235, 64, 64, 4
        $region28: #{tpu_custom_call.1} parent=15 // pred_fallthru
          _
        // Predicated region
        $region29: #{tpu_custom_call.1} parent=15 // pred_check
          %p254 = pneg %p136
        $region30: #{tpu_custom_call.1} parent=15 // pred_check_branch
          %256 = sbr.rel (%p254) target = $region32
        $region31: #{tpu_custom_call.1} parent=15 // pred_region
          %s257 = sand.u32 %s126, 1
          %s258 = scalar_lea.sflag [#allocation11], %s257
          %s259 = sand.u32 %s126, 1
          %s260 = smul.addr %s259, 128
          %s261 = scalar_lea.vmem [#allocation10], %s260
          %s263 = ssub.s32 2048, 2048
          %264 = vsyncadd %s258, %s263
          %s265 = smul.addr %s29, 16
          %s266 = smul.addr %s265, 128
          %s267 = scalar_lea.hbm %s3, %s266
          %s268 = sshll.u32 %s261, 4
          %s269 = int_to_ptr.vmem [resolvable:$true] %s268
          %274 = dma.hbm_to_vmem [thread:$0]  %s267, 2048, %s269, %s258, 128, 128, 8
        $region32: #{tpu_custom_call.1} parent=15 // pred_fallthru
          _
      $region16: #{tpu_custom_call.1} parent=5 // pred_fallthru
        _
      %p275 = scmp.le.s32.totalorder 1, %s22
      %p276 = scmp.lt.s32.totalorder %s22, 7
      %p277 = pnand %p275, %p276
      %p278 = pneg %p277
      // Predicated region
      $region33: #{tpu_custom_call.1} parent=5 // pred_check
        _
      $region34: #{tpu_custom_call.1} parent=5 // pred_check_branch
        %280 = sbr.rel (%p277) target = $region36
      $region35: #{tpu_custom_call.1} parent=5 // pred_region
        %s281 = ssub.s32 %s22, 1
        %s282 = sand.u32 %s47, 1
        %s283 = scalar_lea.sflag [#allocation5], %s282
        %s284 = sand.u32 %s47, 1
        %s285 = smul.addr %s284, 32
        %s286 = scalar_lea.vmem [#allocation4], %s285
        // Predicated region
        $region37: #{tpu_custom_call.1} parent=35 // pred_check
          %p287 = pneg %p60
        $region38: #{tpu_custom_call.1} parent=35 // pred_check_branch
          %289 = sbr.rel (%p287) target = $region40
        $region39: #{tpu_custom_call.1} parent=35 // pred_region
          %290 = dma.done %s283, 512
        $region40: #{tpu_custom_call.1} parent=35 // pred_fallthru
          _
        %s291 = sand.u32 %s27, 1
        %s292 = scalar_lea.sflag [#allocation8], %s291
        %s293 = sand.u32 %s75, 1
        %s294 = smul.addr %s293, 32
        %s295 = scalar_lea.vmem [#allocation7], %s294
        // Predicated region
        $region41: #{tpu_custom_call.1} parent=35 // pred_check
          %p296 = pneg %p88
        $region42: #{tpu_custom_call.1} parent=35 // pred_check_branch
          %298 = sbr.rel (%p296) target = $region44
        $region43: #{tpu_custom_call.1} parent=35 // pred_region
          %299 = dma.done %s292, 512
        $region44: #{tpu_custom_call.1} parent=35 // pred_fallthru
          _
        %s300 = sand.u32 %s27, 1
        %s301 = scalar_lea.sflag [#allocation8], %s300
        %s302 = sand.u32 %s103, 1
        %s303 = smul.addr %s302, 32
        %s304 = scalar_lea.vmem [#allocation9], %s303
        // Predicated region
        $region45: #{tpu_custom_call.1} parent=35 // pred_check
          %p305 = pneg %p116
        $region46: #{tpu_custom_call.1} parent=35 // pred_check_branch
          %307 = sbr.rel (%p305) target = $region48
        $region47: #{tpu_custom_call.1} parent=35 // pred_region
          %308 = dma.done %s301, 512
        $region48: #{tpu_custom_call.1} parent=35 // pred_fallthru
          _
        %s309 = sand.u32 %s129, 1
        %s310 = scalar_lea.sflag [#allocation11], %s309
        %s311 = sand.u32 %s129, 1
        %s312 = smul.addr %s311, 128
        %s313 = scalar_lea.vmem [#allocation10], %s312
        // Predicated region
        $region49: #{tpu_custom_call.1} parent=35 // pred_check
          %p314 = pneg %p142
        $region50: #{tpu_custom_call.1} parent=35 // pred_check_branch
          %316 = sbr.rel (%p314) target = $region52
        $region51: #{tpu_custom_call.1} parent=35 // pred_region
          %317 = dma.done %s310, 2048
        $region52: #{tpu_custom_call.1} parent=35 // pred_fallthru
          _
        %s318 = sand.u32 %s47, 1
        %s319 = scalar_lea.sflag [#allocation5], %s318
        %s320 = sand.u32 %s47, 1
        %s321 = smul.addr %s320, 32
        %s322 = scalar_lea.vmem [#allocation4], %s321
        %p323 = pneg %p60
        %p324 = pneg %p57
        %s325 = sand.u32 %s27, 1
        %s326 = scalar_lea.sflag [#allocation8], %s325
        %s327 = sand.u32 %s75, 1
        %s328 = smul.addr %s327, 32
        %s329 = scalar_lea.vmem [#allocation7], %s328
        %p330 = pneg %p88
        %p331 = pneg %p85
        %s332 = sand.u32 %s27, 1
        %s333 = scalar_lea.sflag [#allocation8], %s332
        %s334 = sand.u32 %s103, 1
        %s335 = smul.addr %s334, 32
        %s336 = scalar_lea.vmem [#allocation9], %s335
        %p337 = pneg %p116
        %p338 = pneg %p113
        %s339 = sand.u32 %s129, 1
        %s340 = scalar_lea.sflag [#allocation11], %s339
        %s341 = sand.u32 %s129, 1
        %s342 = smul.addr %s341, 128
        %s343 = scalar_lea.vmem [#allocation10], %s342
        %p344 = pneg %p142
        %p345 = pneg %p139
        %p346 = pneg %p168
        %p347 = pneg %p165
        %s348 = sand.u32 %s155, 1
        %s349 = scalar_lea.sflag [#allocation6], %s348
        %s350 = sand.u32 %s155, 1
        %s351 = smul.addr %s350, 32
        %s352 = scalar_lea.vmem [#allocation12], %s351
        %s353 = smul.u32 8, %s32
        %s354 = smul.u32 8, %s32
        %p355 = scmp.eq.s32.totalorder %s32, 0
        // Predicated region
        $region53: #{tpu_custom_call.1} parent=35 // pred_check
          %p356 = pneg %p355
        $region54: #{tpu_custom_call.1} parent=35 // pred_check_branch
          %358 = sbr.rel (%p356) target = $region56
        $region55: #{tpu_custom_call.1} parent=35 // pred_region
          %vm359 = vcmask 261120
          %360 = vst.msk [vmem:[#allocation2] sm:$0xff] %vm359, 0.0
          %361 = vst.msk [vmem:[#allocation2 + $0x8] sm:$0xff] %vm359, 0.0
          %362 = vst.msk [vmem:[#allocation2 + $0x10] sm:$0xff] %vm359, 0.0
          %363 = vst.msk [vmem:[#allocation2 + $0x18] sm:$0xff] %vm359, 0.0
          %364 = vst.msk [vmem:[#allocation2 + $0x20] sm:$0xff] %vm359, 0.0
          %365 = vst.msk [vmem:[#allocation2 + $0x28] sm:$0xff] %vm359, 0.0
          %366 = vst.msk [vmem:[#allocation2 + $0x30] sm:$0xff] %vm359, 0.0
          %367 = vst.msk [vmem:[#allocation2 + $0x38] sm:$0xff] %vm359, 0.0
          %368 = vst.msk [vmem:[#allocation2 + $0x40] sm:$0xff] %vm359, 0.0
          %369 = vst.msk [vmem:[#allocation2 + $0x48] sm:$0xff] %vm359, 0.0
          %370 = vst.msk [vmem:[#allocation2 + $0x50] sm:$0xff] %vm359, 0.0
          %371 = vst.msk [vmem:[#allocation2 + $0x58] sm:$0xff] %vm359, 0.0
          %372 = vst.msk [vmem:[#allocation2 + $0x60] sm:$0xff] %vm359, 0.0
          %373 = vst.msk [vmem:[#allocation2 + $0x68] sm:$0xff] %vm359, 0.0
          %374 = vst.msk [vmem:[#allocation2 + $0x70] sm:$0xff] %vm359, 0.0
          %375 = vst.msk [vmem:[#allocation2 + $0x78] sm:$0xff] %vm359, 0.0
          %376 = vst.msk [vmem:[#allocation2 + $0x80] sm:$0xff] %vm359, 0.0
          %377 = vst.msk [vmem:[#allocation2 + $0x88] sm:$0xff] %vm359, 0.0
          %378 = vst.msk [vmem:[#allocation2 + $0x90] sm:$0xff] %vm359, 0.0
          %379 = vst.msk [vmem:[#allocation2 + $0x98] sm:$0xff] %vm359, 0.0
          %380 = vst.msk [vmem:[#allocation2 + $0xa0] sm:$0xff] %vm359, 0.0
          %381 = vst.msk [vmem:[#allocation2 + $0xa8] sm:$0xff] %vm359, 0.0
          %382 = vst.msk [vmem:[#allocation2 + $0xb0] sm:$0xff] %vm359, 0.0
          %383 = vst.msk [vmem:[#allocation2 + $0xb8] sm:$0xff] %vm359, 0.0
          %384 = vst.msk [vmem:[#allocation2 + $0xc0] sm:$0xff] %vm359, 0.0
          %385 = vst.msk [vmem:[#allocation2 + $0xc8] sm:$0xff] %vm359, 0.0
          %386 = vst.msk [vmem:[#allocation2 + $0xd0] sm:$0xff] %vm359, 0.0
          %387 = vst.msk [vmem:[#allocation2 + $0xd8] sm:$0xff] %vm359, 0.0
          %388 = vst.msk [vmem:[#allocation2 + $0xe0] sm:$0xff] %vm359, 0.0
          %389 = vst.msk [vmem:[#allocation2 + $0xe8] sm:$0xff] %vm359, 0.0
          %390 = vst.msk [vmem:[#allocation2 + $0xf0] sm:$0xff] %vm359, 0.0
          %391 = vst.msk [vmem:[#allocation2 + $0xf8] sm:$0xff] %vm359, 0.0
          %392 = vst.msk [vmem:[#allocation2 + $0x100] sm:$0xff] %vm359, 0.0
          %393 = vst.msk [vmem:[#allocation2 + $0x108] sm:$0xff] %vm359, 0.0
          %394 = vst.msk [vmem:[#allocation2 + $0x110] sm:$0xff] %vm359, 0.0
          %395 = vst.msk [vmem:[#allocation2 + $0x118] sm:$0xff] %vm359, 0.0
          %396 = vst.msk [vmem:[#allocation2 + $0x120] sm:$0xff] %vm359, 0.0
          %397 = vst.msk [vmem:[#allocation2 + $0x128] sm:$0xff] %vm359, 0.0
          %398 = vst.msk [vmem:[#allocation2 + $0x130] sm:$0xff] %vm359, 0.0
          %399 = vst.msk [vmem:[#allocation2 + $0x138] sm:$0xff] %vm359, 0.0
          %400 = vst.msk [vmem:[#allocation2 + $0x140] sm:$0xff] %vm359, 0.0
          %401 = vst.msk [vmem:[#allocation2 + $0x148] sm:$0xff] %vm359, 0.0
          %402 = vst.msk [vmem:[#allocation2 + $0x150] sm:$0xff] %vm359, 0.0
          %403 = vst.msk [vmem:[#allocation2 + $0x158] sm:$0xff] %vm359, 0.0
          %404 = vst.msk [vmem:[#allocation2 + $0x160] sm:$0xff] %vm359, 0.0
          %405 = vst.msk [vmem:[#allocation2 + $0x168] sm:$0xff] %vm359, 0.0
          %406 = vst.msk [vmem:[#allocation2 + $0x170] sm:$0xff] %vm359, 0.0
          %407 = vst.msk [vmem:[#allocation2 + $0x178] sm:$0xff] %vm359, 0.0
          %408 = vst.msk [vmem:[#allocation2 + $0x180] sm:$0xff] %vm359, 0.0
          %409 = vst.msk [vmem:[#allocation2 + $0x188] sm:$0xff] %vm359, 0.0
          %410 = vst.msk [vmem:[#allocation2 + $0x190] sm:$0xff] %vm359, 0.0
          %411 = vst.msk [vmem:[#allocation2 + $0x198] sm:$0xff] %vm359, 0.0
          %412 = vst.msk [vmem:[#allocation2 + $0x1a0] sm:$0xff] %vm359, 0.0
          %413 = vst.msk [vmem:[#allocation2 + $0x1a8] sm:$0xff] %vm359, 0.0
          %414 = vst.msk [vmem:[#allocation2 + $0x1b0] sm:$0xff] %vm359, 0.0
          %415 = vst.msk [vmem:[#allocation2 + $0x1b8] sm:$0xff] %vm359, 0.0
          %416 = vst.msk [vmem:[#allocation2 + $0x1c0] sm:$0xff] %vm359, 0.0
          %417 = vst.msk [vmem:[#allocation2 + $0x1c8] sm:$0xff] %vm359, 0.0
          %418 = vst.msk [vmem:[#allocation2 + $0x1d0] sm:$0xff] %vm359, 0.0
          %419 = vst.msk [vmem:[#allocation2 + $0x1d8] sm:$0xff] %vm359, 0.0
          %420 = vst.msk [vmem:[#allocation2 + $0x1e0] sm:$0xff] %vm359, 0.0
          %421 = vst.msk [vmem:[#allocation2 + $0x1e8] sm:$0xff] %vm359, 0.0
          %422 = vst.msk [vmem:[#allocation2 + $0x1f0] sm:$0xff] %vm359, 0.0
          %423 = vst.msk [vmem:[#allocation2 + $0x1f8] sm:$0xff] %vm359, 0.0
          %424 = vst [vmem:[#allocation3] sm:$0x1] 0.0
          %425 = vst [vmem:[#allocation3 + $0x1] sm:$0x1] 0.0
          %426 = vst [vmem:[#allocation3 + $0x2] sm:$0x1] 0.0
          %427 = vst [vmem:[#allocation3 + $0x3] sm:$0x1] 0.0
        $region56: #{tpu_custom_call.1} parent=35 // pred_fallthru
          _
        %v428 = vlaneseq
        %v429 = vand.u32 %v428, 127
        %vm430 = vcmp.lt.s32.totalorder %v429, 10
        %s431 = smul.u32 %s32, 8
        %v432 = vlaneseq
        %v433 = vshrl.u32 %v432, 7
        %v434 = vstv %s431
        %v435 = vadd.s32 %v434, %v433
        %vm436 = vcmp.lt.s32.totalorder %v435, 24
        %vm437 = vmand %vm430, %vm436
        %v438 = vld [vmem:[%s295] sm:$0x1]
        %v439 = vld [vmem:[%s295 + $0x4] sm:$0x1]
        %v440 = vld [vmem:[%s295 + $0x8] sm:$0x1]
        %v441 = vld [vmem:[%s295 + $0xc] sm:$0x1]
        %v442 = vld [vmem:[%s295 + $0x10] sm:$0x1]
        %v443 = vld [vmem:[%s295 + $0x14] sm:$0x1]
        %v444 = vld [vmem:[%s295 + $0x18] sm:$0x1]
        %v445 = vld [vmem:[%s295 + $0x1c] sm:$0x1]
        %v446 = vld [vmem:[%s304] sm:$0x1]
        %v447 = vld [vmem:[%s304 + $0x4] sm:$0x1]
        %v448 = vld [vmem:[%s304 + $0x8] sm:$0x1]
        %v449 = vld [vmem:[%s304 + $0xc] sm:$0x1]
        %v450 = vld [vmem:[%s304 + $0x10] sm:$0x1]
        %v451 = vld [vmem:[%s304 + $0x14] sm:$0x1]
        %v452 = vld [vmem:[%s304 + $0x18] sm:$0x1]
        %v453 = vld [vmem:[%s304 + $0x1c] sm:$0x1]
        %v454 = vld [vmem:[%s313] sm:$0xff]
        %v455 = vld [vmem:[%s313 + $0x8] sm:$0xff]
        %v456 = vld [vmem:[%s313 + $0x10] sm:$0xff]
        %v457 = vld [vmem:[%s313 + $0x18] sm:$0xff]
        %v466 = vrot.slane %v439, 7
        %vm467 = vcmask 1041409
        %v468 = vsel %vm467, %v466, %v438
        %v469 = vrot.slane %v440, 6
        %vm470 = vcmask 1042434
        %v471 = vsel %vm470, %v469, %v468
        %v472 = vrot.slane %v441, 5
        %vm473 = vcmask 1043459
        %v474 = vsel %vm473, %v472, %v471
        %v475 = vrot.slane %v442, 4
        %vm476 = vcmask 1044484
        %v477 = vsel %vm476, %v475, %v474
        %v478 = vrot.slane %v443, 3
        %vm479 = vcmask 1045509
        %v480 = vsel %vm479, %v478, %v477
        %v481 = vrot.slane %v444, 2
        %vm482 = vcmask 1046534
        %v483 = vsel %vm482, %v481, %v480
        %v484 = vrot.slane %v445, 1
        %vm485 = vcmask 1047559
        %v486 = vsel %vm485, %v484, %v483
        %vm487 = vcmask 261120
        %v488 = vsel %vm487, %v486, 0
        %490 = vmatprep.subr.mxu0 0.0
        %491 = vmatpush1.msra.mxu0 %v454
        %492 = vmatprep.subr.mxu0 0.0
        %493 = vmatpush1.msra.mxu0 %v455
        %494 = vmatprep.subr.mxu0 0.0
        %495 = vmatpush1.msra.mxu0 %v456
        %496 = vmatprep.subr.mxu0 0.0
        %497 = vmatpush1.msra.mxu0 %v457
        %498 = vmatprep.subr.mxu0 0.0
        %499 = vmatpush1.msra.mxu0 0.0
        %500 = vmatprep.subr.mxu0 0.0
        %501 = vmatpush1.msra.mxu0 0.0
        %502 = vmatprep.subr.mxu0 0.0
        %503 = vmatpush1.msra.mxu0 0.0
        %504 = vmatprep.subr.mxu0 0.0
        %505 = vmatpush1.msra.mxu0 0.0
        %506 = vmatprep.subr.mxu0 0.0
        %507 = vmatpush1.msra.mxu0 0.0
        %508 = vmatprep.subr.mxu0 0.0
        %509 = vmatpush1.msra.mxu0 0.0
        %510 = vmatprep.subr.mxu0 0.0
        %511 = vmatpush1.msra.mxu0 0.0
        %512 = vmatprep.subr.mxu0 0.0
        %513 = vmatpush1.msra.mxu0 0.0
        %514 = vmatprep.subr.mxu0 0.0
        %515 = vmatpush1.msra.mxu0 0.0
        %516 = vmatprep.subr.mxu0 0.0
        %517 = vmatpush1.msra.mxu0 0.0
        %518 = vmatprep.subr.mxu0 0.0
        %519 = vmatpush1.msra.mxu0 0.0
        %520 = vmatprep.subr.mxu0 0.0
        %521 = vmatpush1.msra.mxu0 0.0
        %522 = vmatprep.subr.mxu0 0.0
        %523 = vmatpush1.msra.mxu0 0.0
        %524 = vmatprep.subr.mxu0 0.0
        %525 = vmatpush1.msra.mxu0 0.0
        %526 = vmatprep.subr.mxu0 0.0
        %527 = vmatpush1.msra.mxu0 0.0
        %528 = vmatprep.subr.mxu0 0.0
        %529 = vmatpush1.msra.mxu0 0.0
        %530 = vmatprep.subr.mxu0 0.0
        %531 = vmatpush1.msra.mxu0 0.0
        %532 = vmatprep.subr.mxu0 0.0
        %533 = vmatpush1.msra.mxu0 0.0
        %534 = vmatprep.subr.mxu0 0.0
        %535 = vmatpush1.msra.mxu0 0.0
        %536 = vmatprep.subr.mxu0 0.0
        %537 = vmatpush1.msra.mxu0 0.0
        %538 = vmatprep.subr.mxu0 0.0
        %539 = vmatpush1.msra.mxu0 0.0
        %540 = vmatprep.subr.mxu0 0.0
        %541 = vmatpush1.msra.mxu0 0.0
        %542 = vmatprep.subr.mxu0 0.0
        %543 = vmatpush1.msra.mxu0 0.0
        %544 = vmatprep.subr.mxu0 0.0
        %545 = vmatpush1.msra.mxu0 0.0
        %546 = vmatprep.subr.mxu0 0.0
        %547 = vmatpush1.msra.mxu0 0.0
        %548 = vmatprep.subr.mxu0 0.0
        %549 = vmatpush1.msra.mxu0 0.0
        %550 = vmatprep.subr.mxu0 0.0
        %551 = vmatpush1.msra.mxu0 0.0
        %552 = vmatprep.subr.mxu0 0.0
        %553 = vmatpush1.msra.mxu0 0.0
        %554 = vmatprep.mubr.f32.mxu0 0.0
        %555 = vmatmul.mubr.f32.gmra.mrb[0].mxu0 %v488
        %v556 = vpop.f32.mrb[0].mxu0
        %v557 = vadd.f32 0.0, %v556
        %v558 = vpop.f32.mrb[0].mxu0
        %559 = vdwg.mxu0
        %v560 = vmul.f32 %v438, %v438
        %v561 = vmul.f32 %v439, %v439
        %v562 = vmul.f32 %v440, %v440
        %v563 = vmul.f32 %v441, %v441
        %v564 = vmul.f32 %v442, %v442
        %v565 = vmul.f32 %v443, %v443
        %v566 = vmul.f32 %v444, %v444
        %v567 = vmul.f32 %v445, %v445
        %v576 = vrot.slane %v561, 7
        %v577 = vsel %vm467, %v576, %v560
        %v578 = vrot.slane %v562, 6
        %v579 = vsel %vm470, %v578, %v577
        %v580 = vrot.slane %v563, 5
        %v581 = vsel %vm473, %v580, %v579
        %v582 = vrot.slane %v564, 4
        %v583 = vsel %vm476, %v582, %v581
        %v584 = vrot.slane %v565, 3
        %v585 = vsel %vm479, %v584, %v583
        %v586 = vrot.slane %v566, 2
        %v587 = vsel %vm482, %v586, %v585
        %v588 = vrot.slane %v567, 1
        %v589 = vsel %vm485, %v588, %v587
        %v591 = vsel %vm487, %v589, 0.0
        %592 = vadd.xlane.f32.xlu0 %v591
        %v593 = vpop.xlane.xlu0 %592
        %v594 = vmul.f32 %v593, 0.5
        %v595 = vsub.f32 %v557, %v594
        %v596 = vmul.f32 %v595, 1.442695
        %v597 = vpow.pop %v596
        %v598 = vsel %vm437, %v597, 0.0
        %v599 = vld [vmem:[#allocation2] sm:$0xff]
        %v600 = vld [vmem:[#allocation2 + $0x8] sm:$0xff]
        %v601 = vld [vmem:[#allocation2 + $0x10] sm:$0xff]
        %v602 = vld [vmem:[#allocation2 + $0x18] sm:$0xff]
        %v603 = vld [vmem:[#allocation2 + $0x20] sm:$0xff]
        %v604 = vld [vmem:[#allocation2 + $0x28] sm:$0xff]
        %v605 = vld [vmem:[#allocation2 + $0x30] sm:$0xff]
        %v606 = vld [vmem:[#allocation2 + $0x38] sm:$0xff]
        %v607 = vld [vmem:[#allocation2 + $0x40] sm:$0xff]
        %v608 = vld [vmem:[#allocation2 + $0x48] sm:$0xff]
        %v609 = vld [vmem:[#allocation2 + $0x50] sm:$0xff]
        %v610 = vld [vmem:[#allocation2 + $0x58] sm:$0xff]
        %v611 = vld [vmem:[#allocation2 + $0x60] sm:$0xff]
        %v612 = vld [vmem:[#allocation2 + $0x68] sm:$0xff]
        %v613 = vld [vmem:[#allocation2 + $0x70] sm:$0xff]
        %v614 = vld [vmem:[#allocation2 + $0x78] sm:$0xff]
        %615 = vxpose.xlu0.b32.start [1/16] %v598, 128
        %616 = vxpose.xlu0.b32.cont [2/16] 0.0, 128
        %617 = vxpose.xlu0.b32.cont [3/16] 0.0, 128
        %618 = vxpose.xlu0.b32.cont [4/16] 0.0, 128
        %619 = vxpose.xlu0.b32.cont [5/16] 0.0, 128
        %620 = vxpose.xlu0.b32.cont [6/16] 0.0, 128
        %621 = vxpose.xlu0.b32.cont [7/16] 0.0, 128
        %622 = vxpose.xlu0.b32.cont [8/16] 0.0, 128
        %623 = vxpose.xlu0.b32.cont [9/16] 0.0, 128
        %624 = vxpose.xlu0.b32.cont [10/16] 0.0, 128
        %625 = vxpose.xlu0.b32.cont [11/16] 0.0, 128
        %626 = vxpose.xlu0.b32.cont [12/16] 0.0, 128
        %627 = vxpose.xlu0.b32.cont [13/16] 0.0, 128
        %628 = vxpose.xlu0.b32.cont [14/16] 0.0, 128
        %629 = vxpose.xlu0.b32.cont [15/16] 0.0, 128
        %630 = vxpose.xlu0.b32.end [16/16] 0.0, 128
        %v631 = vpop.trf.xlu0
        %v632 = vpop.trf.xlu0
        %v633 = vpop.trf.xlu0
        %v634 = vpop.trf.xlu0
        %v635 = vpop.trf.xlu0
        %v636 = vpop.trf.xlu0
        %v637 = vpop.trf.xlu0
        %v638 = vpop.trf.xlu0
        %v639 = vpop.trf.xlu0
        %v640 = vpop.trf.xlu0
        %v641 = vpop.trf.xlu0
        %v642 = vpop.trf.xlu0
        %v643 = vpop.trf.xlu0
        %v644 = vpop.trf.xlu0
        %v645 = vpop.trf.xlu0
        %v646 = vpop.trf.xlu0
        %v655 = vrot.slane %v447, 7
        %v656 = vsel %vm467, %v655, %v446
        %v657 = vrot.slane %v448, 6
        %v658 = vsel %vm470, %v657, %v656
        %v659 = vrot.slane %v449, 5
        %v660 = vsel %vm473, %v659, %v658
        %v661 = vrot.slane %v450, 4
        %v662 = vsel %vm476, %v661, %v660
        %v663 = vrot.slane %v451, 3
        %v664 = vsel %vm479, %v663, %v662
        %v665 = vrot.slane %v452, 2
        %v666 = vsel %vm482, %v665, %v664
        %v667 = vrot.slane %v453, 1
        %v668 = vsel %vm485, %v667, %v666
        %vm670 = vcmask 64512
        %v672 = vsel %vm670, %v631, 0
        %v675 = vsel %vm670, %v632, 0
        %v678 = vsel %vm670, %v633, 0
        %v681 = vsel %vm670, %v634, 0
        %v684 = vsel %vm670, %v635, 0
        %v687 = vsel %vm670, %v636, 0
        %v690 = vsel %vm670, %v637, 0
        %v693 = vsel %vm670, %v638, 0
        %v696 = vsel %vm670, %v639, 0
        %v699 = vsel %vm670, %v640, 0
        %v702 = vsel %vm670, %v641, 0
        %v705 = vsel %vm670, %v642, 0
        %v708 = vsel %vm670, %v643, 0
        %v711 = vsel %vm670, %v644, 0
        %v714 = vsel %vm670, %v645, 0
        %v717 = vsel %vm670, %v646, 0
        %719 = vmatprep.subr.mxu0 0.0
        %720 = vmatpush1.msra.mxu0 %v668
        %721 = vmatprep.subr.mxu0 0.0
        %722 = vmatpush1.msra.mxu0 0.0
        %723 = vmatprep.subr.mxu0 0.0
        %724 = vmatpush1.msra.mxu0 0.0
        %725 = vmatprep.subr.mxu0 0.0
        %726 = vmatpush1.msra.mxu0 0.0
        %727 = vmatprep.subr.mxu0 0.0
        %728 = vmatpush1.msra.mxu0 0.0
        %729 = vmatprep.subr.mxu0 0.0
        %730 = vmatpush1.msra.mxu0 0.0
        %731 = vmatprep.subr.mxu0 0.0
        %732 = vmatpush1.msra.mxu0 0.0
        %733 = vmatprep.subr.mxu0 0.0
        %734 = vmatpush1.msra.mxu0 0.0
        %735 = vmatprep.subr.mxu0 0.0
        %736 = vmatpush1.msra.mxu0 0.0
        %737 = vmatprep.subr.mxu0 0.0
        %738 = vmatpush1.msra.mxu0 0.0
        %739 = vmatprep.subr.mxu0 0.0
        %740 = vmatpush1.msra.mxu0 0.0
        %741 = vmatprep.subr.mxu0 0.0
        %742 = vmatpush1.msra.mxu0 0.0
        %743 = vmatprep.subr.mxu0 0.0
        %744 = vmatpush1.msra.mxu0 0.0
        %745 = vmatprep.subr.mxu0 0.0
        %746 = vmatpush1.msra.mxu0 0.0
        %747 = vmatprep.subr.mxu0 0.0
        %748 = vmatpush1.msra.mxu0 0.0
        %749 = vmatprep.subr.mxu0 0.0
        %750 = vmatpush1.msra.mxu0 0.0
        %751 = vmatprep.subr.mxu0 0.0
        %752 = vmatpush1.msra.mxu0 0.0
        %753 = vmatprep.subr.mxu0 0.0
        %754 = vmatpush1.msra.mxu0 0.0
        %755 = vmatprep.subr.mxu0 0.0
        %756 = vmatpush1.msra.mxu0 0.0
        %757 = vmatprep.subr.mxu0 0.0
        %758 = vmatpush1.msra.mxu0 0.0
        %759 = vmatprep.subr.mxu0 0.0
        %760 = vmatpush1.msra.mxu0 0.0
        %761 = vmatprep.subr.mxu0 0.0
        %762 = vmatpush1.msra.mxu0 0.0
        %763 = vmatprep.subr.mxu0 0.0
        %764 = vmatpush1.msra.mxu0 0.0
        %765 = vmatprep.subr.mxu0 0.0
        %766 = vmatpush1.msra.mxu0 0.0
        %767 = vmatprep.subr.mxu0 0.0
        %768 = vmatpush1.msra.mxu0 0.0
        %769 = vmatprep.subr.mxu0 0.0
        %770 = vmatpush1.msra.mxu0 0.0
        %771 = vmatprep.subr.mxu0 0.0
        %772 = vmatpush1.msra.mxu0 0.0
        %773 = vmatprep.subr.mxu0 0.0
        %774 = vmatpush1.msra.mxu0 0.0
        %775 = vmatprep.subr.mxu0 0.0
        %776 = vmatpush1.msra.mxu0 0.0
        %777 = vmatprep.subr.mxu0 0.0
        %778 = vmatpush1.msra.mxu0 0.0
        %779 = vmatprep.subr.mxu0 0.0
        %780 = vmatpush1.msra.mxu0 0.0
        %781 = vmatprep.subr.mxu0 0.0
        %782 = vmatpush1.msra.mxu0 0.0
        %783 = vmatprep.mubr.f32.mxu0 0.0
        %784 = vmatmul.mubr.f32.gmra.mrb[0].mxu0 %v672
        %v785 = vpop.f32.mrb[0].mxu0
        %v786 = vadd.f32 0.0, %v785
        %v787 = vpop.f32.mrb[0].mxu0
        %788 = vmatprep.mubr.f32.mxu0 0.0
        %789 = vmatmul.mubr.f32.gmra.mrb[0].mxu0 %v675
        %v790 = vpop.f32.mrb[0].mxu0
        %v791 = vadd.f32 0.0, %v790
        %v792 = vpop.f32.mrb[0].mxu0
        %793 = vmatprep.mubr.f32.mxu0 0.0
        %794 = vmatmul.mubr.f32.gmra.mrb[0].mxu0 %v678
        %v795 = vpop.f32.mrb[0].mxu0
        %v796 = vadd.f32 0.0, %v795
        %v797 = vpop.f32.mrb[0].mxu0
        %798 = vmatprep.mubr.f32.mxu0 0.0
        %799 = vmatmul.mubr.f32.gmra.mrb[0].mxu0 %v681
        %v800 = vpop.f32.mrb[0].mxu0
        %v801 = vadd.f32 0.0, %v800
        %v802 = vpop.f32.mrb[0].mxu0
        %803 = vmatprep.mubr.f32.mxu0 0.0
        %804 = vmatmul.mubr.f32.gmra.mrb[0].mxu0 %v684
        %v805 = vpop.f32.mrb[0].mxu0
        %v806 = vadd.f32 0.0, %v805
        %v807 = vpop.f32.mrb[0].mxu0
        %808 = vmatprep.mubr.f32.mxu0 0.0
        %809 = vmatmul.mubr.f32.gmra.mrb[0].mxu0 %v687
        %v810 = vpop.f32.mrb[0].mxu0
        %v811 = vadd.f32 0.0, %v810
        %v812 = vpop.f32.mrb[0].mxu0
        %813 = vmatprep.mubr.f32.mxu0 0.0
        %814 = vmatmul.mubr.f32.gmra.mrb[0].mxu0 %v690
        %v815 = vpop.f32.mrb[0].mxu0
        %v816 = vadd.f32 0.0, %v815
        %v817 = vpop.f32.mrb[0].mxu0
        %818 = vmatprep.mubr.f32.mxu0 0.0
        %819 = vmatmul.mubr.f32.gmra.mrb[0].mxu0 %v693
        %v820 = vpop.f32.mrb[0].mxu0
        %v821 = vadd.f32 0.0, %v820
        %v822 = vpop.f32.mrb[0].mxu0
        %823 = vmatprep.mubr.f32.mxu0 0.0
        %824 = vmatmul.mubr.f32.gmra.mrb[0].mxu0 %v696
        %v825 = vpop.f32.mrb[0].mxu0
        %v826 = vadd.f32 0.0, %v825
        %v827 = vpop.f32.mrb[0].mxu0
        %828 = vmatprep.mubr.f32.mxu0 0.0
        %829 = vmatmul.mubr.f32.gmra.mrb[0].mxu0 %v699
        %v830 = vpop.f32.mrb[0].mxu0
        %v831 = vadd.f32 0.0, %v830
        %v832 = vpop.f32.mrb[0].mxu0
        %833 = vmatprep.mubr.f32.mxu0 0.0
        %834 = vmatmul.mubr.f32.gmra.mrb[0].mxu0 %v702
        %v835 = vpop.f32.mrb[0].mxu0
        %v836 = vadd.f32 0.0, %v835
        %v837 = vpop.f32.mrb[0].mxu0
        %838 = vmatprep.mubr.f32.mxu0 0.0
        %839 = vmatmul.mubr.f32.gmra.mrb[0].mxu0 %v705
        %v840 = vpop.f32.mrb[0].mxu0
        %v841 = vadd.f32 0.0, %v840
        %v842 = vpop.f32.mrb[0].mxu0
        %843 = vmatprep.mubr.f32.mxu0 0.0
        %844 = vmatmul.mubr.f32.gmra.mrb[0].mxu0 %v708
        %v845 = vpop.f32.mrb[0].mxu0
        %v846 = vadd.f32 0.0, %v845
        %v847 = vpop.f32.mrb[0].mxu0
        %848 = vmatprep.mubr.f32.mxu0 0.0
        %849 = vmatmul.mubr.f32.gmra.mrb[0].mxu0 %v711
        %v850 = vpop.f32.mrb[0].mxu0
        %v851 = vadd.f32 0.0, %v850
        %v852 = vpop.f32.mrb[0].mxu0
        %853 = vmatprep.mubr.f32.mxu0 0.0
        %854 = vmatmul.mubr.f32.gmra.mrb[0].mxu0 %v714
        %v855 = vpop.f32.mrb[0].mxu0
        %v856 = vadd.f32 0.0, %v855
        %v857 = vpop.f32.mrb[0].mxu0
        %858 = vmatprep.mubr.f32.mxu0 0.0
        %859 = vmatmul.mubr.f32.gmra.mrb[0].mxu0 %v717
        %v860 = vpop.f32.mrb[0].mxu0
        %v861 = vadd.f32 0.0, %v860
        %v862 = vpop.f32.mrb[0].mxu0
        %863 = vdwg.mxu0
        %v864 = vadd.f32 %v599, %v786
        %v865 = vadd.f32 %v600, %v791
        %v866 = vadd.f32 %v601, %v796
        %v867 = vadd.f32 %v602, %v801
        %v868 = vadd.f32 %v603, %v806
        %v869 = vadd.f32 %v604, %v811
        %v870 = vadd.f32 %v605, %v816
        %v871 = vadd.f32 %v606, %v821
        %v872 = vadd.f32 %v607, %v826
        %v873 = vadd.f32 %v608, %v831
        %v874 = vadd.f32 %v609, %v836
        %v875 = vadd.f32 %v610, %v841
        %v876 = vadd.f32 %v611, %v846
        %v877 = vadd.f32 %v612, %v851
        %v878 = vadd.f32 %v613, %v856
        %v879 = vadd.f32 %v614, %v861
        %880 = vst.msk [vmem:[#allocation2] sm:$0xff] %vm487, %v864
        %881 = vst.msk [vmem:[#allocation2 + $0x8] sm:$0xff] %vm487, %v865
        %882 = vst.msk [vmem:[#allocation2 + $0x10] sm:$0xff] %vm487, %v866
        %883 = vst.msk [vmem:[#allocation2 + $0x18] sm:$0xff] %vm487, %v867
        %884 = vst.msk [vmem:[#allocation2 + $0x20] sm:$0xff] %vm487, %v868
        %885 = vst.msk [vmem:[#allocation2 + $0x28] sm:$0xff] %vm487, %v869
        %886 = vst.msk [vmem:[#allocation2 + $0x30] sm:$0xff] %vm487, %v870
        %887 = vst.msk [vmem:[#allocation2 + $0x38] sm:$0xff] %vm487, %v871
        %888 = vst.msk [vmem:[#allocation2 + $0x40] sm:$0xff] %vm487, %v872
        %889 = vst.msk [vmem:[#allocation2 + $0x48] sm:$0xff] %vm487, %v873
        %890 = vst.msk [vmem:[#allocation2 + $0x50] sm:$0xff] %vm487, %v874
        %891 = vst.msk [vmem:[#allocation2 + $0x58] sm:$0xff] %vm487, %v875
        %892 = vst.msk [vmem:[#allocation2 + $0x60] sm:$0xff] %vm487, %v876
        %893 = vst.msk [vmem:[#allocation2 + $0x68] sm:$0xff] %vm487, %v877
        %894 = vst.msk [vmem:[#allocation2 + $0x70] sm:$0xff] %vm487, %v878
        %895 = vst.msk [vmem:[#allocation2 + $0x78] sm:$0xff] %vm487, %v879
        %v896 = vld [vmem:[#allocation3] sm:$0x1]
        %v897 = vrot.slane %v598, 4
        %v898 = vadd.f32 %v598, %v897
        %v899 = vrot.slane %v898, 2
        %v900 = vadd.f32 %v898, %v899
        %v901 = vrot.slane %v900, 1
        %v902 = vadd.f32 %v900, %v901
        %v903 = vadd.f32 %v896, %v902
        %904 = vst [vmem:[#allocation3] sm:$0x1] %v903
        %v905 = vld [vmem:[%s295 + $0x1] sm:$0x1]
        %v906 = vld [vmem:[%s295 + $0x5] sm:$0x1]
        %v907 = vld [vmem:[%s295 + $0x9] sm:$0x1]
        %v908 = vld [vmem:[%s295 + $0xd] sm:$0x1]
        %v909 = vld [vmem:[%s295 + $0x11] sm:$0x1]
        %v910 = vld [vmem:[%s295 + $0x15] sm:$0x1]
        %v911 = vld [vmem:[%s295 + $0x19] sm:$0x1]
        %v912 = vld [vmem:[%s295 + $0x1d] sm:$0x1]
        %v913 = vld [vmem:[%s304 + $0x1] sm:$0x1]
        %v914 = vld [vmem:[%s304 + $0x5] sm:$0x1]
        %v915 = vld [vmem:[%s304 + $0x9] sm:$0x1]
        %v916 = vld [vmem:[%s304 + $0xd] sm:$0x1]
        %v917 = vld [vmem:[%s304 + $0x11] sm:$0x1]
        %v918 = vld [vmem:[%s304 + $0x15] sm:$0x1]
        %v919 = vld [vmem:[%s304 + $0x19] sm:$0x1]
        %v920 = vld [vmem:[%s304 + $0x1d] sm:$0x1]
        %s921 = scalar_lea.vmem %s313, 32 [#allocation10]
        %v922 = vld [vmem:[%s921] sm:$0xff]
        %v923 = vld [vmem:[%s921 + $0x8] sm:$0xff]
        %v924 = vld [vmem:[%s921 + $0x10] sm:$0xff]
        %v925 = vld [vmem:[%s921 + $0x18] sm:$0xff]
        %v934 = vrot.slane %v906, 7
        %v935 = vsel %vm467, %v934, %v905
        %v936 = vrot.slane %v907, 6
        %v937 = vsel %vm470, %v936, %v935
        %v938 = vrot.slane %v908, 5
        %v939 = vsel %vm473, %v938, %v937
        %v940 = vrot.slane %v909, 4
        %v941 = vsel %vm476, %v940, %v939
        %v942 = vrot.slane %v910, 3
        %v943 = vsel %vm479, %v942, %v941
        %v944 = vrot.slane %v911, 2
        %v945 = vsel %vm482, %v944, %v943
        %v946 = vrot.slane %v912, 1
        %v947 = vsel %vm485, %v946, %v945
        %v948 = vsel %vm487, %v947, 0
        %950 = vmatprep.subr.mxu0 0.0
        %951 = vmatpush1.msra.mxu0 %v922
        %952 = vmatprep.subr.mxu0 0.0
        %953 = vmatpush1.msra.mxu0 %v923
        %954 = vmatprep.subr.mxu0 0.0
        %955 = vmatpush1.msra.mxu0 %v924
        %956 = vmatprep.subr.mxu0 0.0
        %957 = vmatpush1.msra.mxu0 %v925
        %958 = vmatprep.subr.mxu0 0.0
        %959 = vmatpush1.msra.mxu0 0.0
        %960 = vmatprep.subr.mxu0 0.0
        %961 = vmatpush1.msra.mxu0 0.0
        %962 = vmatprep.subr.mxu0 0.0
        %963 = vmatpush1.msra.mxu0 0.0
        %964 = vmatprep.subr.mxu0 0.0
        %965 = vmatpush1.msra.mxu0 0.0
        %966 = vmatprep.subr.mxu0 0.0
        %967 = vmatpush1.msra.mxu0 0.0
        %968 = vmatprep.subr.mxu0 0.0
        %969 = vmatpush1.msra.mxu0 0.0
        %970 = vmatprep.subr.mxu0 0.0
        %971 = vmatpush1.msra.mxu0 0.0
        %972 = vmatprep.subr.mxu0 0.0
        %973 = vmatpush1.msra.mxu0 0.0
        %974 = vmatprep.subr.mxu0 0.0
        %975 = vmatpush1.msra.mxu0 0.0
        %976 = vmatprep.subr.mxu0 0.0
        %977 = vmatpush1.msra.mxu0 0.0
        %978 = vmatprep.subr.mxu0 0.0
        %979 = vmatpush1.msra.mxu0 0.0
        %980 = vmatprep.subr.mxu0 0.0
        %981 = vmatpush1.msra.mxu0 0.0
        %982 = vmatprep.subr.mxu0 0.0
        %983 = vmatpush1.msra.mxu0 0.0
        %984 = vmatprep.subr.mxu0 0.0
        %985 = vmatpush1.msra.mxu0 0.0
        %986 = vmatprep.subr.mxu0 0.0
        %987 = vmatpush1.msra.mxu0 0.0
        %988 = vmatprep.subr.mxu0 0.0
        %989 = vmatpush1.msra.mxu0 0.0
        %990 = vmatprep.subr.mxu0 0.0
        %991 = vmatpush1.msra.mxu0 0.0
        %992 = vmatprep.subr.mxu0 0.0
        %993 = vmatpush1.msra.mxu0 0.0
        %994 = vmatprep.subr.mxu0 0.0
        %995 = vmatpush1.msra.mxu0 0.0
        %996 = vmatprep.subr.mxu0 0.0
        %997 = vmatpush1.msra.mxu0 0.0
        %998 = vmatprep.subr.mxu0 0.0
        %999 = vmatpush1.msra.mxu0 0.0
        %1000 = vmatprep.subr.mxu0 0.0
        %1001 = vmatpush1.msra.mxu0 0.0
        %1002 = vmatprep.subr.mxu0 0.0
        %1003 = vmatpush1.msra.mxu0 0.0
        %1004 = vmatprep.subr.mxu0 0.0
        %1005 = vmatpush1.msra.mxu0 0.0
        %1006 = vmatprep.subr.mxu0 0.0
        %1007 = vmatpush1.msra.mxu0 0.0
        %1008 = vmatprep.subr.mxu0 0.0
        %1009 = vmatpush1.msra.mxu0 0.0
        %1010 = vmatprep.subr.mxu0 0.0
        %1011 = vmatpush1.msra.mxu0 0.0
        %1012 = vmatprep.subr.mxu0 0.0
        %1013 = vmatpush1.msra.mxu0 0.0
        %1014 = vmatprep.mubr.f32.mxu0 0.0
        %1015 = vmatmul.mubr.f32.gmra.mrb[0].mxu0 %v948
        %v1016 = vpop.f32.mrb[0].mxu0
        %v1017 = vadd.f32 0.0, %v1016
        %v1018 = vpop.f32.mrb[0].mxu0
        %1019 = vdwg.mxu0
        %v1020 = vmul.f32 %v905, %v905
        %v1021 = vmul.f32 %v906, %v906
        %v1022 = vmul.f32 %v907, %v907
        %v1023 = vmul.f32 %v908, %v908
        %v1024 = vmul.f32 %v909, %v909
        %v1025 = vmul.f32 %v910, %v910
        %v1026 = vmul.f32 %v911, %v911
        %v1027 = vmul.f32 %v912, %v912
        %v1036 = vrot.slane %v1021, 7
        %v1037 = vsel %vm467, %v1036, %v1020
        %v1038 = vrot.slane %v1022, 6
        %v1039 = vsel %vm470, %v1038, %v1037
        %v1040 = vrot.slane %v1023, 5
        %v1041 = vsel %vm473, %v1040, %v1039
        %v1042 = vrot.slane %v1024, 4
        %v1043 = vsel %vm476, %v1042, %v1041
        %v1044 = vrot.slane %v1025, 3
        %v1045 = vsel %vm479, %v1044, %v1043
        %v1046 = vrot.slane %v1026, 2
        %v1047 = vsel %vm482, %v1046, %v1045
        %v1048 = vrot.slane %v1027, 1
        %v1049 = vsel %vm485, %v1048, %v1047
        %v1051 = vsel %vm487, %v1049, 0.0
        %1052 = vadd.xlane.f32.xlu0 %v1051
        %v1053 = vpop.xlane.xlu0 %1052
        %v1054 = vmul.f32 %v1053, 0.5
        %v1055 = vsub.f32 %v1017, %v1054
        %v1056 = vmul.f32 %v1055, 1.442695
        %v1057 = vpow.pop %v1056
        %v1058 = vsel %vm437, %v1057, 0.0
        %s1059 = scalar_lea.vmem [#allocation2], 128
        %v1060 = vld [vmem:[%s1059] sm:$0xff]
        %v1061 = vld [vmem:[%s1059 + $0x8] sm:$0xff]
        %v1062 = vld [vmem:[%s1059 + $0x10] sm:$0xff]
        %v1063 = vld [vmem:[%s1059 + $0x18] sm:$0xff]
        %v1064 = vld [vmem:[%s1059 + $0x20] sm:$0xff]
        %v1065 = vld [vmem:[%s1059 + $0x28] sm:$0xff]
        %v1066 = vld [vmem:[%s1059 + $0x30] sm:$0xff]
        %v1067 = vld [vmem:[%s1059 + $0x38] sm:$0xff]
        %v1068 = vld [vmem:[%s1059 + $0x40] sm:$0xff]
        %v1069 = vld [vmem:[%s1059 + $0x48] sm:$0xff]
        %v1070 = vld [vmem:[%s1059 + $0x50] sm:$0xff]
        %v1071 = vld [vmem:[%s1059 + $0x58] sm:$0xff]
        %v1072 = vld [vmem:[%s1059 + $0x60] sm:$0xff]
        %v1073 = vld [vmem:[%s1059 + $0x68] sm:$0xff]
        %v1074 = vld [vmem:[%s1059 + $0x70] sm:$0xff]
        %v1075 = vld [vmem:[%s1059 + $0x78] sm:$0xff]
        %1076 = vxpose.xlu0.b32.start [1/16] %v1058, 128
        %1077 = vxpose.xlu0.b32.cont [2/16] 0.0, 128
        %1078 = vxpose.xlu0.b32.cont [3/16] 0.0, 128
        %1079 = vxpose.xlu0.b32.cont [4/16] 0.0, 128
        %1080 = vxpose.xlu0.b32.cont [5/16] 0.0, 128
        %1081 = vxpose.xlu0.b32.cont [6/16] 0.0, 128
        %1082 = vxpose.xlu0.b32.cont [7/16] 0.0, 128
        %1083 = vxpose.xlu0.b32.cont [8/16] 0.0, 128
        %1084 = vxpose.xlu0.b32.cont [9/16] 0.0, 128
        %1085 = vxpose.xlu0.b32.cont [10/16] 0.0, 128
        %1086 = vxpose.xlu0.b32.cont [11/16] 0.0, 128
        %1087 = vxpose.xlu0.b32.cont [12/16] 0.0, 128
        %1088 = vxpose.xlu0.b32.cont [13/16] 0.0, 128
        %1089 = vxpose.xlu0.b32.cont [14/16] 0.0, 128
        %1090 = vxpose.xlu0.b32.cont [15/16] 0.0, 128
        %1091 = vxpose.xlu0.b32.end [16/16] 0.0, 128
        %v1092 = vpop.trf.xlu0
        %v1093 = vpop.trf.xlu0
        %v1094 = vpop.trf.xlu0
        %v1095 = vpop.trf.xlu0
        %v1096 = vpop.trf.xlu0
        %v1097 = vpop.trf.xlu0
        %v1098 = vpop.trf.xlu0
        %v1099 = vpop.trf.xlu0
        %v1100 = vpop.trf.xlu0
        %v1101 = vpop.trf.xlu0
        %v1102 = vpop.trf.xlu0
        %v1103 = vpop.trf.xlu0
        %v1104 = vpop.trf.xlu0
        %v1105 = vpop.trf.xlu0
        %v1106 = vpop.trf.xlu0
        %v1107 = vpop.trf.xlu0
        %v1116 = vrot.slane %v914, 7
        %v1117 = vsel %vm467, %v1116, %v913
        %v1118 = vrot.slane %v915, 6
        %v1119 = vsel %vm470, %v1118, %v1117
        %v1120 = vrot.slane %v916, 5
        %v1121 = vsel %vm473, %v1120, %v1119
        %v1122 = vrot.slane %v917, 4
        %v1123 = vsel %vm476, %v1122, %v1121
        %v1124 = vrot.slane %v918, 3
        %v1125 = vsel %vm479, %v1124, %v1123
        %v1126 = vrot.slane %v919, 2
        %v1127 = vsel %vm482, %v1126, %v1125
        %v1128 = vrot.slane %v920, 1
        %v1129 = vsel %vm485, %v1128, %v1127
        %v1132 = vsel %vm670, %v1092, 0
        %v1135 = vsel %vm670, %v1093, 0
        %v1138 = vsel %vm670, %v1094, 0
        %v1141 = vsel %vm670, %v1095, 0
        %v1144 = vsel %vm670, %v1096, 0
        %v1147 = vsel %vm670, %v1097, 0
        %v1150 = vsel %vm670, %v1098, 0
        %v1153 = vsel %vm670, %v1099, 0
        %v1156 = vsel %vm670, %v1100, 0
        %v1159 = vsel %vm670, %v1101, 0
        %v1162 = vsel %vm670, %v1102, 0
        %v1165 = vsel %vm670, %v1103, 0
        %v1168 = vsel %vm670, %v1104, 0
        %v1171 = vsel %vm670, %v1105, 0
        %v1174 = vsel %vm670, %v1106, 0
        %v1177 = vsel %vm670, %v1107, 0
        %1179 = vmatprep.subr.mxu0 0.0
        %1180 = vmatpush1.msra.mxu0 %v1129
        %1181 = vmatprep.subr.mxu0 0.0
        %1182 = vmatpush1.msra.mxu0 0.0
        %1183 = vmatprep.subr.mxu0 0.0
        %1184 = vmatpush1.msra.mxu0 0.0
        %1185 = vmatprep.subr.mxu0 0.0
        %1186 = vmatpush1.msra.mxu0 0.0
        %1187 = vmatprep.subr.mxu0 0.0
        %1188 = vmatpush1.msra.mxu0 0.0
        %1189 = vmatprep.subr.mxu0 0.0
        %1190 = vmatpush1.msra.mxu0 0.0
        %1191 = vmatprep.subr.mxu0 0.0
        %1192 = vmatpush1.msra.mxu0 0.0
        %1193 = vmatprep.subr.mxu0 0.0
        %1194 = vmatpush1.msra.mxu0 0.0
        %1195 = vmatprep.subr.mxu0 0.0
        %1196 = vmatpush1.msra.mxu0 0.0
        %1197 = vmatprep.subr.mxu0 0.0
        %1198 = vmatpush1.msra.mxu0 0.0
        %1199 = vmatprep.subr.mxu0 0.0
        %1200 = vmatpush1.msra.mxu0 0.0
        %1201 = vmatprep.subr.mxu0 0.0
        %1202 = vmatpush1.msra.mxu0 0.0
        %1203 = vmatprep.subr.mxu0 0.0
        %1204 = vmatpush1.msra.mxu0 0.0
        %1205 = vmatprep.subr.mxu0 0.0
        %1206 = vmatpush1.msra.mxu0 0.0
        %1207 = vmatprep.subr.mxu0 0.0
        %1208 = vmatpush1.msra.mxu0 0.0
        %1209 = vmatprep.subr.mxu0 0.0
        %1210 = vmatpush1.msra.mxu0 0.0
        %1211 = vmatprep.subr.mxu0 0.0
        %1212 = vmatpush1.msra.mxu0 0.0
        %1213 = vmatprep.subr.mxu0 0.0
        %1214 = vmatpush1.msra.mxu0 0.0
        %1215 = vmatprep.subr.mxu0 0.0
        %1216 = vmatpush1.msra.mxu0 0.0
        %1217 = vmatprep.subr.mxu0 0.0
        %1218 = vmatpush1.msra.mxu0 0.0
        %1219 = vmatprep.subr.mxu0 0.0
        %1220 = vmatpush1.msra.mxu0 0.0
        %1221 = vmatprep.subr.mxu0 0.0
        %1222 = vmatpush1.msra.mxu0 0.0
        %1223 = vmatprep.subr.mxu0 0.0
        %1224 = vmatpush1.msra.mxu0 0.0
        %1225 = vmatprep.subr.mxu0 0.0
        %1226 = vmatpush1.msra.mxu0 0.0
        %1227 = vmatprep.subr.mxu0 0.0
        %1228 = vmatpush1.msra.mxu0 0.0
        %1229 = vmatprep.subr.mxu0 0.0
        %1230 = vmatpush1.msra.mxu0 0.0
        %1231 = vmatprep.subr.mxu0 0.0
        %1232 = vmatpush1.msra.mxu0 0.0
        %1233 = vmatprep.subr.mxu0 0.0
        %1234 = vmatpush1.msra.mxu0 0.0
        %1235 = vmatprep.subr.mxu0 0.0
        %1236 = vmatpush1.msra.mxu0 0.0
        %1237 = vmatprep.subr.mxu0 0.0
        %1238 = vmatpush1.msra.mxu0 0.0
        %1239 = vmatprep.subr.mxu0 0.0
        %1240 = vmatpush1.msra.mxu0 0.0
        %1241 = vmatprep.subr.mxu0 0.0
        %1242 = vmatpush1.msra.mxu0 0.0
        %1243 = vmatprep.mubr.f32.mxu0 0.0
        %1244 = vmatmul.mubr.f32.gmra.mrb[0].mxu0 %v1132
        %v1245 = vpop.f32.mrb[0].mxu0
        %v1246 = vadd.f32 0.0, %v1245
        %v1247 = vpop.f32.mrb[0].mxu0
        %1248 = vmatprep.mubr.f32.mxu0 0.0
        %1249 = vmatmul.mubr.f32.gmra.mrb[0].mxu0 %v1135
        %v1250 = vpop.f32.mrb[0].mxu0
        %v1251 = vadd.f32 0.0, %v1250
        %v1252 = vpop.f32.mrb[0].mxu0
        %1253 = vmatprep.mubr.f32.mxu0 0.0
        %1254 = vmatmul.mubr.f32.gmra.mrb[0].mxu0 %v1138
        %v1255 = vpop.f32.mrb[0].mxu0
        %v1256 = vadd.f32 0.0, %v1255
        %v1257 = vpop.f32.mrb[0].mxu0
        %1258 = vmatprep.mubr.f32.mxu0 0.0
        %1259 = vmatmul.mubr.f32.gmra.mrb[0].mxu0 %v1141
        %v1260 = vpop.f32.mrb[0].mxu0
        %v1261 = vadd.f32 0.0, %v1260
        %v1262 = vpop.f32.mrb[0].mxu0
        %1263 = vmatprep.mubr.f32.mxu0 0.0
        %1264 = vmatmul.mubr.f32.gmra.mrb[0].mxu0 %v1144
        %v1265 = vpop.f32.mrb[0].mxu0
        %v1266 = vadd.f32 0.0, %v1265
        %v1267 = vpop.f32.mrb[0].mxu0
        %1268 = vmatprep.mubr.f32.mxu0 0.0
        %1269 = vmatmul.mubr.f32.gmra.mrb[0].mxu0 %v1147
        %v1270 = vpop.f32.mrb[0].mxu0
        %v1271 = vadd.f32 0.0, %v1270
        %v1272 = vpop.f32.mrb[0].mxu0
        %1273 = vmatprep.mubr.f32.mxu0 0.0
        %1274 = vmatmul.mubr.f32.gmra.mrb[0].mxu0 %v1150
        %v1275 = vpop.f32.mrb[0].mxu0
        %v1276 = vadd.f32 0.0, %v1275
        %v1277 = vpop.f32.mrb[0].mxu0
        %1278 = vmatprep.mubr.f32.mxu0 0.0
        %1279 = vmatmul.mubr.f32.gmra.mrb[0].mxu0 %v1153
        %v1280 = vpop.f32.mrb[0].mxu0
        %v1281 = vadd.f32 0.0, %v1280
        %v1282 = vpop.f32.mrb[0].mxu0
        %1283 = vmatprep.mubr.f32.mxu0 0.0
        %1284 = vmatmul.mubr.f32.gmra.mrb[0].mxu0 %v1156
        %v1285 = vpop.f32.mrb[0].mxu0
        %v1286 = vadd.f32 0.0, %v1285
        %v1287 = vpop.f32.mrb[0].mxu0
        %1288 = vmatprep.mubr.f32.mxu0 0.0
        %1289 = vmatmul.mubr.f32.gmra.mrb[0].mxu0 %v1159
        %v1290 = vpop.f32.mrb[0].mxu0
        %v1291 = vadd.f32 0.0, %v1290
        %v1292 = vpop.f32.mrb[0].mxu0
        %1293 = vmatprep.mubr.f32.mxu0 0.0
        %1294 = vmatmul.mubr.f32.gmra.mrb[0].mxu0 %v1162
        %v1295 = vpop.f32.mrb[0].mxu0
        %v1296 = vadd.f32 0.0, %v1295
        %v1297 = vpop.f32.mrb[0].mxu0
        %1298 = vmatprep.mubr.f32.mxu0 0.0
        %1299 = vmatmul.mubr.f32.gmra.mrb[0].mxu0 %v1165
        %v1300 = vpop.f32.mrb[0].mxu0
        %v1301 = vadd.f32 0.0, %v1300
        %v1302 = vpop.f32.mrb[0].mxu0
        %1303 = vmatprep.mubr.f32.mxu0 0.0
        %1304 = vmatmul.mubr.f32.gmra.mrb[0].mxu0 %v1168
        %v1305 = vpop.f32.mrb[0].mxu0
        %v1306 = vadd.f32 0.0, %v1305
        %v1307 = vpop.f32.mrb[0].mxu0
        %1308 = vmatprep.mubr.f32.mxu0 0.0
        %1309 = vmatmul.mubr.f32.gmra.mrb[0].mxu0 %v1171
        %v1310 = vpop.f32.mrb[0].mxu0
        %v1311 = vadd.f32 0.0, %v1310
        %v1312 = vpop.f32.mrb[0].mxu0
        %1313 = vmatprep.mubr.f32.mxu0 0.0
        %1314 = vmatmul.mubr.f32.gmra.mrb[0].mxu0 %v1174
        %v1315 = vpop.f32.mrb[0].mxu0
        %v1316 = vadd.f32 0.0, %v1315
        %v1317 = vpop.f32.mrb[0].mxu0
        %1318 = vmatprep.mubr.f32.mxu0 0.0
        %1319 = vmatmul.mubr.f32.gmra.mrb[0].mxu0 %v1177
        %v1320 = vpop.f32.mrb[0].mxu0
        %v1321 = vadd.f32 0.0, %v1320
        %v1322 = vpop.f32.mrb[0].mxu0
        %1323 = vdwg.mxu0
        %v1324 = vadd.f32 %v1060, %v1246
        %v1325 = vadd.f32 %v1061, %v1251
        %v1326 = vadd.f32 %v1062, %v1256
        %v1327 = vadd.f32 %v1063, %v1261
        %v1328 = vadd.f32 %v1064, %v1266
        %v1329 = vadd.f32 %v1065, %v1271
        %v1330 = vadd.f32 %v1066, %v1276
        %v1331 = vadd.f32 %v1067, %v1281
        %v1332 = vadd.f32 %v1068, %v1286
        %v1333 = vadd.f32 %v1069, %v1291
        %v1334 = vadd.f32 %v1070, %v1296
        %v1335 = vadd.f32 %v1071, %v1301
        %v1336 = vadd.f32 %v1072, %v1306
        %v1337 = vadd.f32 %v1073, %v1311
        %v1338 = vadd.f32 %v1074, %v1316
        %v1339 = vadd.f32 %v1075, %v1321
        %1340 = vst.msk [vmem:[%s1059] sm:$0xff] %vm487, %v1324
        %1341 = vst.msk [vmem:[%s1059 + $0x8] sm:$0xff] %vm487, %v1325
        %1342 = vst.msk [vmem:[%s1059 + $0x10] sm:$0xff] %vm487, %v1326
        %1343 = vst.msk [vmem:[%s1059 + $0x18] sm:$0xff] %vm487, %v1327
        %1344 = vst.msk [vmem:[%s1059 + $0x20] sm:$0xff] %vm487, %v1328
        %1345 = vst.msk [vmem:[%s1059 + $0x28] sm:$0xff] %vm487, %v1329
        %1346 = vst.msk [vmem:[%s1059 + $0x30] sm:$0xff] %vm487, %v1330
        %1347 = vst.msk [vmem:[%s1059 + $0x38] sm:$0xff] %vm487, %v1331
        %1348 = vst.msk [vmem:[%s1059 + $0x40] sm:$0xff] %vm487, %v1332
        %1349 = vst.msk [vmem:[%s1059 + $0x48] sm:$0xff] %vm487, %v1333
        %1350 = vst.msk [vmem:[%s1059 + $0x50] sm:$0xff] %vm487, %v1334
        %1351 = vst.msk [vmem:[%s1059 + $0x58] sm:$0xff] %vm487, %v1335
        %1352 = vst.msk [vmem:[%s1059 + $0x60] sm:$0xff] %vm487, %v1336
        %1353 = vst.msk [vmem:[%s1059 + $0x68] sm:$0xff] %vm487, %v1337
        %1354 = vst.msk [vmem:[%s1059 + $0x70] sm:$0xff] %vm487, %v1338
        %1355 = vst.msk [vmem:[%s1059 + $0x78] sm:$0xff] %vm487, %v1339
        %s1356 = scalar_lea.vmem [#allocation3], 1
        %v1357 = vld [vmem:[%s1356] sm:$0x1]
        %v1358 = vrot.slane %v1058, 4
        %v1359 = vadd.f32 %v1058, %v1358
        %v1360 = vrot.slane %v1359, 2
        %v1361 = vadd.f32 %v1359, %v1360
        %v1362 = vrot.slane %v1361, 1
        %v1363 = vadd.f32 %v1361, %v1362
        %v1364 = vadd.f32 %v1357, %v1363
        %1365 = vst [vmem:[%s1356] sm:$0x1] %v1364
        %v1366 = vld [vmem:[%s295 + $0x2] sm:$0x1]
        %v1367 = vld [vmem:[%s295 + $0x6] sm:$0x1]
        %v1368 = vld [vmem:[%s295 + $0xa] sm:$0x1]
        %v1369 = vld [vmem:[%s295 + $0xe] sm:$0x1]
        %v1370 = vld [vmem:[%s295 + $0x12] sm:$0x1]
        %v1371 = vld [vmem:[%s295 + $0x16] sm:$0x1]
        %v1372 = vld [vmem:[%s295 + $0x1a] sm:$0x1]
        %v1373 = vld [vmem:[%s295 + $0x1e] sm:$0x1]
        %v1374 = vld [vmem:[%s304 + $0x2] sm:$0x1]
        %v1375 = vld [vmem:[%s304 + $0x6] sm:$0x1]
        %v1376 = vld [vmem:[%s304 + $0xa] sm:$0x1]
        %v1377 = vld [vmem:[%s304 + $0xe] sm:$0x1]
        %v1378 = vld [vmem:[%s304 + $0x12] sm:$0x1]
        %v1379 = vld [vmem:[%s304 + $0x16] sm:$0x1]
        %v1380 = vld [vmem:[%s304 + $0x1a] sm:$0x1]
        %v1381 = vld [vmem:[%s304 + $0x1e] sm:$0x1]
        %s1382 = scalar_lea.vmem %s313, 64 [#allocation10]
        %v1383 = vld [vmem:[%s1382] sm:$0xff]
        %v1384 = vld [vmem:[%s1382 + $0x8] sm:$0xff]
        %v1385 = vld [vmem:[%s1382 + $0x10] sm:$0xff]
        %v1386 = vld [vmem:[%s1382 + $0x18] sm:$0xff]
        %v1395 = vrot.slane %v1367, 7
        %v1396 = vsel %vm467, %v1395, %v1366
        %v1397 = vrot.slane %v1368, 6
        %v1398 = vsel %vm470, %v1397, %v1396
        %v1399 = vrot.slane %v1369, 5
        %v1400 = vsel %vm473, %v1399, %v1398
        %v1401 = vrot.slane %v1370, 4
        %v1402 = vsel %vm476, %v1401, %v1400
        %v1403 = vrot.slane %v1371, 3
        %v1404 = vsel %vm479, %v1403, %v1402
        %v1405 = vrot.slane %v1372, 2
        %v1406 = vsel %vm482, %v1405, %v1404
        %v1407 = vrot.slane %v1373, 1
        %v1408 = vsel %vm485, %v1407, %v1406
        %v1409 = vsel %vm487, %v1408, 0
        %1411 = vmatprep.subr.mxu0 0.0
        %1412 = vmatpush1.msra.mxu0 %v1383
        %1413 = vmatprep.subr.mxu0 0.0
        %1414 = vmatpush1.msra.mxu0 %v1384
        %1415 = vmatprep.subr.mxu0 0.0
        %1416 = vmatpush1.msra.mxu0 %v1385
        %1417 = vmatprep.subr.mxu0 0.0
        %1418 = vmatpush1.msra.mxu0 %v1386
        %1419 = vmatprep.subr.mxu0 0.0
        %1420 = vmatpush1.msra.mxu0 0.0
        %1421 = vmatprep.subr.mxu0 0.0
        %1422 = vmatpush1.msra.mxu0 0.0
        %1423 = vmatprep.subr.mxu0 0.0
        %1424 = vmatpush1.msra.mxu0 0.0
        %1425 = vmatprep.subr.mxu0 0.0
        %1426 = vmatpush1.msra.mxu0 0.0
        %1427 = vmatprep.subr.mxu0 0.0
        %1428 = vmatpush1.msra.mxu0 0.0
        %1429 = vmatprep.subr.mxu0 0.0
        %1430 = vmatpush1.msra.mxu0 0.0
        %1431 = vmatprep.subr.mxu0 0.0
        %1432 = vmatpush1.msra.mxu0 0.0
        %1433 = vmatprep.subr.mxu0 0.0
        %1434 = vmatpush1.msra.mxu0 0.0
        %1435 = vmatprep.subr.mxu0 0.0
        %1436 = vmatpush1.msra.mxu0 0.0
        %1437 = vmatprep.subr.mxu0 0.0
        %1438 = vmatpush1.msra.mxu0 0.0
        %1439 = vmatprep.subr.mxu0 0.0
        %1440 = vmatpush1.msra.mxu0 0.0
        %1441 = vmatprep.subr.mxu0 0.0
        %1442 = vmatpush1.msra.mxu0 0.0
        %1443 = vmatprep.subr.mxu0 0.0
        %1444 = vmatpush1.msra.mxu0 0.0
        %1445 = vmatprep.subr.mxu0 0.0
        %1446 = vmatpush1.msra.mxu0 0.0
        %1447 = vmatprep.subr.mxu0 0.0
        %1448 = vmatpush1.msra.mxu0 0.0
        %1449 = vmatprep.subr.mxu0 0.0
        %1450 = vmatpush1.msra.mxu0 0.0
        %1451 = vmatprep.subr.mxu0 0.0
        %1452 = vmatpush1.msra.mxu0 0.0
        %1453 = vmatprep.subr.mxu0 0.0
        %1454 = vmatpush1.msra.mxu0 0.0
        %1455 = vmatprep.subr.mxu0 0.0
        %1456 = vmatpush1.msra.mxu0 0.0
        %1457 = vmatprep.subr.mxu0 0.0
        %1458 = vmatpush1.msra.mxu0 0.0
        %1459 = vmatprep.subr.mxu0 0.0
        %1460 = vmatpush1.msra.mxu0 0.0
        %1461 = vmatprep.subr.mxu0 0.0
        %1462 = vmatpush1.msra.mxu0 0.0
        %1463 = vmatprep.subr.mxu0 0.0
        %1464 = vmatpush1.msra.mxu0 0.0
        %1465 = vmatprep.subr.mxu0 0.0
        %1466 = vmatpush1.msra.mxu0 0.0
        %1467 = vmatprep.subr.mxu0 0.0
        %1468 = vmatpush1.msra.mxu0 0.0
        %1469 = vmatprep.subr.mxu0 0.0
        %1470 = vmatpush1.msra.mxu0 0.0
        %1471 = vmatprep.subr.mxu0 0.0
        %1472 = vmatpush1.msra.mxu0 0.0
        %1473 = vmatprep.subr.mxu0 0.0
        %1474 = vmatpush1.msra.mxu0 0.0
        %1475 = vmatprep.mubr.f32.mxu0 0.0
        %1476 = vmatmul.mubr.f32.gmra.mrb[0].mxu0 %v1409
        %v1477 = vpop.f32.mrb[0].mxu0
        %v1478 = vadd.f32 0.0, %v1477
        %v1479 = vpop.f32.mrb[0].mxu0
        %1480 = vdwg.mxu0
        %v1481 = vmul.f32 %v1366, %v1366
        %v1482 = vmul.f32 %v1367, %v1367
        %v1483 = vmul.f32 %v1368, %v1368
        %v1484 = vmul.f32 %v1369, %v1369
        %v1485 = vmul.f32 %v1370, %v1370
        %v1486 = vmul.f32 %v1371, %v1371
        %v1487 = vmul.f32 %v1372, %v1372
        %v1488 = vmul.f32 %v1373, %v1373
        %v1497 = vrot.slane %v1482, 7
        %v1498 = vsel %vm467, %v1497, %v1481
        %v1499 = vrot.slane %v1483, 6
        %v1500 = vsel %vm470, %v1499, %v1498
        %v1501 = vrot.slane %v1484, 5
        %v1502 = vsel %vm473, %v1501, %v1500
        %v1503 = vrot.slane %v1485, 4
        %v1504 = vsel %vm476, %v1503, %v1502
        %v1505 = vrot.slane %v1486, 3
        %v1506 = vsel %vm479, %v1505, %v1504
        %v1507 = vrot.slane %v1487, 2
        %v1508 = vsel %vm482, %v1507, %v1506
        %v1509 = vrot.slane %v1488, 1
        %v1510 = vsel %vm485, %v1509, %v1508
        %v1512 = vsel %vm487, %v1510, 0.0
        %1513 = vadd.xlane.f32.xlu0 %v1512
        %v1514 = vpop.xlane.xlu0 %1513
        %v1515 = vmul.f32 %v1514, 0.5
        %v1516 = vsub.f32 %v1478, %v1515
        %v1517 = vmul.f32 %v1516, 1.442695
        %v1518 = vpow.pop %v1517
        %v1519 = vsel %vm437, %v1518, 0.0
        %s1520 = scalar_lea.vmem [#allocation2], 256
        %v1521 = vld [vmem:[%s1520] sm:$0xff]
        %v1522 = vld [vmem:[%s1520 + $0x8] sm:$0xff]
        %v1523 = vld [vmem:[%s1520 + $0x10] sm:$0xff]
        %v1524 = vld [vmem:[%s1520 + $0x18] sm:$0xff]
        %v1525 = vld [vmem:[%s1520 + $0x20] sm:$0xff]
        %v1526 = vld [vmem:[%s1520 + $0x28] sm:$0xff]
        %v1527 = vld [vmem:[%s1520 + $0x30] sm:$0xff]
        %v1528 = vld [vmem:[%s1520 + $0x38] sm:$0xff]
        %v1529 = vld [vmem:[%s1520 + $0x40] sm:$0xff]
        %v1530 = vld [vmem:[%s1520 + $0x48] sm:$0xff]
        %v1531 = vld [vmem:[%s1520 + $0x50] sm:$0xff]
        %v1532 = vld [vmem:[%s1520 + $0x58] sm:$0xff]
        %v1533 = vld [vmem:[%s1520 + $0x60] sm:$0xff]
        %v1534 = vld [vmem:[%s1520 + $0x68] sm:$0xff]
        %v1535 = vld [vmem:[%s1520 + $0x70] sm:$0xff]
        %v1536 = vld [vmem:[%s1520 + $0x78] sm:$0xff]
        %1537 = vxpose.xlu0.b32.start [1/16] %v1519, 128
        %1538 = vxpose.xlu0.b32.cont [2/16] 0.0, 128
        %1539 = vxpose.xlu0.b32.cont [3/16] 0.0, 128
        %1540 = vxpose.xlu0.b32.cont [4/16] 0.0, 128
        %1541 = vxpose.xlu0.b32.cont [5/16] 0.0, 128
        %1542 = vxpose.xlu0.b32.cont [6/16] 0.0, 128
        %1543 = vxpose.xlu0.b32.cont [7/16] 0.0, 128
        %1544 = vxpose.xlu0.b32.cont [8/16] 0.0, 128
        %1545 = vxpose.xlu0.b32.cont [9/16] 0.0, 128
        %1546 = vxpose.xlu0.b32.cont [10/16] 0.0, 128
        %1547 = vxpose.xlu0.b32.cont [11/16] 0.0, 128
        %1548 = vxpose.xlu0.b32.cont [12/16] 0.0, 128
        %1549 = vxpose.xlu0.b32.cont [13/16] 0.0, 128
        %1550 = vxpose.xlu0.b32.cont [14/16] 0.0, 128
        %1551 = vxpose.xlu0.b32.cont [15/16] 0.0, 128
        %1552 = vxpose.xlu0.b32.end [16/16] 0.0, 128
        %v1553 = vpop.trf.xlu0
        %v1554 = vpop.trf.xlu0
        %v1555 = vpop.trf.xlu0
        %v1556 = vpop.trf.xlu0
        %v1557 = vpop.trf.xlu0
        %v1558 = vpop.trf.xlu0
        %v1559 = vpop.trf.xlu0
        %v1560 = vpop.trf.xlu0
        %v1561 = vpop.trf.xlu0
        %v1562 = vpop.trf.xlu0
        %v1563 = vpop.trf.xlu0
        %v1564 = vpop.trf.xlu0
        %v1565 = vpop.trf.xlu0
        %v1566 = vpop.trf.xlu0
        %v1567 = vpop.trf.xlu0
        %v1568 = vpop.trf.xlu0
        %v1577 = vrot.slane %v1375, 7
        %v1578 = vsel %vm467, %v1577, %v1374
        %v1579 = vrot.slane %v1376, 6
        %v1580 = vsel %vm470, %v1579, %v1578
        %v1581 = vrot.slane %v1377, 5
        %v1582 = vsel %vm473, %v1581, %v1580
        %v1583 = vrot.slane %v1378, 4
        %v1584 = vsel %vm476, %v1583, %v1582
        %v1585 = vrot.slane %v1379, 3
        %v1586 = vsel %vm479, %v1585, %v1584
        %v1587 = vrot.slane %v1380, 2
        %v1588 = vsel %vm482, %v1587, %v1586
        %v1589 = vrot.slane %v1381, 1
        %v1590 = vsel %vm485, %v1589, %v1588
        %v1593 = vsel %vm670, %v1553, 0
        %v1596 = vsel %vm670, %v1554, 0
        %v1599 = vsel %vm670, %v1555, 0
        %v1602 = vsel %vm670, %v1556, 0
        %v1605 = vsel %vm670, %v1557, 0
        %v1608 = vsel %vm670, %v1558, 0
        %v1611 = vsel %vm670, %v1559, 0
        %v1614 = vsel %vm670, %v1560, 0
        %v1617 = vsel %vm670, %v1561, 0
        %v1620 = vsel %vm670, %v1562, 0
        %v1623 = vsel %vm670, %v1563, 0
        %v1626 = vsel %vm670, %v1564, 0
        %v1629 = vsel %vm670, %v1565, 0
        %v1632 = vsel %vm670, %v1566, 0
        %v1635 = vsel %vm670, %v1567, 0
        %v1638 = vsel %vm670, %v1568, 0
        %1640 = vmatprep.subr.mxu0 0.0
        %1641 = vmatpush1.msra.mxu0 %v1590
        %1642 = vmatprep.subr.mxu0 0.0
        %1643 = vmatpush1.msra.mxu0 0.0
        %1644 = vmatprep.subr.mxu0 0.0
        %1645 = vmatpush1.msra.mxu0 0.0
        %1646 = vmatprep.subr.mxu0 0.0
        %1647 = vmatpush1.msra.mxu0 0.0
        %1648 = vmatprep.subr.mxu0 0.0
        %1649 = vmatpush1.msra.mxu0 0.0
        %1650 = vmatprep.subr.mxu0 0.0
        %1651 = vmatpush1.msra.mxu0 0.0
        %1652 = vmatprep.subr.mxu0 0.0
        %1653 = vmatpush1.msra.mxu0 0.0
        %1654 = vmatprep.subr.mxu0 0.0
        %1655 = vmatpush1.msra.mxu0 0.0
        %1656 = vmatprep.subr.mxu0 0.0
        %1657 = vmatpush1.msra.mxu0 0.0
        %1658 = vmatprep.subr.mxu0 0.0
        %1659 = vmatpush1.msra.mxu0 0.0
        %1660 = vmatprep.subr.mxu0 0.0
        %1661 = vmatpush1.msra.mxu0 0.0
        %1662 = vmatprep.subr.mxu0 0.0
        %1663 = vmatpush1.msra.mxu0 0.0
        %1664 = vmatprep.subr.mxu0 0.0
        %1665 = vmatpush1.msra.mxu0 0.0
        %1666 = vmatprep.subr.mxu0 0.0
        %1667 = vmatpush1.msra.mxu0 0.0
        %1668 = vmatprep.subr.mxu0 0.0
        %1669 = vmatpush1.msra.mxu0 0.0
        %1670 = vmatprep.subr.mxu0 0.0
        %1671 = vmatpush1.msra.mxu0 0.0
        %1672 = vmatprep.subr.mxu0 0.0
        %1673 = vmatpush1.msra.mxu0 0.0
        %1674 = vmatprep.subr.mxu0 0.0
        %1675 = vmatpush1.msra.mxu0 0.0
        %1676 = vmatprep.subr.mxu0 0.0
        %1677 = vmatpush1.msra.mxu0 0.0
        %1678 = vmatprep.subr.mxu0 0.0
        %1679 = vmatpush1.msra.mxu0 0.0
        %1680 = vmatprep.subr.mxu0 0.0
        %1681 = vmatpush1.msra.mxu0 0.0
        %1682 = vmatprep.subr.mxu0 0.0
        %1683 = vmatpush1.msra.mxu0 0.0
        %1684 = vmatprep.subr.mxu0 0.0
        %1685 = vmatpush1.msra.mxu0 0.0
        %1686 = vmatprep.subr.mxu0 0.0
        %1687 = vmatpush1.msra.mxu0 0.0
        %1688 = vmatprep.subr.mxu0 0.0
        %1689 = vmatpush1.msra.mxu0 0.0
        %1690 = vmatprep.subr.mxu0 0.0
        %1691 = vmatpush1.msra.mxu0 0.0
        %1692 = vmatprep.subr.mxu0 0.0
        %1693 = vmatpush1.msra.mxu0 0.0
        %1694 = vmatprep.subr.mxu0 0.0
        %1695 = vmatpush1.msra.mxu0 0.0
        %1696 = vmatprep.subr.mxu0 0.0
        %1697 = vmatpush1.msra.mxu0 0.0
        %1698 = vmatprep.subr.mxu0 0.0
        %1699 = vmatpush1.msra.mxu0 0.0
        %1700 = vmatprep.subr.mxu0 0.0
        %1701 = vmatpush1.msra.mxu0 0.0
        %1702 = vmatprep.subr.mxu0 0.0
        %1703 = vmatpush1.msra.mxu0 0.0
        %1704 = vmatprep.mubr.f32.mxu0 0.0
        %1705 = vmatmul.mubr.f32.gmra.mrb[0].mxu0 %v1593
        %v1706 = vpop.f32.mrb[0].mxu0
        %v1707 = vadd.f32 0.0, %v1706
        %v1708 = vpop.f32.mrb[0].mxu0
        %1709 = vmatprep.mubr.f32.mxu0 0.0
        %1710 = vmatmul.mubr.f32.gmra.mrb[0].mxu0 %v1596
        %v1711 = vpop.f32.mrb[0].mxu0
        %v1712 = vadd.f32 0.0, %v1711
        %v1713 = vpop.f32.mrb[0].mxu0
        %1714 = vmatprep.mubr.f32.mxu0 0.0
        %1715 = vmatmul.mubr.f32.gmra.mrb[0].mxu0 %v1599
        %v1716 = vpop.f32.mrb[0].mxu0
        %v1717 = vadd.f32 0.0, %v1716
        %v1718 = vpop.f32.mrb[0].mxu0
        %1719 = vmatprep.mubr.f32.mxu0 0.0
        %1720 = vmatmul.mubr.f32.gmra.mrb[0].mxu0 %v1602
        %v1721 = vpop.f32.mrb[0].mxu0
        %v1722 = vadd.f32 0.0, %v1721
        %v1723 = vpop.f32.mrb[0].mxu0
        %1724 = vmatprep.mubr.f32.mxu0 0.0
        %1725 = vmatmul.mubr.f32.gmra.mrb[0].mxu0 %v1605
        %v1726 = vpop.f32.mrb[0].mxu0
        %v1727 = vadd.f32 0.0, %v1726
        %v1728 = vpop.f32.mrb[0].mxu0
        %1729 = vmatprep.mubr.f32.mxu0 0.0
        %1730 = vmatmul.mubr.f32.gmra.mrb[0].mxu0 %v1608
        %v1731 = vpop.f32.mrb[0].mxu0
        %v1732 = vadd.f32 0.0, %v1731
        %v1733 = vpop.f32.mrb[0].mxu0
        %1734 = vmatprep.mubr.f32.mxu0 0.0
        %1735 = vmatmul.mubr.f32.gmra.mrb[0].mxu0 %v1611
        %v1736 = vpop.f32.mrb[0].mxu0
        %v1737 = vadd.f32 0.0, %v1736
        %v1738 = vpop.f32.mrb[0].mxu0
        %1739 = vmatprep.mubr.f32.mxu0 0.0
        %1740 = vmatmul.mubr.f32.gmra.mrb[0].mxu0 %v1614
        %v1741 = vpop.f32.mrb[0].mxu0
        %v1742 = vadd.f32 0.0, %v1741
        %v1743 = vpop.f32.mrb[0].mxu0
        %1744 = vmatprep.mubr.f32.mxu0 0.0
        %1745 = vmatmul.mubr.f32.gmra.mrb[0].mxu0 %v1617
        %v1746 = vpop.f32.mrb[0].mxu0
        %v1747 = vadd.f32 0.0, %v1746
        %v1748 = vpop.f32.mrb[0].mxu0
        %1749 = vmatprep.mubr.f32.mxu0 0.0
        %1750 = vmatmul.mubr.f32.gmra.mrb[0].mxu0 %v1620
        %v1751 = vpop.f32.mrb[0].mxu0
        %v1752 = vadd.f32 0.0, %v1751
        %v1753 = vpop.f32.mrb[0].mxu0
        %1754 = vmatprep.mubr.f32.mxu0 0.0
        %1755 = vmatmul.mubr.f32.gmra.mrb[0].mxu0 %v1623
        %v1756 = vpop.f32.mrb[0].mxu0
        %v1757 = vadd.f32 0.0, %v1756
        %v1758 = vpop.f32.mrb[0].mxu0
        %1759 = vmatprep.mubr.f32.mxu0 0.0
        %1760 = vmatmul.mubr.f32.gmra.mrb[0].mxu0 %v1626
        %v1761 = vpop.f32.mrb[0].mxu0
        %v1762 = vadd.f32 0.0, %v1761
        %v1763 = vpop.f32.mrb[0].mxu0
        %1764 = vmatprep.mubr.f32.mxu0 0.0
        %1765 = vmatmul.mubr.f32.gmra.mrb[0].mxu0 %v1629
        %v1766 = vpop.f32.mrb[0].mxu0
        %v1767 = vadd.f32 0.0, %v1766
        %v1768 = vpop.f32.mrb[0].mxu0
        %1769 = vmatprep.mubr.f32.mxu0 0.0
        %1770 = vmatmul.mubr.f32.gmra.mrb[0].mxu0 %v1632
        %v1771 = vpop.f32.mrb[0].mxu0
        %v1772 = vadd.f32 0.0, %v1771
        %v1773 = vpop.f32.mrb[0].mxu0
        %1774 = vmatprep.mubr.f32.mxu0 0.0
        %1775 = vmatmul.mubr.f32.gmra.mrb[0].mxu0 %v1635
        %v1776 = vpop.f32.mrb[0].mxu0
        %v1777 = vadd.f32 0.0, %v1776
        %v1778 = vpop.f32.mrb[0].mxu0
        %1779 = vmatprep.mubr.f32.mxu0 0.0
        %1780 = vmatmul.mubr.f32.gmra.mrb[0].mxu0 %v1638
        %v1781 = vpop.f32.mrb[0].mxu0
        %v1782 = vadd.f32 0.0, %v1781
        %v1783 = vpop.f32.mrb[0].mxu0
        %1784 = vdwg.mxu0
        %v1785 = vadd.f32 %v1521, %v1707
        %v1786 = vadd.f32 %v1522, %v1712
        %v1787 = vadd.f32 %v1523, %v1717
        %v1788 = vadd.f32 %v1524, %v1722
        %v1789 = vadd.f32 %v1525, %v1727
        %v1790 = vadd.f32 %v1526, %v1732
        %v1791 = vadd.f32 %v1527, %v1737
        %v1792 = vadd.f32 %v1528, %v1742
        %v1793 = vadd.f32 %v1529, %v1747
        %v1794 = vadd.f32 %v1530, %v1752
        %v1795 = vadd.f32 %v1531, %v1757
        %v1796 = vadd.f32 %v1532, %v1762
        %v1797 = vadd.f32 %v1533, %v1767
        %v1798 = vadd.f32 %v1534, %v1772
        %v1799 = vadd.f32 %v1535, %v1777
        %v1800 = vadd.f32 %v1536, %v1782
        %1801 = vst.msk [vmem:[%s1520] sm:$0xff] %vm487, %v1785
        %1802 = vst.msk [vmem:[%s1520 + $0x8] sm:$0xff] %vm487, %v1786
        %1803 = vst.msk [vmem:[%s1520 + $0x10] sm:$0xff] %vm487, %v1787
        %1804 = vst.msk [vmem:[%s1520 + $0x18] sm:$0xff] %vm487, %v1788
        %1805 = vst.msk [vmem:[%s1520 + $0x20] sm:$0xff] %vm487, %v1789
        %1806 = vst.msk [vmem:[%s1520 + $0x28] sm:$0xff] %vm487, %v1790
        %1807 = vst.msk [vmem:[%s1520 + $0x30] sm:$0xff] %vm487, %v1791
        %1808 = vst.msk [vmem:[%s1520 + $0x38] sm:$0xff] %vm487, %v1792
        %1809 = vst.msk [vmem:[%s1520 + $0x40] sm:$0xff] %vm487, %v1793
        %1810 = vst.msk [vmem:[%s1520 + $0x48] sm:$0xff] %vm487, %v1794
        %1811 = vst.msk [vmem:[%s1520 + $0x50] sm:$0xff] %vm487, %v1795
        %1812 = vst.msk [vmem:[%s1520 + $0x58] sm:$0xff] %vm487, %v1796
        %1813 = vst.msk [vmem:[%s1520 + $0x60] sm:$0xff] %vm487, %v1797
        %1814 = vst.msk [vmem:[%s1520 + $0x68] sm:$0xff] %vm487, %v1798
        %1815 = vst.msk [vmem:[%s1520 + $0x70] sm:$0xff] %vm487, %v1799
        %1816 = vst.msk [vmem:[%s1520 + $0x78] sm:$0xff] %vm487, %v1800
        %s1817 = scalar_lea.vmem [#allocation3], 2
        %v1818 = vld [vmem:[%s1817] sm:$0x1]
        %v1819 = vrot.slane %v1519, 4
        %v1820 = vadd.f32 %v1519, %v1819
        %v1821 = vrot.slane %v1820, 2
        %v1822 = vadd.f32 %v1820, %v1821
        %v1823 = vrot.slane %v1822, 1
        %v1824 = vadd.f32 %v1822, %v1823
        %v1825 = vadd.f32 %v1818, %v1824
        %1826 = vst [vmem:[%s1817] sm:$0x1] %v1825
        %v1827 = vld [vmem:[%s295 + $0x3] sm:$0x1]
        %v1828 = vld [vmem:[%s295 + $0x7] sm:$0x1]
        %v1829 = vld [vmem:[%s295 + $0xb] sm:$0x1]
        %v1830 = vld [vmem:[%s295 + $0xf] sm:$0x1]
        %v1831 = vld [vmem:[%s295 + $0x13] sm:$0x1]
        %v1832 = vld [vmem:[%s295 + $0x17] sm:$0x1]
        %v1833 = vld [vmem:[%s295 + $0x1b] sm:$0x1]
        %v1834 = vld [vmem:[%s295 + $0x1f] sm:$0x1]
        %v1835 = vld [vmem:[%s304 + $0x3] sm:$0x1]
        %v1836 = vld [vmem:[%s304 + $0x7] sm:$0x1]
        %v1837 = vld [vmem:[%s304 + $0xb] sm:$0x1]
        %v1838 = vld [vmem:[%s304 + $0xf] sm:$0x1]
        %v1839 = vld [vmem:[%s304 + $0x13] sm:$0x1]
        %v1840 = vld [vmem:[%s304 + $0x17] sm:$0x1]
        %v1841 = vld [vmem:[%s304 + $0x1b] sm:$0x1]
        %v1842 = vld [vmem:[%s304 + $0x1f] sm:$0x1]
        %s1843 = scalar_lea.vmem %s313, 96 [#allocation10]
        %v1844 = vld [vmem:[%s1843] sm:$0xff]
        %v1845 = vld [vmem:[%s1843 + $0x8] sm:$0xff]
        %v1846 = vld [vmem:[%s1843 + $0x10] sm:$0xff]
        %v1847 = vld [vmem:[%s1843 + $0x18] sm:$0xff]
        %v1856 = vrot.slane %v1828, 7
        %v1857 = vsel %vm467, %v1856, %v1827
        %v1858 = vrot.slane %v1829, 6
        %v1859 = vsel %vm470, %v1858, %v1857
        %v1860 = vrot.slane %v1830, 5
        %v1861 = vsel %vm473, %v1860, %v1859
        %v1862 = vrot.slane %v1831, 4
        %v1863 = vsel %vm476, %v1862, %v1861
        %v1864 = vrot.slane %v1832, 3
        %v1865 = vsel %vm479, %v1864, %v1863
        %v1866 = vrot.slane %v1833, 2
        %v1867 = vsel %vm482, %v1866, %v1865
        %v1868 = vrot.slane %v1834, 1
        %v1869 = vsel %vm485, %v1868, %v1867
        %v1870 = vsel %vm487, %v1869, 0
        %1872 = vmatprep.subr.mxu0 0.0
        %1873 = vmatpush1.msra.mxu0 %v1844
        %1874 = vmatprep.subr.mxu0 0.0
        %1875 = vmatpush1.msra.mxu0 %v1845
        %1876 = vmatprep.subr.mxu0 0.0
        %1877 = vmatpush1.msra.mxu0 %v1846
        %1878 = vmatprep.subr.mxu0 0.0
        %1879 = vmatpush1.msra.mxu0 %v1847
        %1880 = vmatprep.subr.mxu0 0.0
        %1881 = vmatpush1.msra.mxu0 0.0
        %1882 = vmatprep.subr.mxu0 0.0
        %1883 = vmatpush1.msra.mxu0 0.0
        %1884 = vmatprep.subr.mxu0 0.0
        %1885 = vmatpush1.msra.mxu0 0.0
        %1886 = vmatprep.subr.mxu0 0.0
        %1887 = vmatpush1.msra.mxu0 0.0
        %1888 = vmatprep.subr.mxu0 0.0
        %1889 = vmatpush1.msra.mxu0 0.0
        %1890 = vmatprep.subr.mxu0 0.0
        %1891 = vmatpush1.msra.mxu0 0.0
        %1892 = vmatprep.subr.mxu0 0.0
        %1893 = vmatpush1.msra.mxu0 0.0
        %1894 = vmatprep.subr.mxu0 0.0
        %1895 = vmatpush1.msra.mxu0 0.0
        %1896 = vmatprep.subr.mxu0 0.0
        %1897 = vmatpush1.msra.mxu0 0.0
        %1898 = vmatprep.subr.mxu0 0.0
        %1899 = vmatpush1.msra.mxu0 0.0
        %1900 = vmatprep.subr.mxu0 0.0
        %1901 = vmatpush1.msra.mxu0 0.0
        %1902 = vmatprep.subr.mxu0 0.0
        %1903 = vmatpush1.msra.mxu0 0.0
        %1904 = vmatprep.subr.mxu0 0.0
        %1905 = vmatpush1.msra.mxu0 0.0
        %1906 = vmatprep.subr.mxu0 0.0
        %1907 = vmatpush1.msra.mxu0 0.0
        %1908 = vmatprep.subr.mxu0 0.0
        %1909 = vmatpush1.msra.mxu0 0.0
        %1910 = vmatprep.subr.mxu0 0.0
        %1911 = vmatpush1.msra.mxu0 0.0
        %1912 = vmatprep.subr.mxu0 0.0
        %1913 = vmatpush1.msra.mxu0 0.0
        %1914 = vmatprep.subr.mxu0 0.0
        %1915 = vmatpush1.msra.mxu0 0.0
        %1916 = vmatprep.subr.mxu0 0.0
        %1917 = vmatpush1.msra.mxu0 0.0
        %1918 = vmatprep.subr.mxu0 0.0
        %1919 = vmatpush1.msra.mxu0 0.0
        %1920 = vmatprep.subr.mxu0 0.0
        %1921 = vmatpush1.msra.mxu0 0.0
        %1922 = vmatprep.subr.mxu0 0.0
        %1923 = vmatpush1.msra.mxu0 0.0
        %1924 = vmatprep.subr.mxu0 0.0
        %1925 = vmatpush1.msra.mxu0 0.0
        %1926 = vmatprep.subr.mxu0 0.0
        %1927 = vmatpush1.msra.mxu0 0.0
        %1928 = vmatprep.subr.mxu0 0.0
        %1929 = vmatpush1.msra.mxu0 0.0
        %1930 = vmatprep.subr.mxu0 0.0
        %1931 = vmatpush1.msra.mxu0 0.0
        %1932 = vmatprep.subr.mxu0 0.0
        %1933 = vmatpush1.msra.mxu0 0.0
        %1934 = vmatprep.subr.mxu0 0.0
        %1935 = vmatpush1.msra.mxu0 0.0
        %1936 = vmatprep.mubr.f32.mxu0 0.0
        %1937 = vmatmul.mubr.f32.gmra.mrb[0].mxu0 %v1870
        %v1938 = vpop.f32.mrb[0].mxu0
        %v1939 = vadd.f32 0.0, %v1938
        %v1940 = vpop.f32.mrb[0].mxu0
        %1941 = vdwg.mxu0
        %v1942 = vmul.f32 %v1827, %v1827
        %v1943 = vmul.f32 %v1828, %v1828
        %v1944 = vmul.f32 %v1829, %v1829
        %v1945 = vmul.f32 %v1830, %v1830
        %v1946 = vmul.f32 %v1831, %v1831
        %v1947 = vmul.f32 %v1832, %v1832
        %v1948 = vmul.f32 %v1833, %v1833
        %v1949 = vmul.f32 %v1834, %v1834
        %v1958 = vrot.slane %v1943, 7
        %v1959 = vsel %vm467, %v1958, %v1942
        %v1960 = vrot.slane %v1944, 6
        %v1961 = vsel %vm470, %v1960, %v1959
        %v1962 = vrot.slane %v1945, 5
        %v1963 = vsel %vm473, %v1962, %v1961
        %v1964 = vrot.slane %v1946, 4
        %v1965 = vsel %vm476, %v1964, %v1963
        %v1966 = vrot.slane %v1947, 3
        %v1967 = vsel %vm479, %v1966, %v1965
        %v1968 = vrot.slane %v1948, 2
        %v1969 = vsel %vm482, %v1968, %v1967
        %v1970 = vrot.slane %v1949, 1
        %v1971 = vsel %vm485, %v1970, %v1969
        %v1973 = vsel %vm487, %v1971, 0.0
        %1974 = vadd.xlane.f32.xlu0 %v1973
        %v1975 = vpop.xlane.xlu0 %1974
        %v1976 = vmul.f32 %v1975, 0.5
        %v1977 = vsub.f32 %v1939, %v1976
        %v1978 = vmul.f32 %v1977, 1.442695
        %v1979 = vpow.pop %v1978
        %v1980 = vsel %vm437, %v1979, 0.0
        %s1981 = scalar_lea.vmem [#allocation2], 384
        %v1982 = vld [vmem:[%s1981] sm:$0xff]
        %v1983 = vld [vmem:[%s1981 + $0x8] sm:$0xff]
        %v1984 = vld [vmem:[%s1981 + $0x10] sm:$0xff]
        %v1985 = vld [vmem:[%s1981 + $0x18] sm:$0xff]
        %v1986 = vld [vmem:[%s1981 + $0x20] sm:$0xff]
        %v1987 = vld [vmem:[%s1981 + $0x28] sm:$0xff]
        %v1988 = vld [vmem:[%s1981 + $0x30] sm:$0xff]
        %v1989 = vld [vmem:[%s1981 + $0x38] sm:$0xff]
        %v1990 = vld [vmem:[%s1981 + $0x40] sm:$0xff]
        %v1991 = vld [vmem:[%s1981 + $0x48] sm:$0xff]
        %v1992 = vld [vmem:[%s1981 + $0x50] sm:$0xff]
        %v1993 = vld [vmem:[%s1981 + $0x58] sm:$0xff]
        %v1994 = vld [vmem:[%s1981 + $0x60] sm:$0xff]
        %v1995 = vld [vmem:[%s1981 + $0x68] sm:$0xff]
        %v1996 = vld [vmem:[%s1981 + $0x70] sm:$0xff]
        %v1997 = vld [vmem:[%s1981 + $0x78] sm:$0xff]
        %1998 = vxpose.xlu0.b32.start [1/16] %v1980, 128
        %1999 = vxpose.xlu0.b32.cont [2/16] 0.0, 128
        %2000 = vxpose.xlu0.b32.cont [3/16] 0.0, 128
        %2001 = vxpose.xlu0.b32.cont [4/16] 0.0, 128
        %2002 = vxpose.xlu0.b32.cont [5/16] 0.0, 128
        %2003 = vxpose.xlu0.b32.cont [6/16] 0.0, 128
        %2004 = vxpose.xlu0.b32.cont [7/16] 0.0, 128
        %2005 = vxpose.xlu0.b32.cont [8/16] 0.0, 128
        %2006 = vxpose.xlu0.b32.cont [9/16] 0.0, 128
        %2007 = vxpose.xlu0.b32.cont [10/16] 0.0, 128
        %2008 = vxpose.xlu0.b32.cont [11/16] 0.0, 128
        %2009 = vxpose.xlu0.b32.cont [12/16] 0.0, 128
        %2010 = vxpose.xlu0.b32.cont [13/16] 0.0, 128
        %2011 = vxpose.xlu0.b32.cont [14/16] 0.0, 128
        %2012 = vxpose.xlu0.b32.cont [15/16] 0.0, 128
        %2013 = vxpose.xlu0.b32.end [16/16] 0.0, 128
        %v2014 = vpop.trf.xlu0
        %v2015 = vpop.trf.xlu0
        %v2016 = vpop.trf.xlu0
        %v2017 = vpop.trf.xlu0
        %v2018 = vpop.trf.xlu0
        %v2019 = vpop.trf.xlu0
        %v2020 = vpop.trf.xlu0
        %v2021 = vpop.trf.xlu0
        %v2022 = vpop.trf.xlu0
        %v2023 = vpop.trf.xlu0
        %v2024 = vpop.trf.xlu0
        %v2025 = vpop.trf.xlu0
        %v2026 = vpop.trf.xlu0
        %v2027 = vpop.trf.xlu0
        %v2028 = vpop.trf.xlu0
        %v2029 = vpop.trf.xlu0
        %v2038 = vrot.slane %v1836, 7
        %v2039 = vsel %vm467, %v2038, %v1835
        %v2040 = vrot.slane %v1837, 6
        %v2041 = vsel %vm470, %v2040, %v2039
        %v2042 = vrot.slane %v1838, 5
        %v2043 = vsel %vm473, %v2042, %v2041
        %v2044 = vrot.slane %v1839, 4
        %v2045 = vsel %vm476, %v2044, %v2043
        %v2046 = vrot.slane %v1840, 3
        %v2047 = vsel %vm479, %v2046, %v2045
        %v2048 = vrot.slane %v1841, 2
        %v2049 = vsel %vm482, %v2048, %v2047
        %v2050 = vrot.slane %v1842, 1
        %v2051 = vsel %vm485, %v2050, %v2049
        %v2054 = vsel %vm670, %v2014, 0
        %v2057 = vsel %vm670, %v2015, 0
        %v2060 = vsel %vm670, %v2016, 0
        %v2063 = vsel %vm670, %v2017, 0
        %v2066 = vsel %vm670, %v2018, 0
        %v2069 = vsel %vm670, %v2019, 0
        %v2072 = vsel %vm670, %v2020, 0
        %v2075 = vsel %vm670, %v2021, 0
        %v2078 = vsel %vm670, %v2022, 0
        %v2081 = vsel %vm670, %v2023, 0
        %v2084 = vsel %vm670, %v2024, 0
        %v2087 = vsel %vm670, %v2025, 0
        %v2090 = vsel %vm670, %v2026, 0
        %v2093 = vsel %vm670, %v2027, 0
        %v2096 = vsel %vm670, %v2028, 0
        %v2099 = vsel %vm670, %v2029, 0
        %2101 = vmatprep.subr.mxu0 0.0
        %2102 = vmatpush1.msra.mxu0 %v2051
        %2103 = vmatprep.subr.mxu0 0.0
        %2104 = vmatpush1.msra.mxu0 0.0
        %2105 = vmatprep.subr.mxu0 0.0
        %2106 = vmatpush1.msra.mxu0 0.0
        %2107 = vmatprep.subr.mxu0 0.0
        %2108 = vmatpush1.msra.mxu0 0.0
        %2109 = vmatprep.subr.mxu0 0.0
        %2110 = vmatpush1.msra.mxu0 0.0
        %2111 = vmatprep.subr.mxu0 0.0
        %2112 = vmatpush1.msra.mxu0 0.0
        %2113 = vmatprep.subr.mxu0 0.0
        %2114 = vmatpush1.msra.mxu0 0.0
        %2115 = vmatprep.subr.mxu0 0.0
        %2116 = vmatpush1.msra.mxu0 0.0
        %2117 = vmatprep.subr.mxu0 0.0
        %2118 = vmatpush1.msra.mxu0 0.0
        %2119 = vmatprep.subr.mxu0 0.0
        %2120 = vmatpush1.msra.mxu0 0.0
        %2121 = vmatprep.subr.mxu0 0.0
        %2122 = vmatpush1.msra.mxu0 0.0
        %2123 = vmatprep.subr.mxu0 0.0
        %2124 = vmatpush1.msra.mxu0 0.0
        %2125 = vmatprep.subr.mxu0 0.0
        %2126 = vmatpush1.msra.mxu0 0.0
        %2127 = vmatprep.subr.mxu0 0.0
        %2128 = vmatpush1.msra.mxu0 0.0
        %2129 = vmatprep.subr.mxu0 0.0
        %2130 = vmatpush1.msra.mxu0 0.0
        %2131 = vmatprep.subr.mxu0 0.0
        %2132 = vmatpush1.msra.mxu0 0.0
        %2133 = vmatprep.subr.mxu0 0.0
        %2134 = vmatpush1.msra.mxu0 0.0
        %2135 = vmatprep.subr.mxu0 0.0
        %2136 = vmatpush1.msra.mxu0 0.0
        %2137 = vmatprep.subr.mxu0 0.0
        %2138 = vmatpush1.msra.mxu0 0.0
        %2139 = vmatprep.subr.mxu0 0.0
        %2140 = vmatpush1.msra.mxu0 0.0
        %2141 = vmatprep.subr.mxu0 0.0
        %2142 = vmatpush1.msra.mxu0 0.0
        %2143 = vmatprep.subr.mxu0 0.0
        %2144 = vmatpush1.msra.mxu0 0.0
        %2145 = vmatprep.subr.mxu0 0.0
        %2146 = vmatpush1.msra.mxu0 0.0
        %2147 = vmatprep.subr.mxu0 0.0
        %2148 = vmatpush1.msra.mxu0 0.0
        %2149 = vmatprep.subr.mxu0 0.0
        %2150 = vmatpush1.msra.mxu0 0.0
        %2151 = vmatprep.subr.mxu0 0.0
        %2152 = vmatpush1.msra.mxu0 0.0
        %2153 = vmatprep.subr.mxu0 0.0
        %2154 = vmatpush1.msra.mxu0 0.0
        %2155 = vmatprep.subr.mxu0 0.0
        %2156 = vmatpush1.msra.mxu0 0.0
        %2157 = vmatprep.subr.mxu0 0.0
        %2158 = vmatpush1.msra.mxu0 0.0
        %2159 = vmatprep.subr.mxu0 0.0
        %2160 = vmatpush1.msra.mxu0 0.0
        %2161 = vmatprep.subr.mxu0 0.0
        %2162 = vmatpush1.msra.mxu0 0.0
        %2163 = vmatprep.subr.mxu0 0.0
        %2164 = vmatpush1.msra.mxu0 0.0
        %2165 = vmatprep.mubr.f32.mxu0 0.0
        %2166 = vmatmul.mubr.f32.gmra.mrb[0].mxu0 %v2054
        %v2167 = vpop.f32.mrb[0].mxu0
        %v2168 = vadd.f32 0.0, %v2167
        %v2169 = vpop.f32.mrb[0].mxu0
        %2170 = vmatprep.mubr.f32.mxu0 0.0
        %2171 = vmatmul.mubr.f32.gmra.mrb[0].mxu0 %v2057
        %v2172 = vpop.f32.mrb[0].mxu0
        %v2173 = vadd.f32 0.0, %v2172
        %v2174 = vpop.f32.mrb[0].mxu0
        %2175 = vmatprep.mubr.f32.mxu0 0.0
        %2176 = vmatmul.mubr.f32.gmra.mrb[0].mxu0 %v2060
        %v2177 = vpop.f32.mrb[0].mxu0
        %v2178 = vadd.f32 0.0, %v2177
        %v2179 = vpop.f32.mrb[0].mxu0
        %2180 = vmatprep.mubr.f32.mxu0 0.0
        %2181 = vmatmul.mubr.f32.gmra.mrb[0].mxu0 %v2063
        %v2182 = vpop.f32.mrb[0].mxu0
        %v2183 = vadd.f32 0.0, %v2182
        %v2184 = vpop.f32.mrb[0].mxu0
        %2185 = vmatprep.mubr.f32.mxu0 0.0
        %2186 = vmatmul.mubr.f32.gmra.mrb[0].mxu0 %v2066
        %v2187 = vpop.f32.mrb[0].mxu0
        %v2188 = vadd.f32 0.0, %v2187
        %v2189 = vpop.f32.mrb[0].mxu0
        %2190 = vmatprep.mubr.f32.mxu0 0.0
        %2191 = vmatmul.mubr.f32.gmra.mrb[0].mxu0 %v2069
        %v2192 = vpop.f32.mrb[0].mxu0
        %v2193 = vadd.f32 0.0, %v2192
        %v2194 = vpop.f32.mrb[0].mxu0
        %2195 = vmatprep.mubr.f32.mxu0 0.0
        %2196 = vmatmul.mubr.f32.gmra.mrb[0].mxu0 %v2072
        %v2197 = vpop.f32.mrb[0].mxu0
        %v2198 = vadd.f32 0.0, %v2197
        %v2199 = vpop.f32.mrb[0].mxu0
        %2200 = vmatprep.mubr.f32.mxu0 0.0
        %2201 = vmatmul.mubr.f32.gmra.mrb[0].mxu0 %v2075
        %v2202 = vpop.f32.mrb[0].mxu0
        %v2203 = vadd.f32 0.0, %v2202
        %v2204 = vpop.f32.mrb[0].mxu0
        %2205 = vmatprep.mubr.f32.mxu0 0.0
        %2206 = vmatmul.mubr.f32.gmra.mrb[0].mxu0 %v2078
        %v2207 = vpop.f32.mrb[0].mxu0
        %v2208 = vadd.f32 0.0, %v2207
        %v2209 = vpop.f32.mrb[0].mxu0
        %2210 = vmatprep.mubr.f32.mxu0 0.0
        %2211 = vmatmul.mubr.f32.gmra.mrb[0].mxu0 %v2081
        %v2212 = vpop.f32.mrb[0].mxu0
        %v2213 = vadd.f32 0.0, %v2212
        %v2214 = vpop.f32.mrb[0].mxu0
        %2215 = vmatprep.mubr.f32.mxu0 0.0
        %2216 = vmatmul.mubr.f32.gmra.mrb[0].mxu0 %v2084
        %v2217 = vpop.f32.mrb[0].mxu0
        %v2218 = vadd.f32 0.0, %v2217
        %v2219 = vpop.f32.mrb[0].mxu0
        %2220 = vmatprep.mubr.f32.mxu0 0.0
        %2221 = vmatmul.mubr.f32.gmra.mrb[0].mxu0 %v2087
        %v2222 = vpop.f32.mrb[0].mxu0
        %v2223 = vadd.f32 0.0, %v2222
        %v2224 = vpop.f32.mrb[0].mxu0
        %2225 = vmatprep.mubr.f32.mxu0 0.0
        %2226 = vmatmul.mubr.f32.gmra.mrb[0].mxu0 %v2090
        %v2227 = vpop.f32.mrb[0].mxu0
        %v2228 = vadd.f32 0.0, %v2227
        %v2229 = vpop.f32.mrb[0].mxu0
        %2230 = vmatprep.mubr.f32.mxu0 0.0
        %2231 = vmatmul.mubr.f32.gmra.mrb[0].mxu0 %v2093
        %v2232 = vpop.f32.mrb[0].mxu0
        %v2233 = vadd.f32 0.0, %v2232
        %v2234 = vpop.f32.mrb[0].mxu0
        %2235 = vmatprep.mubr.f32.mxu0 0.0
        %2236 = vmatmul.mubr.f32.gmra.mrb[0].mxu0 %v2096
        %v2237 = vpop.f32.mrb[0].mxu0
        %v2238 = vadd.f32 0.0, %v2237
        %v2239 = vpop.f32.mrb[0].mxu0
        %2240 = vmatprep.mubr.f32.mxu0 0.0
        %2241 = vmatmul.mubr.f32.gmra.mrb[0].mxu0 %v2099
        %v2242 = vpop.f32.mrb[0].mxu0
        %v2243 = vadd.f32 0.0, %v2242
        %v2244 = vpop.f32.mrb[0].mxu0
        %2245 = vdwg.mxu0
        %v2246 = vadd.f32 %v1982, %v2168
        %v2247 = vadd.f32 %v1983, %v2173
        %v2248 = vadd.f32 %v1984, %v2178
        %v2249 = vadd.f32 %v1985, %v2183
        %v2250 = vadd.f32 %v1986, %v2188
        %v2251 = vadd.f32 %v1987, %v2193
        %v2252 = vadd.f32 %v1988, %v2198
        %v2253 = vadd.f32 %v1989, %v2203
        %v2254 = vadd.f32 %v1990, %v2208
        %v2255 = vadd.f32 %v1991, %v2213
        %v2256 = vadd.f32 %v1992, %v2218
        %v2257 = vadd.f32 %v1993, %v2223
        %v2258 = vadd.f32 %v1994, %v2228
        %v2259 = vadd.f32 %v1995, %v2233
        %v2260 = vadd.f32 %v1996, %v2238
        %v2261 = vadd.f32 %v1997, %v2243
        %2262 = vst.msk [vmem:[%s1981] sm:$0xff] %vm487, %v2246
        %2263 = vst.msk [vmem:[%s1981 + $0x8] sm:$0xff] %vm487, %v2247
        %2264 = vst.msk [vmem:[%s1981 + $0x10] sm:$0xff] %vm487, %v2248
        %2265 = vst.msk [vmem:[%s1981 + $0x18] sm:$0xff] %vm487, %v2249
        %2266 = vst.msk [vmem:[%s1981 + $0x20] sm:$0xff] %vm487, %v2250
        %2267 = vst.msk [vmem:[%s1981 + $0x28] sm:$0xff] %vm487, %v2251
        %2268 = vst.msk [vmem:[%s1981 + $0x30] sm:$0xff] %vm487, %v2252
        %2269 = vst.msk [vmem:[%s1981 + $0x38] sm:$0xff] %vm487, %v2253
        %2270 = vst.msk [vmem:[%s1981 + $0x40] sm:$0xff] %vm487, %v2254
        %2271 = vst.msk [vmem:[%s1981 + $0x48] sm:$0xff] %vm487, %v2255
        %2272 = vst.msk [vmem:[%s1981 + $0x50] sm:$0xff] %vm487, %v2256
        %2273 = vst.msk [vmem:[%s1981 + $0x58] sm:$0xff] %vm487, %v2257
        %2274 = vst.msk [vmem:[%s1981 + $0x60] sm:$0xff] %vm487, %v2258
        %2275 = vst.msk [vmem:[%s1981 + $0x68] sm:$0xff] %vm487, %v2259
        %2276 = vst.msk [vmem:[%s1981 + $0x70] sm:$0xff] %vm487, %v2260
        %2277 = vst.msk [vmem:[%s1981 + $0x78] sm:$0xff] %vm487, %v2261
        %s2278 = scalar_lea.vmem [#allocation3], 3
        %v2279 = vld [vmem:[%s2278] sm:$0x1]
        %v2280 = vrot.slane %v1980, 4
        %v2281 = vadd.f32 %v1980, %v2280
        %v2282 = vrot.slane %v2281, 2
        %v2283 = vadd.f32 %v2281, %v2282
        %v2284 = vrot.slane %v2283, 1
        %v2285 = vadd.f32 %v2283, %v2284
        %v2286 = vadd.f32 %v2279, %v2285
        %2287 = vst [vmem:[%s2278] sm:$0x1] %v2286
        %p2288 = scmp.eq.s32.totalorder %s32, 2
        // Predicated region
        $region57: #{tpu_custom_call.1} parent=35 // pred_check
          %p2289 = pneg %p2288
        $region58: #{tpu_custom_call.1} parent=35 // pred_check_branch
          %2291 = sbr.rel (%p2289) target = $region60
        $region59: #{tpu_custom_call.1} parent=35 // pred_region
          %v2292 = vld [vmem:[%s286] sm:$0x1]
          %v2293 = vld [vmem:[%s286 + $0x4] sm:$0x1]
          %v2294 = vld [vmem:[%s286 + $0x8] sm:$0x1]
          %v2295 = vld [vmem:[%s286 + $0xc] sm:$0x1]
          %v2296 = vld [vmem:[%s286 + $0x10] sm:$0x1]
          %v2297 = vld [vmem:[%s286 + $0x14] sm:$0x1]
          %v2298 = vld [vmem:[%s286 + $0x18] sm:$0x1]
          %v2299 = vld [vmem:[%s286 + $0x1c] sm:$0x1]
          %v2300 = vld [vmem:[%s313] sm:$0xff]
          %v2301 = vld [vmem:[%s313 + $0x8] sm:$0xff]
          %v2302 = vld [vmem:[%s313 + $0x10] sm:$0xff]
          %v2303 = vld [vmem:[%s313 + $0x18] sm:$0xff]
          %v2312 = vrot.slane %v2293, 7
          %v2313 = vsel %vm467, %v2312, %v2292
          %v2314 = vrot.slane %v2294, 6
          %v2315 = vsel %vm470, %v2314, %v2313
          %v2316 = vrot.slane %v2295, 5
          %v2317 = vsel %vm473, %v2316, %v2315
          %v2318 = vrot.slane %v2296, 4
          %v2319 = vsel %vm476, %v2318, %v2317
          %v2320 = vrot.slane %v2297, 3
          %v2321 = vsel %vm479, %v2320, %v2319
          %v2322 = vrot.slane %v2298, 2
          %v2323 = vsel %vm482, %v2322, %v2321
          %v2324 = vrot.slane %v2299, 1
          %v2325 = vsel %vm485, %v2324, %v2323
          %v2326 = vsel %vm487, %v2325, 0
          %2328 = vmatprep.subr.mxu0 0.0
          %2329 = vmatpush1.msra.mxu0 %v2300
          %2330 = vmatprep.subr.mxu0 0.0
          %2331 = vmatpush1.msra.mxu0 %v2301
          %2332 = vmatprep.subr.mxu0 0.0
          %2333 = vmatpush1.msra.mxu0 %v2302
          %2334 = vmatprep.subr.mxu0 0.0
          %2335 = vmatpush1.msra.mxu0 %v2303
          %2336 = vmatprep.subr.mxu0 0.0
          %2337 = vmatpush1.msra.mxu0 0.0
          %2338 = vmatprep.subr.mxu0 0.0
          %2339 = vmatpush1.msra.mxu0 0.0
          %2340 = vmatprep.subr.mxu0 0.0
          %2341 = vmatpush1.msra.mxu0 0.0
          %2342 = vmatprep.subr.mxu0 0.0
          %2343 = vmatpush1.msra.mxu0 0.0
          %2344 = vmatprep.subr.mxu0 0.0
          %2345 = vmatpush1.msra.mxu0 0.0
          %2346 = vmatprep.subr.mxu0 0.0
          %2347 = vmatpush1.msra.mxu0 0.0
          %2348 = vmatprep.subr.mxu0 0.0
          %2349 = vmatpush1.msra.mxu0 0.0
          %2350 = vmatprep.subr.mxu0 0.0
          %2351 = vmatpush1.msra.mxu0 0.0
          %2352 = vmatprep.subr.mxu0 0.0
          %2353 = vmatpush1.msra.mxu0 0.0
          %2354 = vmatprep.subr.mxu0 0.0
          %2355 = vmatpush1.msra.mxu0 0.0
          %2356 = vmatprep.subr.mxu0 0.0
          %2357 = vmatpush1.msra.mxu0 0.0
          %2358 = vmatprep.subr.mxu0 0.0
          %2359 = vmatpush1.msra.mxu0 0.0
          %2360 = vmatprep.subr.mxu0 0.0
          %2361 = vmatpush1.msra.mxu0 0.0
          %2362 = vmatprep.subr.mxu0 0.0
          %2363 = vmatpush1.msra.mxu0 0.0
          %2364 = vmatprep.subr.mxu0 0.0
          %2365 = vmatpush1.msra.mxu0 0.0
          %2366 = vmatprep.subr.mxu0 0.0
          %2367 = vmatpush1.msra.mxu0 0.0
          %2368 = vmatprep.subr.mxu0 0.0
          %2369 = vmatpush1.msra.mxu0 0.0
          %2370 = vmatprep.subr.mxu0 0.0
          %2371 = vmatpush1.msra.mxu0 0.0
          %2372 = vmatprep.subr.mxu0 0.0
          %2373 = vmatpush1.msra.mxu0 0.0
          %2374 = vmatprep.subr.mxu0 0.0
          %2375 = vmatpush1.msra.mxu0 0.0
          %2376 = vmatprep.subr.mxu0 0.0
          %2377 = vmatpush1.msra.mxu0 0.0
          %2378 = vmatprep.subr.mxu0 0.0
          %2379 = vmatpush1.msra.mxu0 0.0
          %2380 = vmatprep.subr.mxu0 0.0
          %2381 = vmatpush1.msra.mxu0 0.0
          %2382 = vmatprep.subr.mxu0 0.0
          %2383 = vmatpush1.msra.mxu0 0.0
          %2384 = vmatprep.subr.mxu0 0.0
          %2385 = vmatpush1.msra.mxu0 0.0
          %2386 = vmatprep.subr.mxu0 0.0
          %2387 = vmatpush1.msra.mxu0 0.0
          %2388 = vmatprep.subr.mxu0 0.0
          %2389 = vmatpush1.msra.mxu0 0.0
          %2390 = vmatprep.subr.mxu0 0.0
          %2391 = vmatpush1.msra.mxu0 0.0
          %2392 = vmatprep.mubr.f32.mxu0 0.0
          %2393 = vmatmul.mubr.f32.gmra.mrb[0].mxu0 %v2326
          %v2394 = vpop.f32.mrb[0].mxu0
          %v2395 = vadd.f32 0.0, %v2394
          %v2396 = vpop.f32.mrb[0].mxu0
          %2397 = vdwg.mxu0
          %v2398 = vmul.f32 %v2292, %v2292
          %v2399 = vmul.f32 %v2293, %v2293
          %v2400 = vmul.f32 %v2294, %v2294
          %v2401 = vmul.f32 %v2295, %v2295
          %v2402 = vmul.f32 %v2296, %v2296
          %v2403 = vmul.f32 %v2297, %v2297
          %v2404 = vmul.f32 %v2298, %v2298
          %v2405 = vmul.f32 %v2299, %v2299
          %v2414 = vrot.slane %v2399, 7
          %v2415 = vsel %vm467, %v2414, %v2398
          %v2416 = vrot.slane %v2400, 6
          %v2417 = vsel %vm470, %v2416, %v2415
          %v2418 = vrot.slane %v2401, 5
          %v2419 = vsel %vm473, %v2418, %v2417
          %v2420 = vrot.slane %v2402, 4
          %v2421 = vsel %vm476, %v2420, %v2419
          %v2422 = vrot.slane %v2403, 3
          %v2423 = vsel %vm479, %v2422, %v2421
          %v2424 = vrot.slane %v2404, 2
          %v2425 = vsel %vm482, %v2424, %v2423
          %v2426 = vrot.slane %v2405, 1
          %v2427 = vsel %vm485, %v2426, %v2425
          %v2429 = vsel %vm487, %v2427, 0.0
          %2430 = vadd.xlane.f32.xlu0 %v2429
          %v2431 = vpop.xlane.xlu0 %2430
          %v2432 = vmul.f32 %v2431, 0.5
          %v2433 = vsub.f32 %v2395, %v2432
          %v2434 = vmul.f32 %v2433, 1.442695
          %v2435 = vpow.pop %v2434
          %v2436 = vld [vmem:[#allocation3] sm:$0x1]
          %v2438 = vlaneseq
          %v2439 = vshrl.u32 %v2438, 7
          %v2440 = vsub.s32 0, %v2439
          %v2441 = vrot.slane %v2436, %v2440
          %v2443 = vmul.f32 %v2435, %v2441
          %2444 = vadd.xlane.f32.xlu0 %v2443
          %v2445 = vpop.xlane.xlu0 %2444
          %v2446 = vld [vmem:[#allocation2] sm:$0xff]
          %v2447 = vld [vmem:[#allocation2 + $0x8] sm:$0xff]
          %v2448 = vld [vmem:[#allocation2 + $0x10] sm:$0xff]
          %v2449 = vld [vmem:[#allocation2 + $0x18] sm:$0xff]
          %v2450 = vld [vmem:[#allocation2 + $0x20] sm:$0xff]
          %v2451 = vld [vmem:[#allocation2 + $0x28] sm:$0xff]
          %v2452 = vld [vmem:[#allocation2 + $0x30] sm:$0xff]
          %v2453 = vld [vmem:[#allocation2 + $0x38] sm:$0xff]
          %v2454 = vld [vmem:[#allocation2 + $0x40] sm:$0xff]
          %v2455 = vld [vmem:[#allocation2 + $0x48] sm:$0xff]
          %v2456 = vld [vmem:[#allocation2 + $0x50] sm:$0xff]
          %v2457 = vld [vmem:[#allocation2 + $0x58] sm:$0xff]
          %v2458 = vld [vmem:[#allocation2 + $0x60] sm:$0xff]
          %v2459 = vld [vmem:[#allocation2 + $0x68] sm:$0xff]
          %v2460 = vld [vmem:[#allocation2 + $0x70] sm:$0xff]
          %v2461 = vld [vmem:[#allocation2 + $0x78] sm:$0xff]
          %2462 = vmatprep.subr.mxu0 0.0
          %2463 = vmatpush1.msra.mxu0 %v2446
          %2464 = vmatprep.subr.mxu0 0.0
          %2465 = vmatpush1.msra.mxu0 %v2447
          %2466 = vmatprep.subr.mxu0 0.0
          %2467 = vmatpush1.msra.mxu0 %v2448
          %2468 = vmatprep.subr.mxu0 0.0
          %2469 = vmatpush1.msra.mxu0 %v2449
          %2470 = vmatprep.subr.mxu0 0.0
          %2471 = vmatpush1.msra.mxu0 %v2450
          %2472 = vmatprep.subr.mxu0 0.0
          %2473 = vmatpush1.msra.mxu0 %v2451
          %2474 = vmatprep.subr.mxu0 0.0
          %2475 = vmatpush1.msra.mxu0 %v2452
          %2476 = vmatprep.subr.mxu0 0.0
          %2477 = vmatpush1.msra.mxu0 %v2453
          %2478 = vmatprep.subr.mxu0 0.0
          %2479 = vmatpush1.msra.mxu0 %v2454
          %2480 = vmatprep.subr.mxu0 0.0
          %2481 = vmatpush1.msra.mxu0 %v2455
          %2482 = vmatprep.subr.mxu0 0.0
          %2483 = vmatpush1.msra.mxu0 %v2456
          %2484 = vmatprep.subr.mxu0 0.0
          %2485 = vmatpush1.msra.mxu0 %v2457
          %2486 = vmatprep.subr.mxu0 0.0
          %2487 = vmatpush1.msra.mxu0 %v2458
          %2488 = vmatprep.subr.mxu0 0.0
          %2489 = vmatpush1.msra.mxu0 %v2459
          %2490 = vmatprep.subr.mxu0 0.0
          %2491 = vmatpush1.msra.mxu0 %v2460
          %2492 = vmatprep.subr.mxu0 0.0
          %2493 = vmatpush1.msra.mxu0 %v2461
          %2494 = vmatprep.subr.mxu0 0.0
          %2495 = vmatpush1.msra.mxu0 0.0
          %2496 = vmatprep.subr.mxu0 0.0
          %2497 = vmatpush1.msra.mxu0 0.0
          %2498 = vmatprep.subr.mxu0 0.0
          %2499 = vmatpush1.msra.mxu0 0.0
          %2500 = vmatprep.subr.mxu0 0.0
          %2501 = vmatpush1.msra.mxu0 0.0
          %2502 = vmatprep.subr.mxu0 0.0
          %2503 = vmatpush1.msra.mxu0 0.0
          %2504 = vmatprep.subr.mxu0 0.0
          %2505 = vmatpush1.msra.mxu0 0.0
          %2506 = vmatprep.subr.mxu0 0.0
          %2507 = vmatpush1.msra.mxu0 0.0
          %2508 = vmatprep.subr.mxu0 0.0
          %2509 = vmatpush1.msra.mxu0 0.0
          %2510 = vmatprep.subr.mxu0 0.0
          %2511 = vmatpush1.msra.mxu0 0.0
          %2512 = vmatprep.subr.mxu0 0.0
          %2513 = vmatpush1.msra.mxu0 0.0
          %2514 = vmatprep.subr.mxu0 0.0
          %2515 = vmatpush1.msra.mxu0 0.0
          %2516 = vmatprep.subr.mxu0 0.0
          %2517 = vmatpush1.msra.mxu0 0.0
          %2518 = vmatprep.subr.mxu0 0.0
          %2519 = vmatpush1.msra.mxu0 0.0
          %2520 = vmatprep.subr.mxu0 0.0
          %2521 = vmatpush1.msra.mxu0 0.0
          %2522 = vmatprep.subr.mxu0 0.0
          %2523 = vmatpush1.msra.mxu0 0.0
          %2524 = vmatprep.subr.mxu0 0.0
          %2525 = vmatpush1.msra.mxu0 0.0
          %2526 = vmatprep.mubr.f32.mxu0 0.0
          %2527 = vmatmul.mubr.f32.gmra.mrb[0].mxu0 %v2435
          %v2528 = vpop.f32.mrb[0].mxu0
          %v2529 = vadd.f32 0.0, %v2528
          %v2530 = vpop.f32.mrb[0].mxu0
          %2531 = vdwg.mxu0
          %v2532 = vrcp.pop %v2445
          %v2533 = vmul.f32 %v2529, %v2532
          %2534 = vst.msk [vmem:[%s352] sm:$0xff] %vm487, %v2533
          %v2535 = vld [vmem:[%s286 + $0x1] sm:$0x1]
          %v2536 = vld [vmem:[%s286 + $0x5] sm:$0x1]
          %v2537 = vld [vmem:[%s286 + $0x9] sm:$0x1]
          %v2538 = vld [vmem:[%s286 + $0xd] sm:$0x1]
          %v2539 = vld [vmem:[%s286 + $0x11] sm:$0x1]
          %v2540 = vld [vmem:[%s286 + $0x15] sm:$0x1]
          %v2541 = vld [vmem:[%s286 + $0x19] sm:$0x1]
          %v2542 = vld [vmem:[%s286 + $0x1d] sm:$0x1]
          %v2543 = vld [vmem:[%s921] sm:$0xff]
          %v2544 = vld [vmem:[%s921 + $0x8] sm:$0xff]
          %v2545 = vld [vmem:[%s921 + $0x10] sm:$0xff]
          %v2546 = vld [vmem:[%s921 + $0x18] sm:$0xff]
          %v2555 = vrot.slane %v2536, 7
          %v2556 = vsel %vm467, %v2555, %v2535
          %v2557 = vrot.slane %v2537, 6
          %v2558 = vsel %vm470, %v2557, %v2556
          %v2559 = vrot.slane %v2538, 5
          %v2560 = vsel %vm473, %v2559, %v2558
          %v2561 = vrot.slane %v2539, 4
          %v2562 = vsel %vm476, %v2561, %v2560
          %v2563 = vrot.slane %v2540, 3
          %v2564 = vsel %vm479, %v2563, %v2562
          %v2565 = vrot.slane %v2541, 2
          %v2566 = vsel %vm482, %v2565, %v2564
          %v2567 = vrot.slane %v2542, 1
          %v2568 = vsel %vm485, %v2567, %v2566
          %v2569 = vsel %vm487, %v2568, 0
          %2571 = vmatprep.subr.mxu0 0.0
          %2572 = vmatpush1.msra.mxu0 %v2543
          %2573 = vmatprep.subr.mxu0 0.0
          %2574 = vmatpush1.msra.mxu0 %v2544
          %2575 = vmatprep.subr.mxu0 0.0
          %2576 = vmatpush1.msra.mxu0 %v2545
          %2577 = vmatprep.subr.mxu0 0.0
          %2578 = vmatpush1.msra.mxu0 %v2546
          %2579 = vmatprep.subr.mxu0 0.0
          %2580 = vmatpush1.msra.mxu0 0.0
          %2581 = vmatprep.subr.mxu0 0.0
          %2582 = vmatpush1.msra.mxu0 0.0
          %2583 = vmatprep.subr.mxu0 0.0
          %2584 = vmatpush1.msra.mxu0 0.0
          %2585 = vmatprep.subr.mxu0 0.0
          %2586 = vmatpush1.msra.mxu0 0.0
          %2587 = vmatprep.subr.mxu0 0.0
          %2588 = vmatpush1.msra.mxu0 0.0
          %2589 = vmatprep.subr.mxu0 0.0
          %2590 = vmatpush1.msra.mxu0 0.0
          %2591 = vmatprep.subr.mxu0 0.0
          %2592 = vmatpush1.msra.mxu0 0.0
          %2593 = vmatprep.subr.mxu0 0.0
          %2594 = vmatpush1.msra.mxu0 0.0
          %2595 = vmatprep.subr.mxu0 0.0
          %2596 = vmatpush1.msra.mxu0 0.0
          %2597 = vmatprep.subr.mxu0 0.0
          %2598 = vmatpush1.msra.mxu0 0.0
          %2599 = vmatprep.subr.mxu0 0.0
          %2600 = vmatpush1.msra.mxu0 0.0
          %2601 = vmatprep.subr.mxu0 0.0
          %2602 = vmatpush1.msra.mxu0 0.0
          %2603 = vmatprep.subr.mxu0 0.0
          %2604 = vmatpush1.msra.mxu0 0.0
          %2605 = vmatprep.subr.mxu0 0.0
          %2606 = vmatpush1.msra.mxu0 0.0
          %2607 = vmatprep.subr.mxu0 0.0
          %2608 = vmatpush1.msra.mxu0 0.0
          %2609 = vmatprep.subr.mxu0 0.0
          %2610 = vmatpush1.msra.mxu0 0.0
          %2611 = vmatprep.subr.mxu0 0.0
          %2612 = vmatpush1.msra.mxu0 0.0
          %2613 = vmatprep.subr.mxu0 0.0
          %2614 = vmatpush1.msra.mxu0 0.0
          %2615 = vmatprep.subr.mxu0 0.0
          %2616 = vmatpush1.msra.mxu0 0.0
          %2617 = vmatprep.subr.mxu0 0.0
          %2618 = vmatpush1.msra.mxu0 0.0
          %2619 = vmatprep.subr.mxu0 0.0
          %2620 = vmatpush1.msra.mxu0 0.0
          %2621 = vmatprep.subr.mxu0 0.0
          %2622 = vmatpush1.msra.mxu0 0.0
          %2623 = vmatprep.subr.mxu0 0.0
          %2624 = vmatpush1.msra.mxu0 0.0
          %2625 = vmatprep.subr.mxu0 0.0
          %2626 = vmatpush1.msra.mxu0 0.0
          %2627 = vmatprep.subr.mxu0 0.0
          %2628 = vmatpush1.msra.mxu0 0.0
          %2629 = vmatprep.subr.mxu0 0.0
          %2630 = vmatpush1.msra.mxu0 0.0
          %2631 = vmatprep.subr.mxu0 0.0
          %2632 = vmatpush1.msra.mxu0 0.0
          %2633 = vmatprep.subr.mxu0 0.0
          %2634 = vmatpush1.msra.mxu0 0.0
          %2635 = vmatprep.mubr.f32.mxu0 0.0
          %2636 = vmatmul.mubr.f32.gmra.mrb[0].mxu0 %v2569
          %v2637 = vpop.f32.mrb[0].mxu0
          %v2638 = vadd.f32 0.0, %v2637
          %v2639 = vpop.f32.mrb[0].mxu0
          %2640 = vdwg.mxu0
          %v2641 = vmul.f32 %v2535, %v2535
          %v2642 = vmul.f32 %v2536, %v2536
          %v2643 = vmul.f32 %v2537, %v2537
          %v2644 = vmul.f32 %v2538, %v2538
          %v2645 = vmul.f32 %v2539, %v2539
          %v2646 = vmul.f32 %v2540, %v2540
          %v2647 = vmul.f32 %v2541, %v2541
          %v2648 = vmul.f32 %v2542, %v2542
          %v2657 = vrot.slane %v2642, 7
          %v2658 = vsel %vm467, %v2657, %v2641
          %v2659 = vrot.slane %v2643, 6
          %v2660 = vsel %vm470, %v2659, %v2658
          %v2661 = vrot.slane %v2644, 5
          %v2662 = vsel %vm473, %v2661, %v2660
          %v2663 = vrot.slane %v2645, 4
          %v2664 = vsel %vm476, %v2663, %v2662
          %v2665 = vrot.slane %v2646, 3
          %v2666 = vsel %vm479, %v2665, %v2664
          %v2667 = vrot.slane %v2647, 2
          %v2668 = vsel %vm482, %v2667, %v2666
          %v2669 = vrot.slane %v2648, 1
          %v2670 = vsel %vm485, %v2669, %v2668
          %v2672 = vsel %vm487, %v2670, 0.0
          %2673 = vadd.xlane.f32.xlu0 %v2672
          %v2674 = vpop.xlane.xlu0 %2673
          %v2675 = vmul.f32 %v2674, 0.5
          %v2676 = vsub.f32 %v2638, %v2675
          %v2677 = vmul.f32 %v2676, 1.442695
          %v2678 = vpow.pop %v2677
          %v2679 = vld [vmem:[%s1356] sm:$0x1]
          %v2681 = vlaneseq
          %v2682 = vshrl.u32 %v2681, 7
          %v2683 = vsub.s32 0, %v2682
          %v2684 = vrot.slane %v2679, %v2683
          %v2686 = vmul.f32 %v2678, %v2684
          %2687 = vadd.xlane.f32.xlu0 %v2686
          %v2688 = vpop.xlane.xlu0 %2687
          %v2689 = vld [vmem:[%s1059] sm:$0xff]
          %v2690 = vld [vmem:[%s1059 + $0x8] sm:$0xff]
          %v2691 = vld [vmem:[%s1059 + $0x10] sm:$0xff]
          %v2692 = vld [vmem:[%s1059 + $0x18] sm:$0xff]
          %v2693 = vld [vmem:[%s1059 + $0x20] sm:$0xff]
          %v2694 = vld [vmem:[%s1059 + $0x28] sm:$0xff]
          %v2695 = vld [vmem:[%s1059 + $0x30] sm:$0xff]
          %v2696 = vld [vmem:[%s1059 + $0x38] sm:$0xff]
          %v2697 = vld [vmem:[%s1059 + $0x40] sm:$0xff]
          %v2698 = vld [vmem:[%s1059 + $0x48] sm:$0xff]
          %v2699 = vld [vmem:[%s1059 + $0x50] sm:$0xff]
          %v2700 = vld [vmem:[%s1059 + $0x58] sm:$0xff]
          %v2701 = vld [vmem:[%s1059 + $0x60] sm:$0xff]
          %v2702 = vld [vmem:[%s1059 + $0x68] sm:$0xff]
          %v2703 = vld [vmem:[%s1059 + $0x70] sm:$0xff]
          %v2704 = vld [vmem:[%s1059 + $0x78] sm:$0xff]
          %2705 = vmatprep.subr.mxu0 0.0
          %2706 = vmatpush1.msra.mxu0 %v2689
          %2707 = vmatprep.subr.mxu0 0.0
          %2708 = vmatpush1.msra.mxu0 %v2690
          %2709 = vmatprep.subr.mxu0 0.0
          %2710 = vmatpush1.msra.mxu0 %v2691
          %2711 = vmatprep.subr.mxu0 0.0
          %2712 = vmatpush1.msra.mxu0 %v2692
          %2713 = vmatprep.subr.mxu0 0.0
          %2714 = vmatpush1.msra.mxu0 %v2693
          %2715 = vmatprep.subr.mxu0 0.0
          %2716 = vmatpush1.msra.mxu0 %v2694
          %2717 = vmatprep.subr.mxu0 0.0
          %2718 = vmatpush1.msra.mxu0 %v2695
          %2719 = vmatprep.subr.mxu0 0.0
          %2720 = vmatpush1.msra.mxu0 %v2696
          %2721 = vmatprep.subr.mxu0 0.0
          %2722 = vmatpush1.msra.mxu0 %v2697
          %2723 = vmatprep.subr.mxu0 0.0
          %2724 = vmatpush1.msra.mxu0 %v2698
          %2725 = vmatprep.subr.mxu0 0.0
          %2726 = vmatpush1.msra.mxu0 %v2699
          %2727 = vmatprep.subr.mxu0 0.0
          %2728 = vmatpush1.msra.mxu0 %v2700
          %2729 = vmatprep.subr.mxu0 0.0
          %2730 = vmatpush1.msra.mxu0 %v2701
          %2731 = vmatprep.subr.mxu0 0.0
          %2732 = vmatpush1.msra.mxu0 %v2702
          %2733 = vmatprep.subr.mxu0 0.0
          %2734 = vmatpush1.msra.mxu0 %v2703
          %2735 = vmatprep.subr.mxu0 0.0
          %2736 = vmatpush1.msra.mxu0 %v2704
          %2737 = vmatprep.subr.mxu0 0.0
          %2738 = vmatpush1.msra.mxu0 0.0
          %2739 = vmatprep.subr.mxu0 0.0
          %2740 = vmatpush1.msra.mxu0 0.0
          %2741 = vmatprep.subr.mxu0 0.0
          %2742 = vmatpush1.msra.mxu0 0.0
          %2743 = vmatprep.subr.mxu0 0.0
          %2744 = vmatpush1.msra.mxu0 0.0
          %2745 = vmatprep.subr.mxu0 0.0
          %2746 = vmatpush1.msra.mxu0 0.0
          %2747 = vmatprep.subr.mxu0 0.0
          %2748 = vmatpush1.msra.mxu0 0.0
          %2749 = vmatprep.subr.mxu0 0.0
          %2750 = vmatpush1.msra.mxu0 0.0
          %2751 = vmatprep.subr.mxu0 0.0
          %2752 = vmatpush1.msra.mxu0 0.0
          %2753 = vmatprep.subr.mxu0 0.0
          %2754 = vmatpush1.msra.mxu0 0.0
          %2755 = vmatprep.subr.mxu0 0.0
          %2756 = vmatpush1.msra.mxu0 0.0
          %2757 = vmatprep.subr.mxu0 0.0
          %2758 = vmatpush1.msra.mxu0 0.0
          %2759 = vmatprep.subr.mxu0 0.0
          %2760 = vmatpush1.msra.mxu0 0.0
          %2761 = vmatprep.subr.mxu0 0.0
          %2762 = vmatpush1.msra.mxu0 0.0
          %2763 = vmatprep.subr.mxu0 0.0
          %2764 = vmatpush1.msra.mxu0 0.0
          %2765 = vmatprep.subr.mxu0 0.0
          %2766 = vmatpush1.msra.mxu0 0.0
          %2767 = vmatprep.subr.mxu0 0.0
          %2768 = vmatpush1.msra.mxu0 0.0
          %2769 = vmatprep.mubr.f32.mxu0 0.0
          %2770 = vmatmul.mubr.f32.gmra.mrb[0].mxu0 %v2678
          %v2771 = vpop.f32.mrb[0].mxu0
          %v2772 = vadd.f32 0.0, %v2771
          %v2773 = vpop.f32.mrb[0].mxu0
          %2774 = vdwg.mxu0
          %v2775 = vrcp.pop %v2688
          %v2776 = vmul.f32 %v2772, %v2775
          %s2777 = scalar_lea.vmem %s352, 8 [#allocation12]
          %2778 = vst.msk [vmem:[%s2777] sm:$0xff] %vm487, %v2776
          %v2779 = vld [vmem:[%s286 + $0x2] sm:$0x1]
          %v2780 = vld [vmem:[%s286 + $0x6] sm:$0x1]
          %v2781 = vld [vmem:[%s286 + $0xa] sm:$0x1]
          %v2782 = vld [vmem:[%s286 + $0xe] sm:$0x1]
          %v2783 = vld [vmem:[%s286 + $0x12] sm:$0x1]
          %v2784 = vld [vmem:[%s286 + $0x16] sm:$0x1]
          %v2785 = vld [vmem:[%s286 + $0x1a] sm:$0x1]
          %v2786 = vld [vmem:[%s286 + $0x1e] sm:$0x1]
          %v2787 = vld [vmem:[%s1382] sm:$0xff]
          %v2788 = vld [vmem:[%s1382 + $0x8] sm:$0xff]
          %v2789 = vld [vmem:[%s1382 + $0x10] sm:$0xff]
          %v2790 = vld [vmem:[%s1382 + $0x18] sm:$0xff]
          %v2799 = vrot.slane %v2780, 7
          %v2800 = vsel %vm467, %v2799, %v2779
          %v2801 = vrot.slane %v2781, 6
          %v2802 = vsel %vm470, %v2801, %v2800
          %v2803 = vrot.slane %v2782, 5
          %v2804 = vsel %vm473, %v2803, %v2802
          %v2805 = vrot.slane %v2783, 4
          %v2806 = vsel %vm476, %v2805, %v2804
          %v2807 = vrot.slane %v2784, 3
          %v2808 = vsel %vm479, %v2807, %v2806
          %v2809 = vrot.slane %v2785, 2
          %v2810 = vsel %vm482, %v2809, %v2808
          %v2811 = vrot.slane %v2786, 1
          %v2812 = vsel %vm485, %v2811, %v2810
          %v2813 = vsel %vm487, %v2812, 0
          %2815 = vmatprep.subr.mxu0 0.0
          %2816 = vmatpush1.msra.mxu0 %v2787
          %2817 = vmatprep.subr.mxu0 0.0
          %2818 = vmatpush1.msra.mxu0 %v2788
          %2819 = vmatprep.subr.mxu0 0.0
          %2820 = vmatpush1.msra.mxu0 %v2789
          %2821 = vmatprep.subr.mxu0 0.0
          %2822 = vmatpush1.msra.mxu0 %v2790
          %2823 = vmatprep.subr.mxu0 0.0
          %2824 = vmatpush1.msra.mxu0 0.0
          %2825 = vmatprep.subr.mxu0 0.0
          %2826 = vmatpush1.msra.mxu0 0.0
          %2827 = vmatprep.subr.mxu0 0.0
          %2828 = vmatpush1.msra.mxu0 0.0
          %2829 = vmatprep.subr.mxu0 0.0
          %2830 = vmatpush1.msra.mxu0 0.0
          %2831 = vmatprep.subr.mxu0 0.0
          %2832 = vmatpush1.msra.mxu0 0.0
          %2833 = vmatprep.subr.mxu0 0.0
          %2834 = vmatpush1.msra.mxu0 0.0
          %2835 = vmatprep.subr.mxu0 0.0
          %2836 = vmatpush1.msra.mxu0 0.0
          %2837 = vmatprep.subr.mxu0 0.0
          %2838 = vmatpush1.msra.mxu0 0.0
          %2839 = vmatprep.subr.mxu0 0.0
          %2840 = vmatpush1.msra.mxu0 0.0
          %2841 = vmatprep.subr.mxu0 0.0
          %2842 = vmatpush1.msra.mxu0 0.0
          %2843 = vmatprep.subr.mxu0 0.0
          %2844 = vmatpush1.msra.mxu0 0.0
          %2845 = vmatprep.subr.mxu0 0.0
          %2846 = vmatpush1.msra.mxu0 0.0
          %2847 = vmatprep.subr.mxu0 0.0
          %2848 = vmatpush1.msra.mxu0 0.0
          %2849 = vmatprep.subr.mxu0 0.0
          %2850 = vmatpush1.msra.mxu0 0.0
          %2851 = vmatprep.subr.mxu0 0.0
          %2852 = vmatpush1.msra.mxu0 0.0
          %2853 = vmatprep.subr.mxu0 0.0
          %2854 = vmatpush1.msra.mxu0 0.0
          %2855 = vmatprep.subr.mxu0 0.0
          %2856 = vmatpush1.msra.mxu0 0.0
          %2857 = vmatprep.subr.mxu0 0.0
          %2858 = vmatpush1.msra.mxu0 0.0
          %2859 = vmatprep.subr.mxu0 0.0
          %2860 = vmatpush1.msra.mxu0 0.0
          %2861 = vmatprep.subr.mxu0 0.0
          %2862 = vmatpush1.msra.mxu0 0.0
          %2863 = vmatprep.subr.mxu0 0.0
          %2864 = vmatpush1.msra.mxu0 0.0
          %2865 = vmatprep.subr.mxu0 0.0
          %2866 = vmatpush1.msra.mxu0 0.0
          %2867 = vmatprep.subr.mxu0 0.0
          %2868 = vmatpush1.msra.mxu0 0.0
          %2869 = vmatprep.subr.mxu0 0.0
          %2870 = vmatpush1.msra.mxu0 0.0
          %2871 = vmatprep.subr.mxu0 0.0
          %2872 = vmatpush1.msra.mxu0 0.0
          %2873 = vmatprep.subr.mxu0 0.0
          %2874 = vmatpush1.msra.mxu0 0.0
          %2875 = vmatprep.subr.mxu0 0.0
          %2876 = vmatpush1.msra.mxu0 0.0
          %2877 = vmatprep.subr.mxu0 0.0
          %2878 = vmatpush1.msra.mxu0 0.0
          %2879 = vmatprep.mubr.f32.mxu0 0.0
          %2880 = vmatmul.mubr.f32.gmra.mrb[0].mxu0 %v2813
          %v2881 = vpop.f32.mrb[0].mxu0
          %v2882 = vadd.f32 0.0, %v2881
          %v2883 = vpop.f32.mrb[0].mxu0
          %2884 = vdwg.mxu0
          %v2885 = vmul.f32 %v2779, %v2779
          %v2886 = vmul.f32 %v2780, %v2780
          %v2887 = vmul.f32 %v2781, %v2781
          %v2888 = vmul.f32 %v2782, %v2782
          %v2889 = vmul.f32 %v2783, %v2783
          %v2890 = vmul.f32 %v2784, %v2784
          %v2891 = vmul.f32 %v2785, %v2785
          %v2892 = vmul.f32 %v2786, %v2786
          %v2901 = vrot.slane %v2886, 7
          %v2902 = vsel %vm467, %v2901, %v2885
          %v2903 = vrot.slane %v2887, 6
          %v2904 = vsel %vm470, %v2903, %v2902
          %v2905 = vrot.slane %v2888, 5
          %v2906 = vsel %vm473, %v2905, %v2904
          %v2907 = vrot.slane %v2889, 4
          %v2908 = vsel %vm476, %v2907, %v2906
          %v2909 = vrot.slane %v2890, 3
          %v2910 = vsel %vm479, %v2909, %v2908
          %v2911 = vrot.slane %v2891, 2
          %v2912 = vsel %vm482, %v2911, %v2910
          %v2913 = vrot.slane %v2892, 1
          %v2914 = vsel %vm485, %v2913, %v2912
          %v2916 = vsel %vm487, %v2914, 0.0
          %2917 = vadd.xlane.f32.xlu0 %v2916
          %v2918 = vpop.xlane.xlu0 %2917
          %v2919 = vmul.f32 %v2918, 0.5
          %v2920 = vsub.f32 %v2882, %v2919
          %v2921 = vmul.f32 %v2920, 1.442695
          %v2922 = vpow.pop %v2921
          %v2923 = vld [vmem:[%s1817] sm:$0x1]
          %v2925 = vlaneseq
          %v2926 = vshrl.u32 %v2925, 7
          %v2927 = vsub.s32 0, %v2926
          %v2928 = vrot.slane %v2923, %v2927
          %v2930 = vmul.f32 %v2922, %v2928
          %2931 = vadd.xlane.f32.xlu0 %v2930
          %v2932 = vpop.xlane.xlu0 %2931
          %v2933 = vld [vmem:[%s1520] sm:$0xff]
          %v2934 = vld [vmem:[%s1520 + $0x8] sm:$0xff]
          %v2935 = vld [vmem:[%s1520 + $0x10] sm:$0xff]
          %v2936 = vld [vmem:[%s1520 + $0x18] sm:$0xff]
          %v2937 = vld [vmem:[%s1520 + $0x20] sm:$0xff]
          %v2938 = vld [vmem:[%s1520 + $0x28] sm:$0xff]
          %v2939 = vld [vmem:[%s1520 + $0x30] sm:$0xff]
          %v2940 = vld [vmem:[%s1520 + $0x38] sm:$0xff]
          %v2941 = vld [vmem:[%s1520 + $0x40] sm:$0xff]
          %v2942 = vld [vmem:[%s1520 + $0x48] sm:$0xff]
          %v2943 = vld [vmem:[%s1520 + $0x50] sm:$0xff]
          %v2944 = vld [vmem:[%s1520 + $0x58] sm:$0xff]
          %v2945 = vld [vmem:[%s1520 + $0x60] sm:$0xff]
          %v2946 = vld [vmem:[%s1520 + $0x68] sm:$0xff]
          %v2947 = vld [vmem:[%s1520 + $0x70] sm:$0xff]
          %v2948 = vld [vmem:[%s1520 + $0x78] sm:$0xff]
          %2949 = vmatprep.subr.mxu0 0.0
          %2950 = vmatpush1.msra.mxu0 %v2933
          %2951 = vmatprep.subr.mxu0 0.0
          %2952 = vmatpush1.msra.mxu0 %v2934
          %2953 = vmatprep.subr.mxu0 0.0
          %2954 = vmatpush1.msra.mxu0 %v2935
          %2955 = vmatprep.subr.mxu0 0.0
          %2956 = vmatpush1.msra.mxu0 %v2936
          %2957 = vmatprep.subr.mxu0 0.0
          %2958 = vmatpush1.msra.mxu0 %v2937
          %2959 = vmatprep.subr.mxu0 0.0
          %2960 = vmatpush1.msra.mxu0 %v2938
          %2961 = vmatprep.subr.mxu0 0.0
          %2962 = vmatpush1.msra.mxu0 %v2939
          %2963 = vmatprep.subr.mxu0 0.0
          %2964 = vmatpush1.msra.mxu0 %v2940
          %2965 = vmatprep.subr.mxu0 0.0
          %2966 = vmatpush1.msra.mxu0 %v2941
          %2967 = vmatprep.subr.mxu0 0.0
          %2968 = vmatpush1.msra.mxu0 %v2942
          %2969 = vmatprep.subr.mxu0 0.0
          %2970 = vmatpush1.msra.mxu0 %v2943
          %2971 = vmatprep.subr.mxu0 0.0
          %2972 = vmatpush1.msra.mxu0 %v2944
          %2973 = vmatprep.subr.mxu0 0.0
          %2974 = vmatpush1.msra.mxu0 %v2945
          %2975 = vmatprep.subr.mxu0 0.0
          %2976 = vmatpush1.msra.mxu0 %v2946
          %2977 = vmatprep.subr.mxu0 0.0
          %2978 = vmatpush1.msra.mxu0 %v2947
          %2979 = vmatprep.subr.mxu0 0.0
          %2980 = vmatpush1.msra.mxu0 %v2948
          %2981 = vmatprep.subr.mxu0 0.0
          %2982 = vmatpush1.msra.mxu0 0.0
          %2983 = vmatprep.subr.mxu0 0.0
          %2984 = vmatpush1.msra.mxu0 0.0
          %2985 = vmatprep.subr.mxu0 0.0
          %2986 = vmatpush1.msra.mxu0 0.0
          %2987 = vmatprep.subr.mxu0 0.0
          %2988 = vmatpush1.msra.mxu0 0.0
          %2989 = vmatprep.subr.mxu0 0.0
          %2990 = vmatpush1.msra.mxu0 0.0
          %2991 = vmatprep.subr.mxu0 0.0
          %2992 = vmatpush1.msra.mxu0 0.0
          %2993 = vmatprep.subr.mxu0 0.0
          %2994 = vmatpush1.msra.mxu0 0.0
          %2995 = vmatprep.subr.mxu0 0.0
          %2996 = vmatpush1.msra.mxu0 0.0
          %2997 = vmatprep.subr.mxu0 0.0
          %2998 = vmatpush1.msra.mxu0 0.0
          %2999 = vmatprep.subr.mxu0 0.0
          %3000 = vmatpush1.msra.mxu0 0.0
          %3001 = vmatprep.subr.mxu0 0.0
          %3002 = vmatpush1.msra.mxu0 0.0
          %3003 = vmatprep.subr.mxu0 0.0
          %3004 = vmatpush1.msra.mxu0 0.0
          %3005 = vmatprep.subr.mxu0 0.0
          %3006 = vmatpush1.msra.mxu0 0.0
          %3007 = vmatprep.subr.mxu0 0.0
          %3008 = vmatpush1.msra.mxu0 0.0
          %3009 = vmatprep.subr.mxu0 0.0
          %3010 = vmatpush1.msra.mxu0 0.0
          %3011 = vmatprep.subr.mxu0 0.0
          %3012 = vmatpush1.msra.mxu0 0.0
          %3013 = vmatprep.mubr.f32.mxu0 0.0
          %3014 = vmatmul.mubr.f32.gmra.mrb[0].mxu0 %v2922
          %v3015 = vpop.f32.mrb[0].mxu0
          %v3016 = vadd.f32 0.0, %v3015
          %v3017 = vpop.f32.mrb[0].mxu0
          %3018 = vdwg.mxu0
          %v3019 = vrcp.pop %v2932
          %v3020 = vmul.f32 %v3016, %v3019
          %s3021 = scalar_lea.vmem %s352, 16 [#allocation12]
          %3022 = vst.msk [vmem:[%s3021] sm:$0xff] %vm487, %v3020
          %v3023 = vld [vmem:[%s286 + $0x3] sm:$0x1]
          %v3024 = vld [vmem:[%s286 + $0x7] sm:$0x1]
          %v3025 = vld [vmem:[%s286 + $0xb] sm:$0x1]
          %v3026 = vld [vmem:[%s286 + $0xf] sm:$0x1]
          %v3027 = vld [vmem:[%s286 + $0x13] sm:$0x1]
          %v3028 = vld [vmem:[%s286 + $0x17] sm:$0x1]
          %v3029 = vld [vmem:[%s286 + $0x1b] sm:$0x1]
          %v3030 = vld [vmem:[%s286 + $0x1f] sm:$0x1]
          %v3031 = vld [vmem:[%s1843] sm:$0xff]
          %v3032 = vld [vmem:[%s1843 + $0x8] sm:$0xff]
          %v3033 = vld [vmem:[%s1843 + $0x10] sm:$0xff]
          %v3034 = vld [vmem:[%s1843 + $0x18] sm:$0xff]
          %v3043 = vrot.slane %v3024, 7
          %v3044 = vsel %vm467, %v3043, %v3023
          %v3045 = vrot.slane %v3025, 6
          %v3046 = vsel %vm470, %v3045, %v3044
          %v3047 = vrot.slane %v3026, 5
          %v3048 = vsel %vm473, %v3047, %v3046
          %v3049 = vrot.slane %v3027, 4
          %v3050 = vsel %vm476, %v3049, %v3048
          %v3051 = vrot.slane %v3028, 3
          %v3052 = vsel %vm479, %v3051, %v3050
          %v3053 = vrot.slane %v3029, 2
          %v3054 = vsel %vm482, %v3053, %v3052
          %v3055 = vrot.slane %v3030, 1
          %v3056 = vsel %vm485, %v3055, %v3054
          %v3057 = vsel %vm487, %v3056, 0
          %3059 = vmatprep.subr.mxu0 0.0
          %3060 = vmatpush1.msra.mxu0 %v3031
          %3061 = vmatprep.subr.mxu0 0.0
          %3062 = vmatpush1.msra.mxu0 %v3032
          %3063 = vmatprep.subr.mxu0 0.0
          %3064 = vmatpush1.msra.mxu0 %v3033
          %3065 = vmatprep.subr.mxu0 0.0
          %3066 = vmatpush1.msra.mxu0 %v3034
          %3067 = vmatprep.subr.mxu0 0.0
          %3068 = vmatpush1.msra.mxu0 0.0
          %3069 = vmatprep.subr.mxu0 0.0
          %3070 = vmatpush1.msra.mxu0 0.0
          %3071 = vmatprep.subr.mxu0 0.0
          %3072 = vmatpush1.msra.mxu0 0.0
          %3073 = vmatprep.subr.mxu0 0.0
          %3074 = vmatpush1.msra.mxu0 0.0
          %3075 = vmatprep.subr.mxu0 0.0
          %3076 = vmatpush1.msra.mxu0 0.0
          %3077 = vmatprep.subr.mxu0 0.0
          %3078 = vmatpush1.msra.mxu0 0.0
          %3079 = vmatprep.subr.mxu0 0.0
          %3080 = vmatpush1.msra.mxu0 0.0
          %3081 = vmatprep.subr.mxu0 0.0
          %3082 = vmatpush1.msra.mxu0 0.0
          %3083 = vmatprep.subr.mxu0 0.0
          %3084 = vmatpush1.msra.mxu0 0.0
          %3085 = vmatprep.subr.mxu0 0.0
          %3086 = vmatpush1.msra.mxu0 0.0
          %3087 = vmatprep.subr.mxu0 0.0
          %3088 = vmatpush1.msra.mxu0 0.0
          %3089 = vmatprep.subr.mxu0 0.0
          %3090 = vmatpush1.msra.mxu0 0.0
          %3091 = vmatprep.subr.mxu0 0.0
          %3092 = vmatpush1.msra.mxu0 0.0
          %3093 = vmatprep.subr.mxu0 0.0
          %3094 = vmatpush1.msra.mxu0 0.0
          %3095 = vmatprep.subr.mxu0 0.0
          %3096 = vmatpush1.msra.mxu0 0.0
          %3097 = vmatprep.subr.mxu0 0.0
          %3098 = vmatpush1.msra.mxu0 0.0
          %3099 = vmatprep.subr.mxu0 0.0
          %3100 = vmatpush1.msra.mxu0 0.0
          %3101 = vmatprep.subr.mxu0 0.0
          %3102 = vmatpush1.msra.mxu0 0.0
          %3103 = vmatprep.subr.mxu0 0.0
          %3104 = vmatpush1.msra.mxu0 0.0
          %3105 = vmatprep.subr.mxu0 0.0
          %3106 = vmatpush1.msra.mxu0 0.0
          %3107 = vmatprep.subr.mxu0 0.0
          %3108 = vmatpush1.msra.mxu0 0.0
          %3109 = vmatprep.subr.mxu0 0.0
          %3110 = vmatpush1.msra.mxu0 0.0
          %3111 = vmatprep.subr.mxu0 0.0
          %3112 = vmatpush1.msra.mxu0 0.0
          %3113 = vmatprep.subr.mxu0 0.0
          %3114 = vmatpush1.msra.mxu0 0.0
          %3115 = vmatprep.subr.mxu0 0.0
          %3116 = vmatpush1.msra.mxu0 0.0
          %3117 = vmatprep.subr.mxu0 0.0
          %3118 = vmatpush1.msra.mxu0 0.0
          %3119 = vmatprep.subr.mxu0 0.0
          %3120 = vmatpush1.msra.mxu0 0.0
          %3121 = vmatprep.subr.mxu0 0.0
          %3122 = vmatpush1.msra.mxu0 0.0
          %3123 = vmatprep.mubr.f32.mxu0 0.0
          %3124 = vmatmul.mubr.f32.gmra.mrb[0].mxu0 %v3057
          %v3125 = vpop.f32.mrb[0].mxu0
          %v3126 = vadd.f32 0.0, %v3125
          %v3127 = vpop.f32.mrb[0].mxu0
          %3128 = vdwg.mxu0
          %v3129 = vmul.f32 %v3023, %v3023
          %v3130 = vmul.f32 %v3024, %v3024
          %v3131 = vmul.f32 %v3025, %v3025
          %v3132 = vmul.f32 %v3026, %v3026
          %v3133 = vmul.f32 %v3027, %v3027
          %v3134 = vmul.f32 %v3028, %v3028
          %v3135 = vmul.f32 %v3029, %v3029
          %v3136 = vmul.f32 %v3030, %v3030
          %v3145 = vrot.slane %v3130, 7
          %v3146 = vsel %vm467, %v3145, %v3129
          %v3147 = vrot.slane %v3131, 6
          %v3148 = vsel %vm470, %v3147, %v3146
          %v3149 = vrot.slane %v3132, 5
          %v3150 = vsel %vm473, %v3149, %v3148
          %v3151 = vrot.slane %v3133, 4
          %v3152 = vsel %vm476, %v3151, %v3150
          %v3153 = vrot.slane %v3134, 3
          %v3154 = vsel %vm479, %v3153, %v3152
          %v3155 = vrot.slane %v3135, 2
          %v3156 = vsel %vm482, %v3155, %v3154
          %v3157 = vrot.slane %v3136, 1
          %v3158 = vsel %vm485, %v3157, %v3156
          %v3160 = vsel %vm487, %v3158, 0.0
          %3161 = vadd.xlane.f32.xlu0 %v3160
          %v3162 = vpop.xlane.xlu0 %3161
          %v3163 = vmul.f32 %v3162, 0.5
          %v3164 = vsub.f32 %v3126, %v3163
          %v3165 = vmul.f32 %v3164, 1.442695
          %v3166 = vpow.pop %v3165
          %v3167 = vld [vmem:[%s2278] sm:$0x1]
          %v3169 = vlaneseq
          %v3170 = vshrl.u32 %v3169, 7
          %v3171 = vsub.s32 0, %v3170
          %v3172 = vrot.slane %v3167, %v3171
          %v3174 = vmul.f32 %v3166, %v3172
          %3175 = vadd.xlane.f32.xlu0 %v3174
          %v3176 = vpop.xlane.xlu0 %3175
          %v3177 = vld [vmem:[%s1981] sm:$0xff]
          %v3178 = vld [vmem:[%s1981 + $0x8] sm:$0xff]
          %v3179 = vld [vmem:[%s1981 + $0x10] sm:$0xff]
          %v3180 = vld [vmem:[%s1981 + $0x18] sm:$0xff]
          %v3181 = vld [vmem:[%s1981 + $0x20] sm:$0xff]
          %v3182 = vld [vmem:[%s1981 + $0x28] sm:$0xff]
          %v3183 = vld [vmem:[%s1981 + $0x30] sm:$0xff]
          %v3184 = vld [vmem:[%s1981 + $0x38] sm:$0xff]
          %v3185 = vld [vmem:[%s1981 + $0x40] sm:$0xff]
          %v3186 = vld [vmem:[%s1981 + $0x48] sm:$0xff]
          %v3187 = vld [vmem:[%s1981 + $0x50] sm:$0xff]
          %v3188 = vld [vmem:[%s1981 + $0x58] sm:$0xff]
          %v3189 = vld [vmem:[%s1981 + $0x60] sm:$0xff]
          %v3190 = vld [vmem:[%s1981 + $0x68] sm:$0xff]
          %v3191 = vld [vmem:[%s1981 + $0x70] sm:$0xff]
          %v3192 = vld [vmem:[%s1981 + $0x78] sm:$0xff]
          %3193 = vmatprep.subr.mxu0 0.0
          %3194 = vmatpush1.msra.mxu0 %v3177
          %3195 = vmatprep.subr.mxu0 0.0
          %3196 = vmatpush1.msra.mxu0 %v3178
          %3197 = vmatprep.subr.mxu0 0.0
          %3198 = vmatpush1.msra.mxu0 %v3179
          %3199 = vmatprep.subr.mxu0 0.0
          %3200 = vmatpush1.msra.mxu0 %v3180
          %3201 = vmatprep.subr.mxu0 0.0
          %3202 = vmatpush1.msra.mxu0 %v3181
          %3203 = vmatprep.subr.mxu0 0.0
          %3204 = vmatpush1.msra.mxu0 %v3182
          %3205 = vmatprep.subr.mxu0 0.0
          %3206 = vmatpush1.msra.mxu0 %v3183
          %3207 = vmatprep.subr.mxu0 0.0
          %3208 = vmatpush1.msra.mxu0 %v3184
          %3209 = vmatprep.subr.mxu0 0.0
          %3210 = vmatpush1.msra.mxu0 %v3185
          %3211 = vmatprep.subr.mxu0 0.0
          %3212 = vmatpush1.msra.mxu0 %v3186
          %3213 = vmatprep.subr.mxu0 0.0
          %3214 = vmatpush1.msra.mxu0 %v3187
          %3215 = vmatprep.subr.mxu0 0.0
          %3216 = vmatpush1.msra.mxu0 %v3188
          %3217 = vmatprep.subr.mxu0 0.0
          %3218 = vmatpush1.msra.mxu0 %v3189
          %3219 = vmatprep.subr.mxu0 0.0
          %3220 = vmatpush1.msra.mxu0 %v3190
          %3221 = vmatprep.subr.mxu0 0.0
          %3222 = vmatpush1.msra.mxu0 %v3191
          %3223 = vmatprep.subr.mxu0 0.0
          %3224 = vmatpush1.msra.mxu0 %v3192
          %3225 = vmatprep.subr.mxu0 0.0
          %3226 = vmatpush1.msra.mxu0 0.0
          %3227 = vmatprep.subr.mxu0 0.0
          %3228 = vmatpush1.msra.mxu0 0.0
          %3229 = vmatprep.subr.mxu0 0.0
          %3230 = vmatpush1.msra.mxu0 0.0
          %3231 = vmatprep.subr.mxu0 0.0
          %3232 = vmatpush1.msra.mxu0 0.0
          %3233 = vmatprep.subr.mxu0 0.0
          %3234 = vmatpush1.msra.mxu0 0.0
          %3235 = vmatprep.subr.mxu0 0.0
          %3236 = vmatpush1.msra.mxu0 0.0
          %3237 = vmatprep.subr.mxu0 0.0
          %3238 = vmatpush1.msra.mxu0 0.0
          %3239 = vmatprep.subr.mxu0 0.0
          %3240 = vmatpush1.msra.mxu0 0.0
          %3241 = vmatprep.subr.mxu0 0.0
          %3242 = vmatpush1.msra.mxu0 0.0
          %3243 = vmatprep.subr.mxu0 0.0
          %3244 = vmatpush1.msra.mxu0 0.0
          %3245 = vmatprep.subr.mxu0 0.0
          %3246 = vmatpush1.msra.mxu0 0.0
          %3247 = vmatprep.subr.mxu0 0.0
          %3248 = vmatpush1.msra.mxu0 0.0
          %3249 = vmatprep.subr.mxu0 0.0
          %3250 = vmatpush1.msra.mxu0 0.0
          %3251 = vmatprep.subr.mxu0 0.0
          %3252 = vmatpush1.msra.mxu0 0.0
          %3253 = vmatprep.subr.mxu0 0.0
          %3254 = vmatpush1.msra.mxu0 0.0
          %3255 = vmatprep.subr.mxu0 0.0
          %3256 = vmatpush1.msra.mxu0 0.0
          %3257 = vmatprep.mubr.f32.mxu0 0.0
          %3258 = vmatmul.mubr.f32.gmra.mrb[0].mxu0 %v3166
          %v3259 = vpop.f32.mrb[0].mxu0
          %v3260 = vadd.f32 0.0, %v3259
          %v3261 = vpop.f32.mrb[0].mxu0
          %3262 = vdwg.mxu0
          %v3263 = vrcp.pop %v3176
          %v3264 = vmul.f32 %v3260, %v3263
          %s3265 = scalar_lea.vmem %s352, 24 [#allocation12]
          %3266 = vst.msk [vmem:[%s3265] sm:$0xff] %vm487, %v3264
        $region60: #{tpu_custom_call.1} parent=35 // pred_fallthru
          _
        %s3267 = sand.u32 %s155, 1
        %s3268 = scalar_lea.sflag [#allocation6], %s3267
        %s3269 = sand.u32 %s155, 1
        %s3270 = smul.addr %s3269, 32
        %s3271 = scalar_lea.vmem [#allocation12], %s3270
        // Predicated region
        $region61: #{tpu_custom_call.1} parent=35 // pred_check
          %p3272 = pneg %p165
        $region62: #{tpu_custom_call.1} parent=35 // pred_check_branch
          %3274 = sbr.rel (%p3272) target = $region64
        $region63: #{tpu_custom_call.1} parent=35 // pred_region
          %s3276 = ssub.s32 512, 512
          %3277 = vsyncadd %s3268, %s3276
          %s3278 = smul.addr %s31, 4
          %s3279 = smul.addr %s3278, 128
          %s3280 = scalar_lea.hbm %s4, %s3279
          %s3281 = sshll.u32 %s3271, 4
          %s3282 = int_to_ptr.vmem [resolvable:$true] %s3281
          %3287 = dma.vmem_to_hbm [thread:$0]  %s3282, 512, %s3280, %s3268, 128, 128, 8
        $region64: #{tpu_custom_call.1} parent=35 // pred_fallthru
          _
      $region36: #{tpu_custom_call.1} parent=5 // pred_fallthru
        _
      %p3288 = scmp.le.s32.totalorder 2, %s22
      // Predicated region
      $region65: #{tpu_custom_call.1} parent=5 // pred_check
        %p3289 = pneg %p3288
      $region66: #{tpu_custom_call.1} parent=5 // pred_check_branch
        %3291 = sbr.rel (%p3289) target = $region68
      $region67: #{tpu_custom_call.1} parent=5 // pred_region
        %s3292 = ssub.s32 %s22, 2
        // Predicated region
        $region69: #{tpu_custom_call.1} parent=67 // pred_check
          %p3293 = pneg %p171
        $region70: #{tpu_custom_call.1} parent=67 // pred_check_branch
          %3295 = sbr.rel (%p3293) target = $region72
        $region71: #{tpu_custom_call.1} parent=67 // pred_region
          %s3296 = sand.u32 %s156, 1
          %s3297 = scalar_lea.sflag [#allocation6], %s3296
          %s3298 = sand.u32 %s156, 1
          %s3299 = smul.addr %s3298, 32
          %s3300 = scalar_lea.vmem [#allocation12], %s3299
          %3301 = dma.done %s3297, 512
        $region72: #{tpu_custom_call.1} parent=67 // pred_fallthru
          _
      $region68: #{tpu_custom_call.1} parent=5 // pred_fallthru
        _
    $region6: #{tpu_custom_call.1} parent=1 // loop_footer
      %s26 = sadd.s32 1, %s22
    $region7: #{tpu_custom_call.1} parent=1 // loop_footer_branch
      %21 = sbr.rel target = $region3
    $region8: #{tpu_custom_call.1} parent=1 // loop_exit
      _
    %3302 = vsyncpa [#allocation5], 1
    %s3303 = scalar_lea.sflag [#allocation5], 1
    %3304 = vsyncpa %s3303, 1
    %3305 = vsyncpa [#allocation8], 1
    %s3306 = scalar_lea.sflag [#allocation8], 1
    %3307 = vsyncpa %s3306, 1
    %3308 = vsyncpa [#allocation11], 1
    %s3309 = scalar_lea.sflag [#allocation11], 1
    %3310 = vsyncpa %s3309, 1
    %3311 = vsyncpa [#allocation6], 1
    %s3312 = scalar_lea.sflag [#allocation6], 1
    %3313 = vsyncpa %s3312, 1

</llo_original>
